<compile_context>
chip_gen: v5e
topology: v5e:2x2
jax: 0.10.0
libtpu: 0.0.40
codegen_flags: <defaults>
</compile_context>

<pallas_src>
import functools

import jax
import jax.numpy as jnp
from jax.experimental import pallas as pl
from jax.experimental.pallas import tpu as pltpu

BN_EPS = 1e-5


def encoder_kernel(B, N,
                   x_ref,
                   w1, gb1, w2, gb2, w3, gb3, w4, gb4,
                   hw1, hgb1, hw2, hgb2, hw3, hb3,
                   eps_ref,
                   m_ref, v_ref, z_ref):
    rows = B * N
    inv_rows = 1.0 / float(rows)
    inv_b = 1.0 / float(B)

    def bn_fold(y, gb_ref, inv_n):
        # Training-mode BatchNorm1d folded to one per-channel scale/shift.
        gb = gb_ref[...]                                  # (2, C): gamma row, beta row
        g = gb[0:1, :]
        be = gb[1:2, :]
        s = jnp.sum(y, axis=0, keepdims=True)
        ss = jnp.sum(y * y, axis=0, keepdims=True)
        mean = s * inv_n
        var = jnp.maximum(ss * inv_n - mean * mean, 0.0)  # biased var, clamped >= 0
        scale = g * jax.lax.rsqrt(var + BN_EPS)
        shift = be - mean * scale
        return scale, shift

    def conv_bn_relu(h_bf16, w_ref, gb_ref):
        # Conv1d(kernel_size=1) == per-point matmul; bf16 operands, f32 accumulate.
        y = jnp.dot(h_bf16, w_ref[...], preferred_element_type=jnp.float32)
        scale, shift = bn_fold(y, gb_ref, inv_rows)
        # One multiply-add + max per element; store next operand directly as bf16.
        return jnp.maximum(y * scale + shift, 0.0).astype(jnp.bfloat16)

    x = x_ref[...].astype(jnp.bfloat16)                   # (B*N, 8)

    h = conv_bn_relu(x, w1, gb1)                          # (B*N, 128)
    h = conv_bn_relu(h, w2, gb2)                          # (B*N, 256)
    h = conv_bn_relu(h, w3, gb3)                          # (B*N, 512)

    # Layer 4 (BN, no ReLU) commuted with the point-max (scale > 0 since gamma=1):
    #   max_n(y*scale + shift) == max_n(y)*scale + shift   per channel.
    y4 = jnp.dot(h, w4[...], preferred_element_type=jnp.float32)   # (B*N, nlatent)
    scale4, shift4 = bn_fold(y4, gb4, inv_rows)
    # Per-batch max via aligned sublane-sliced reduces (no in-kernel 3-D reshape).
    maxes = [jnp.max(y4[b * N:(b + 1) * N, :], axis=0, keepdims=True)
             for b in range(B)]                           # static slices, N % 8 == 0
    feat = jnp.concatenate(maxes, axis=0) * scale4 + shift4         # (B, nlatent)

    # Fused mu/var head (exact: BN is per-channel; W2/W3 are block-diagonal).
    # Tiny B-row matmuls -> keep operands in f32.
    def lin_bn_relu(t, w_ref, gb_ref):
        y = jnp.dot(t, w_ref[...], preferred_element_type=jnp.float32)
        scale, shift = bn_fold(y, gb_ref, inv_b)
        return jnp.maximum(y * scale + shift, 0.0)

    t = lin_bn_relu(feat, hw1, hgb1)                      # (B, 512)
    t = lin_bn_relu(t, hw2, hgb2)                         # (B, 256)
    mv = jnp.dot(t, hw3[...], preferred_element_type=jnp.float32) + hb3[...]  # (B, 2*z_dim)

    zd = mv.shape[-1] // 2
    m = mv[:, :zd]
    v = mv[:, zd:]
    # reparameterize_gaussian: z = m + exp(0.5 * v) * eps
    z = m + jnp.exp(0.5 * v) * eps_ref[...]

    m_ref[...] = m
    v_ref[...] = v
    z_ref[...] = z


def _block_diag(a, b):
    ra, ca = a.shape
    rb, cb = b.shape
    top = jnp.concatenate([a, jnp.zeros((ra, cb), a.dtype)], axis=1)
    bot = jnp.concatenate([jnp.zeros((rb, ca), b.dtype), b], axis=1)
    return jnp.concatenate([top, bot], axis=0)


def init_params(key, nlatent, z_dim):
    """PyTorch-default-style init (uniform +/- 1/sqrt(fan_in), BN gamma=1, beta=0),
    returned already packed/fused for the kernel."""
    keys = iter(jax.random.split(key, 16))

    def lin_w(fin, fout):
        lim = 1.0 / float(fin) ** 0.5
        return jax.random.uniform(next(keys), (fin, fout), jnp.float32, -lim, lim)

    def lin_b(fin, fout):
        lim = 1.0 / float(fin) ** 0.5
        return jax.random.uniform(next(keys), (1, fout), jnp.float32, -lim, lim)

    def gb(c):
        # (2, C) slab: row 0 = gamma, row 1 = beta
        return jnp.concatenate(
            [jnp.ones((1, c), jnp.float32), jnp.zeros((1, c), jnp.float32)], axis=0)

    # Conv stack 3 -> 128 -> 256 -> 512 -> nlatent (kernel_size=1).
    # Pre-BN biases omitted (exact no-op under training-mode BN).
    w1 = jnp.pad(lin_w(3, 128), ((0, 5), (0, 0))).astype(jnp.bfloat16)  # pad in-chans 3->8
    w2 = lin_w(128, 256).astype(jnp.bfloat16)
    w3 = lin_w(256, 512).astype(jnp.bfloat16)
    w4 = lin_w(512, nlatent).astype(jnp.bfloat16)
    gb1, gb2, gb3, gb4 = gb(128), gb(256), gb(512), gb(nlatent)

    # mu / var heads, fused into one head.
    mu_w1, var_w1 = lin_w(nlatent, 256), lin_w(nlatent, 256)
    mu_w2, var_w2 = lin_w(256, 128), lin_w(256, 128)
    mu_w3, var_w3 = lin_w(128, z_dim), lin_w(128, z_dim)
    mu_b3, var_b3 = lin_b(128, z_dim), lin_b(128, z_dim)

    hw1 = jnp.concatenate([mu_w1, var_w1], axis=1)   # (nlatent, 512)
    hw2 = _block_diag(mu_w2, var_w2)                 # (512, 256)
    hw3 = _block_diag(mu_w3, var_w3)                 # (256, 2*z_dim)
    hb3 = jnp.concatenate([mu_b3, var_b3], axis=1)   # (1, 2*z_dim)
    hgb1, hgb2 = gb(512), gb(256)

    return (w1, gb1, w2, gb2, w3, gb3, w4, gb4, hw1, hgb1, hw2, hgb2, hw3, hb3)


def encoder_forward(x, params, eps, *, z_dim):
    B, N, Cin = x.shape
    assert N % 8 == 0, "points axis must be a multiple of 8 (sublane-aligned per-batch max)"
    x_flat = x.reshape(B * N, Cin).astype(jnp.float32)
    x_pad = jnp.pad(x_flat, ((0, 0), (0, 8 - Cin)))             # pad channels 3 -> 8

    inputs = (x_pad,) + tuple(params) + (eps,)
    nlatent = params[6].shape[1]                                # w4 output channels
    rows = B * N

    # VMEM footprint estimate (accounting for lane padding of the 8-channel input).
    footprint = sum(int(a.size) * a.dtype.itemsize for a in params) + int(eps.size) * 4
    footprint += rows * 128 * 4                                 # x: 8 lanes pad to 128
    footprint += rows * (128 + 256 + 512 + nlatent) * 6         # f32 y + bf16 h per layer
    footprint += B * (nlatent + 512 + 256 + 2 * z_dim) * 4      # head activations

    # Per-generation VMEM cap (v7x: 64 MiB physical -> ~40 MiB usable; v5e/v6e: 128 MiB).
    cap = 64 << 20
    try:
        cap = int(getattr(pltpu.get_tpu_info(), "vmem_capacity_bytes", cap))
    except Exception:
        pass
    per_gen_cap = (cap * 5) // 8
    if 2 * footprint > per_gen_cap:
        # TODO(synk): switch to the row-gridded two-pass BatchNorm design (see header)
        # instead of a monolithic VMEM-resident kernel at this point count.
        raise NotImplementedError(
            "shape too large for the VMEM-resident encoder kernel; needs the gridded "
            "two-pass BN variant")
    vmem_limit = int(min(per_gen_cap, max(8 << 20, 4 * footprint)))

    kernel = functools.partial(encoder_kernel, B, N)
    out_sds = jax.ShapeDtypeStruct((B, z_dim), jnp.float32)
    m, v, z = pl.pallas_call(
        kernel,
        out_shape=(out_sds, out_sds, out_sds),
        in_specs=[pl.BlockSpec(memory_space=pltpu.MemorySpace.VMEM)] * len(inputs),
        out_specs=(pl.BlockSpec(memory_space=pltpu.MemorySpace.VMEM),
                   pl.BlockSpec(memory_space=pltpu.MemorySpace.VMEM),
                   pl.BlockSpec(memory_space=pltpu.MemorySpace.VMEM)),
        compiler_params=pltpu.CompilerParams(vmem_limit_bytes=vmem_limit),
    )(*inputs)
    return m, v, z


def encoder_reference(x, params, eps, *, z_dim):
    """Pure-JAX f32 reference (straightforward, un-fused order of operations)."""
    (w1, gb1, w2, gb2, w3, gb3, w4, gb4, hw1, hgb1, hw2, hgb2, hw3, hb3) = params
    B, N, Cin = x.shape
    h = jnp.pad(x.reshape(B * N, Cin).astype(jnp.float32), ((0, 0), (0, 8 - Cin)))

    def bn(y, gb):
        g, be = gb[0:1, :], gb[1:2, :]
        mean = jnp.mean(y, axis=0, keepdims=True)
        var = jnp.mean((y - mean) ** 2, axis=0, keepdims=True)
        return (y - mean) * jax.lax.rsqrt(var + BN_EPS) * g + be

    for w, g in ((w1, gb1), (w2, gb2), (w3, gb3)):
        h = jnp.maximum(bn(h @ w.astype(jnp.float32), g), 0.0)
    h = bn(h @ w4.astype(jnp.float32), gb4)
    feat = jnp.max(h.reshape(B, N, -1), axis=1)

    t = jnp.maximum(bn(feat @ hw1, hgb1), 0.0)
    t = jnp.maximum(bn(t @ hw2, hgb2), 0.0)
    mv = t @ hw3 + hb3
    m, v = mv[:, :z_dim], mv[:, z_dim:]
    z = m + jnp.exp(0.5 * v) * eps
    return m, v, z


if __name__ == "__main__":
    B, N = 4, 64            # batch, number of points
    nlatent, z_dim = 128, 32

    key = jax.random.PRNGKey(0)
    kx, keps, kp = jax.random.split(key, 3)

    x = jax.random.normal(kx, (B, N, 3), jnp.float32)        # (B, N, 3) point cloud
    eps = jax.random.normal(keps, (B, z_dim), jnp.float32)   # torch.randn equivalent
    params = init_params(kp, nlatent, z_dim)

    m, v, z = encoder_forward(x, params, eps, z_dim=z_dim)
    jax.block_until_ready((m, v, z))

    assert m.shape == (B, z_dim) and v.shape == (B, z_dim) and z.shape == (B, z_dim)
    assert bool(jnp.all(jnp.isfinite(m))) and bool(jnp.all(jnp.isfinite(v))) and bool(jnp.all(jnp.isfinite(z)))

    # Correctness vs a pure-JAX f32 reference (kernel uses bf16 conv-stack matmuls,
    # so compare with a loose tolerance).
    m_r, v_r, z_r = encoder_reference(x, params, eps, z_dim=z_dim)
    assert bool(jnp.allclose(m, m_r, atol=0.2, rtol=0.05)), float(jnp.max(jnp.abs(m - m_r)))
    assert bool(jnp.allclose(v, v_r, atol=0.2, rtol=0.05)), float(jnp.max(jnp.abs(v - v_r)))
    assert bool(jnp.allclose(z, z_r, atol=0.25, rtol=0.05)), float(jnp.max(jnp.abs(z - z_r)))

    print("KERNEL_OK")
</pallas_src>

<mosaic_0001>
module attributes {stable_mosaic.version = 11 : i64} {
  func.func @encoder_kernel(%arg0: memref<256x8xf32, #tpu.memory_space<vmem>>, %arg1: memref<8x128xbf16, #tpu.memory_space<vmem>>, %arg2: memref<2x128xf32, #tpu.memory_space<vmem>>, %arg3: memref<128x256xbf16, #tpu.memory_space<vmem>>, %arg4: memref<2x256xf32, #tpu.memory_space<vmem>>, %arg5: memref<256x512xbf16, #tpu.memory_space<vmem>>, %arg6: memref<2x512xf32, #tpu.memory_space<vmem>>, %arg7: memref<512x128xbf16, #tpu.memory_space<vmem>>, %arg8: memref<2x128xf32, #tpu.memory_space<vmem>>, %arg9: memref<128x512xf32, #tpu.memory_space<vmem>>, %arg10: memref<2x512xf32, #tpu.memory_space<vmem>>, %arg11: memref<512x256xf32, #tpu.memory_space<vmem>>, %arg12: memref<2x256xf32, #tpu.memory_space<vmem>>, %arg13: memref<256x64xf32, #tpu.memory_space<vmem>>, %arg14: memref<1x64xf32, #tpu.memory_space<vmem>>, %arg15: memref<4x32xf32, #tpu.memory_space<vmem>>, %arg16: memref<4x32xf32, #tpu.memory_space<vmem>>, %arg17: memref<4x32xf32, #tpu.memory_space<vmem>>, %arg18: memref<4x32xf32, #tpu.memory_space<vmem>>) attributes {dimension_semantics = [], scalar_prefetch = 0 : i64, scratch_operands = 0 : i64, tpu.core_type = #tpu.core_type<tc>} {
    %c0 = arith.constant 0 : index
    %c0_0 = arith.constant 0 : index
    %0 = vector.load %arg0[%c0, %c0_0] : memref<256x8xf32, #tpu.memory_space<vmem>>, vector<256x8xf32>
    %1 = arith.truncf %0 : vector<256x8xf32> to vector<256x8xbf16>
    %c0_1 = arith.constant 0 : index
    %c0_2 = arith.constant 0 : index
    %2 = vector.load %arg1[%c0_1, %c0_2] : memref<8x128xbf16, #tpu.memory_space<vmem>>, vector<8x128xbf16>
    %cst = arith.constant dense<0.000000e+00> : vector<256x128xf32>
    %3 = tpu.matmul %1, %2, %cst {dimension_numbers = #tpu.dot_dimension_numbers<[1], [0], [0], [1], [0, 0, 1, 1], [], []>} : vector<256x8xbf16>, vector<8x128xbf16>, vector<256x128xf32> -> vector<256x128xf32>
    %c0_3 = arith.constant 0 : index
    %c0_4 = arith.constant 0 : index
    %4 = vector.load %arg2[%c0_3, %c0_4] : memref<2x128xf32, #tpu.memory_space<vmem>>, vector<2x128xf32>
    %5 = vector.extract_strided_slice %4 {offsets = [0, 0], sizes = [1, 128], strides = [1, 1]} : vector<2x128xf32> to vector<1x128xf32>
    %6 = vector.extract_strided_slice %4 {offsets = [1, 0], sizes = [1, 128], strides = [1, 1]} : vector<2x128xf32> to vector<1x128xf32>
    %cst_5 = arith.constant dense<0.000000e+00> : vector<128xf32>
    %7 = vector.multi_reduction <add>, %3, %cst_5 [0] : vector<256x128xf32> to vector<128xf32>
    %8 = vector.shape_cast %7 : vector<128xf32> to vector<1x128xf32>
    %9 = arith.mulf %3, %3 : vector<256x128xf32>
    %cst_6 = arith.constant dense<0.000000e+00> : vector<128xf32>
    %10 = vector.multi_reduction <add>, %9, %cst_6 [0] : vector<256x128xf32> to vector<128xf32>
    %11 = vector.shape_cast %10 : vector<128xf32> to vector<1x128xf32>
    %cst_7 = arith.constant 3.906250e-03 : f32
    %12 = vector.broadcast %cst_7 : f32 to vector<1x128xf32>
    %13 = arith.mulf %8, %12 : vector<1x128xf32>
    %cst_8 = arith.constant 3.906250e-03 : f32
    %14 = vector.broadcast %cst_8 : f32 to vector<1x128xf32>
    %15 = arith.mulf %11, %14 : vector<1x128xf32>
    %16 = arith.mulf %13, %13 : vector<1x128xf32>
    %17 = arith.subf %15, %16 : vector<1x128xf32>
    %cst_9 = arith.constant 0.000000e+00 : f32
    %18 = vector.broadcast %cst_9 : f32 to vector<1x128xf32>
    %19 = arith.maximumf %17, %18 : vector<1x128xf32>
    %cst_10 = arith.constant 9.99999974E-6 : f32
    %20 = vector.broadcast %cst_10 : f32 to vector<1x128xf32>
    %21 = arith.addf %19, %20 : vector<1x128xf32>
    %22 = math.rsqrt %21 : vector<1x128xf32>
    %23 = arith.mulf %5, %22 : vector<1x128xf32>
    %24 = arith.mulf %13, %23 : vector<1x128xf32>
    %25 = arith.subf %6, %24 : vector<1x128xf32>
    %26 = vector.broadcast %23 : vector<1x128xf32> to vector<256x128xf32>
    %27 = arith.mulf %3, %26 : vector<256x128xf32>
    %28 = vector.broadcast %25 : vector<1x128xf32> to vector<256x128xf32>
    %29 = arith.addf %27, %28 : vector<256x128xf32>
    %cst_11 = arith.constant 0.000000e+00 : f32
    %30 = vector.broadcast %cst_11 : f32 to vector<256x128xf32>
    %31 = arith.maximumf %29, %30 : vector<256x128xf32>
    %32 = arith.truncf %31 : vector<256x128xf32> to vector<256x128xbf16>
    %c0_12 = arith.constant 0 : index
    %c0_13 = arith.constant 0 : index
    %33 = vector.load %arg3[%c0_12, %c0_13] : memref<128x256xbf16, #tpu.memory_space<vmem>>, vector<128x256xbf16>
    %cst_14 = arith.constant dense<0.000000e+00> : vector<256x256xf32>
    %34 = tpu.matmul %32, %33, %cst_14 {dimension_numbers = #tpu.dot_dimension_numbers<[1], [0], [0], [1], [0, 0, 1, 1], [], []>} : vector<256x128xbf16>, vector<128x256xbf16>, vector<256x256xf32> -> vector<256x256xf32>
    %c0_15 = arith.constant 0 : index
    %c0_16 = arith.constant 0 : index
    %35 = vector.load %arg4[%c0_15, %c0_16] : memref<2x256xf32, #tpu.memory_space<vmem>>, vector<2x256xf32>
    %36 = vector.extract_strided_slice %35 {offsets = [0, 0], sizes = [1, 256], strides = [1, 1]} : vector<2x256xf32> to vector<1x256xf32>
    %37 = vector.extract_strided_slice %35 {offsets = [1, 0], sizes = [1, 256], strides = [1, 1]} : vector<2x256xf32> to vector<1x256xf32>
    %cst_17 = arith.constant dense<0.000000e+00> : vector<256xf32>
    %38 = vector.multi_reduction <add>, %34, %cst_17 [0] : vector<256x256xf32> to vector<256xf32>
    %39 = vector.shape_cast %38 : vector<256xf32> to vector<1x256xf32>
    %40 = arith.mulf %34, %34 : vector<256x256xf32>
    %cst_18 = arith.constant dense<0.000000e+00> : vector<256xf32>
    %41 = vector.multi_reduction <add>, %40, %cst_18 [0] : vector<256x256xf32> to vector<256xf32>
    %42 = vector.shape_cast %41 : vector<256xf32> to vector<1x256xf32>
    %cst_19 = arith.constant 3.906250e-03 : f32
    %43 = vector.broadcast %cst_19 : f32 to vector<1x256xf32>
    %44 = arith.mulf %39, %43 : vector<1x256xf32>
    %cst_20 = arith.constant 3.906250e-03 : f32
    %45 = vector.broadcast %cst_20 : f32 to vector<1x256xf32>
    %46 = arith.mulf %42, %45 : vector<1x256xf32>
    %47 = arith.mulf %44, %44 : vector<1x256xf32>
    %48 = arith.subf %46, %47 : vector<1x256xf32>
    %cst_21 = arith.constant 0.000000e+00 : f32
    %49 = vector.broadcast %cst_21 : f32 to vector<1x256xf32>
    %50 = arith.maximumf %48, %49 : vector<1x256xf32>
    %cst_22 = arith.constant 9.99999974E-6 : f32
    %51 = vector.broadcast %cst_22 : f32 to vector<1x256xf32>
    %52 = arith.addf %50, %51 : vector<1x256xf32>
    %53 = math.rsqrt %52 : vector<1x256xf32>
    %54 = arith.mulf %36, %53 : vector<1x256xf32>
    %55 = arith.mulf %44, %54 : vector<1x256xf32>
    %56 = arith.subf %37, %55 : vector<1x256xf32>
    %57 = vector.broadcast %54 : vector<1x256xf32> to vector<256x256xf32>
    %58 = arith.mulf %34, %57 : vector<256x256xf32>
    %59 = vector.broadcast %56 : vector<1x256xf32> to vector<256x256xf32>
    %60 = arith.addf %58, %59 : vector<256x256xf32>
    %cst_23 = arith.constant 0.000000e+00 : f32
    %61 = vector.broadcast %cst_23 : f32 to vector<256x256xf32>
    %62 = arith.maximumf %60, %61 : vector<256x256xf32>
    %63 = arith.truncf %62 : vector<256x256xf32> to vector<256x256xbf16>
    %c0_24 = arith.constant 0 : index
    %c0_25 = arith.constant 0 : index
    %64 = vector.load %arg5[%c0_24, %c0_25] : memref<256x512xbf16, #tpu.memory_space<vmem>>, vector<256x512xbf16>
    %cst_26 = arith.constant dense<0.000000e+00> : vector<256x512xf32>
    %65 = tpu.matmul %63, %64, %cst_26 {dimension_numbers = #tpu.dot_dimension_numbers<[1], [0], [0], [1], [0, 0, 1, 1], [], []>} : vector<256x256xbf16>, vector<256x512xbf16>, vector<256x512xf32> -> vector<256x512xf32>
    %c0_27 = arith.constant 0 : index
    %c0_28 = arith.constant 0 : index
    %66 = vector.load %arg6[%c0_27, %c0_28] : memref<2x512xf32, #tpu.memory_space<vmem>>, vector<2x512xf32>
    %67 = vector.extract_strided_slice %66 {offsets = [0, 0], sizes = [1, 512], strides = [1, 1]} : vector<2x512xf32> to vector<1x512xf32>
    %68 = vector.extract_strided_slice %66 {offsets = [1, 0], sizes = [1, 512], strides = [1, 1]} : vector<2x512xf32> to vector<1x512xf32>
    %cst_29 = arith.constant dense<0.000000e+00> : vector<512xf32>
    %69 = vector.multi_reduction <add>, %65, %cst_29 [0] : vector<256x512xf32> to vector<512xf32>
    %70 = vector.shape_cast %69 : vector<512xf32> to vector<1x512xf32>
    %71 = arith.mulf %65, %65 : vector<256x512xf32>
    %cst_30 = arith.constant dense<0.000000e+00> : vector<512xf32>
    %72 = vector.multi_reduction <add>, %71, %cst_30 [0] : vector<256x512xf32> to vector<512xf32>
    %73 = vector.shape_cast %72 : vector<512xf32> to vector<1x512xf32>
    %cst_31 = arith.constant 3.906250e-03 : f32
    %74 = vector.broadcast %cst_31 : f32 to vector<1x512xf32>
    %75 = arith.mulf %70, %74 : vector<1x512xf32>
    %cst_32 = arith.constant 3.906250e-03 : f32
    %76 = vector.broadcast %cst_32 : f32 to vector<1x512xf32>
    %77 = arith.mulf %73, %76 : vector<1x512xf32>
    %78 = arith.mulf %75, %75 : vector<1x512xf32>
    %79 = arith.subf %77, %78 : vector<1x512xf32>
    %cst_33 = arith.constant 0.000000e+00 : f32
    %80 = vector.broadcast %cst_33 : f32 to vector<1x512xf32>
    %81 = arith.maximumf %79, %80 : vector<1x512xf32>
    %cst_34 = arith.constant 9.99999974E-6 : f32
    %82 = vector.broadcast %cst_34 : f32 to vector<1x512xf32>
    %83 = arith.addf %81, %82 : vector<1x512xf32>
    %84 = math.rsqrt %83 : vector<1x512xf32>
    %85 = arith.mulf %67, %84 : vector<1x512xf32>
    %86 = arith.mulf %75, %85 : vector<1x512xf32>
    %87 = arith.subf %68, %86 : vector<1x512xf32>
    %88 = vector.broadcast %85 : vector<1x512xf32> to vector<256x512xf32>
    %89 = arith.mulf %65, %88 : vector<256x512xf32>
    %90 = vector.broadcast %87 : vector<1x512xf32> to vector<256x512xf32>
    %91 = arith.addf %89, %90 : vector<256x512xf32>
    %cst_35 = arith.constant 0.000000e+00 : f32
    %92 = vector.broadcast %cst_35 : f32 to vector<256x512xf32>
    %93 = arith.maximumf %91, %92 : vector<256x512xf32>
    %94 = arith.truncf %93 : vector<256x512xf32> to vector<256x512xbf16>
    %c0_36 = arith.constant 0 : index
    %c0_37 = arith.constant 0 : index
    %95 = vector.load %arg7[%c0_36, %c0_37] : memref<512x128xbf16, #tpu.memory_space<vmem>>, vector<512x128xbf16>
    %cst_38 = arith.constant dense<0.000000e+00> : vector<256x128xf32>
    %96 = tpu.matmul %94, %95, %cst_38 {dimension_numbers = #tpu.dot_dimension_numbers<[1], [0], [0], [1], [0, 0, 1, 1], [], []>} : vector<256x512xbf16>, vector<512x128xbf16>, vector<256x128xf32> -> vector<256x128xf32>
    %c0_39 = arith.constant 0 : index
    %c0_40 = arith.constant 0 : index
    %97 = vector.load %arg8[%c0_39, %c0_40] : memref<2x128xf32, #tpu.memory_space<vmem>>, vector<2x128xf32>
    %98 = vector.extract_strided_slice %97 {offsets = [0, 0], sizes = [1, 128], strides = [1, 1]} : vector<2x128xf32> to vector<1x128xf32>
    %99 = vector.extract_strided_slice %97 {offsets = [1, 0], sizes = [1, 128], strides = [1, 1]} : vector<2x128xf32> to vector<1x128xf32>
    %cst_41 = arith.constant dense<0.000000e+00> : vector<128xf32>
    %100 = vector.multi_reduction <add>, %96, %cst_41 [0] : vector<256x128xf32> to vector<128xf32>
    %101 = vector.shape_cast %100 : vector<128xf32> to vector<1x128xf32>
    %102 = arith.mulf %96, %96 : vector<256x128xf32>
    %cst_42 = arith.constant dense<0.000000e+00> : vector<128xf32>
    %103 = vector.multi_reduction <add>, %102, %cst_42 [0] : vector<256x128xf32> to vector<128xf32>
    %104 = vector.shape_cast %103 : vector<128xf32> to vector<1x128xf32>
    %cst_43 = arith.constant 3.906250e-03 : f32
    %105 = vector.broadcast %cst_43 : f32 to vector<1x128xf32>
    %106 = arith.mulf %101, %105 : vector<1x128xf32>
    %cst_44 = arith.constant 3.906250e-03 : f32
    %107 = vector.broadcast %cst_44 : f32 to vector<1x128xf32>
    %108 = arith.mulf %104, %107 : vector<1x128xf32>
    %109 = arith.mulf %106, %106 : vector<1x128xf32>
    %110 = arith.subf %108, %109 : vector<1x128xf32>
    %cst_45 = arith.constant 0.000000e+00 : f32
    %111 = vector.broadcast %cst_45 : f32 to vector<1x128xf32>
    %112 = arith.maximumf %110, %111 : vector<1x128xf32>
    %cst_46 = arith.constant 9.99999974E-6 : f32
    %113 = vector.broadcast %cst_46 : f32 to vector<1x128xf32>
    %114 = arith.addf %112, %113 : vector<1x128xf32>
    %115 = math.rsqrt %114 : vector<1x128xf32>
    %116 = arith.mulf %98, %115 : vector<1x128xf32>
    %117 = arith.mulf %106, %116 : vector<1x128xf32>
    %118 = arith.subf %99, %117 : vector<1x128xf32>
    %119 = vector.extract_strided_slice %96 {offsets = [0, 0], sizes = [64, 128], strides = [1, 1]} : vector<256x128xf32> to vector<64x128xf32>
    %cst_47 = arith.constant dense<0xFF800000> : vector<128xf32>
    %120 = vector.multi_reduction <maximumf>, %119, %cst_47 [0] : vector<64x128xf32> to vector<128xf32>
    %121 = vector.shape_cast %120 : vector<128xf32> to vector<1x128xf32>
    %122 = vector.extract_strided_slice %96 {offsets = [64, 0], sizes = [64, 128], strides = [1, 1]} : vector<256x128xf32> to vector<64x128xf32>
    %cst_48 = arith.constant dense<0xFF800000> : vector<128xf32>
    %123 = vector.multi_reduction <maximumf>, %122, %cst_48 [0] : vector<64x128xf32> to vector<128xf32>
    %124 = vector.shape_cast %123 : vector<128xf32> to vector<1x128xf32>
    %125 = vector.extract_strided_slice %96 {offsets = [128, 0], sizes = [64, 128], strides = [1, 1]} : vector<256x128xf32> to vector<64x128xf32>
    %cst_49 = arith.constant dense<0xFF800000> : vector<128xf32>
    %126 = vector.multi_reduction <maximumf>, %125, %cst_49 [0] : vector<64x128xf32> to vector<128xf32>
    %127 = vector.shape_cast %126 : vector<128xf32> to vector<1x128xf32>
    %128 = vector.extract_strided_slice %96 {offsets = [192, 0], sizes = [64, 128], strides = [1, 1]} : vector<256x128xf32> to vector<64x128xf32>
    %cst_50 = arith.constant dense<0xFF800000> : vector<128xf32>
    %129 = vector.multi_reduction <maximumf>, %128, %cst_50 [0] : vector<64x128xf32> to vector<128xf32>
    %130 = vector.shape_cast %129 : vector<128xf32> to vector<1x128xf32>
    %131 = tpu.concatenate %121, %124, %127, %130 in 0 : vector<1x128xf32>, vector<1x128xf32>, vector<1x128xf32>, vector<1x128xf32> -> vector<4x128xf32>
    %132 = vector.broadcast %116 : vector<1x128xf32> to vector<4x128xf32>
    %133 = arith.mulf %131, %132 : vector<4x128xf32>
    %134 = vector.broadcast %118 : vector<1x128xf32> to vector<4x128xf32>
    %135 = arith.addf %133, %134 : vector<4x128xf32>
    %c0_51 = arith.constant 0 : index
    %c0_52 = arith.constant 0 : index
    %136 = vector.load %arg9[%c0_51, %c0_52] : memref<128x512xf32, #tpu.memory_space<vmem>>, vector<128x512xf32>
    %cst_53 = arith.constant dense<0.000000e+00> : vector<4x512xf32>
    %137 = tpu.matmul %135, %136, %cst_53 {dimension_numbers = #tpu.dot_dimension_numbers<[1], [0], [0], [1], [0, 0, 1, 1], [], []>} : vector<4x128xf32>, vector<128x512xf32>, vector<4x512xf32> -> vector<4x512xf32>
    %c0_54 = arith.constant 0 : index
    %c0_55 = arith.constant 0 : index
    %138 = vector.load %arg10[%c0_54, %c0_55] : memref<2x512xf32, #tpu.memory_space<vmem>>, vector<2x512xf32>
    %139 = vector.extract_strided_slice %138 {offsets = [0, 0], sizes = [1, 512], strides = [1, 1]} : vector<2x512xf32> to vector<1x512xf32>
    %140 = vector.extract_strided_slice %138 {offsets = [1, 0], sizes = [1, 512], strides = [1, 1]} : vector<2x512xf32> to vector<1x512xf32>
    %cst_56 = arith.constant dense<0.000000e+00> : vector<512xf32>
    %141 = vector.multi_reduction <add>, %137, %cst_56 [0] : vector<4x512xf32> to vector<512xf32>
    %142 = vector.shape_cast %141 : vector<512xf32> to vector<1x512xf32>
    %143 = arith.mulf %137, %137 : vector<4x512xf32>
    %cst_57 = arith.constant dense<0.000000e+00> : vector<512xf32>
    %144 = vector.multi_reduction <add>, %143, %cst_57 [0] : vector<4x512xf32> to vector<512xf32>
    %145 = vector.shape_cast %144 : vector<512xf32> to vector<1x512xf32>
    %cst_58 = arith.constant 2.500000e-01 : f32
    %146 = vector.broadcast %cst_58 : f32 to vector<1x512xf32>
    %147 = arith.mulf %142, %146 : vector<1x512xf32>
    %cst_59 = arith.constant 2.500000e-01 : f32
    %148 = vector.broadcast %cst_59 : f32 to vector<1x512xf32>
    %149 = arith.mulf %145, %148 : vector<1x512xf32>
    %150 = arith.mulf %147, %147 : vector<1x512xf32>
    %151 = arith.subf %149, %150 : vector<1x512xf32>
    %cst_60 = arith.constant 0.000000e+00 : f32
    %152 = vector.broadcast %cst_60 : f32 to vector<1x512xf32>
    %153 = arith.maximumf %151, %152 : vector<1x512xf32>
    %cst_61 = arith.constant 9.99999974E-6 : f32
    %154 = vector.broadcast %cst_61 : f32 to vector<1x512xf32>
    %155 = arith.addf %153, %154 : vector<1x512xf32>
    %156 = math.rsqrt %155 : vector<1x512xf32>
    %157 = arith.mulf %139, %156 : vector<1x512xf32>
    %158 = arith.mulf %147, %157 : vector<1x512xf32>
    %159 = arith.subf %140, %158 : vector<1x512xf32>
    %160 = vector.broadcast %157 : vector<1x512xf32> to vector<4x512xf32>
    %161 = arith.mulf %137, %160 : vector<4x512xf32>
    %162 = vector.broadcast %159 : vector<1x512xf32> to vector<4x512xf32>
    %163 = arith.addf %161, %162 : vector<4x512xf32>
    %cst_62 = arith.constant 0.000000e+00 : f32
    %164 = vector.broadcast %cst_62 : f32 to vector<4x512xf32>
    %165 = arith.maximumf %163, %164 : vector<4x512xf32>
    %c0_63 = arith.constant 0 : index
    %c0_64 = arith.constant 0 : index
    %166 = vector.load %arg11[%c0_63, %c0_64] : memref<512x256xf32, #tpu.memory_space<vmem>>, vector<512x256xf32>
    %cst_65 = arith.constant dense<0.000000e+00> : vector<4x256xf32>
    %167 = tpu.matmul %165, %166, %cst_65 {dimension_numbers = #tpu.dot_dimension_numbers<[1], [0], [0], [1], [0, 0, 1, 1], [], []>} : vector<4x512xf32>, vector<512x256xf32>, vector<4x256xf32> -> vector<4x256xf32>
    %c0_66 = arith.constant 0 : index
    %c0_67 = arith.constant 0 : index
    %168 = vector.load %arg12[%c0_66, %c0_67] : memref<2x256xf32, #tpu.memory_space<vmem>>, vector<2x256xf32>
    %169 = vector.extract_strided_slice %168 {offsets = [0, 0], sizes = [1, 256], strides = [1, 1]} : vector<2x256xf32> to vector<1x256xf32>
    %170 = vector.extract_strided_slice %168 {offsets = [1, 0], sizes = [1, 256], strides = [1, 1]} : vector<2x256xf32> to vector<1x256xf32>
    %cst_68 = arith.constant dense<0.000000e+00> : vector<256xf32>
    %171 = vector.multi_reduction <add>, %167, %cst_68 [0] : vector<4x256xf32> to vector<256xf32>
    %172 = vector.shape_cast %171 : vector<256xf32> to vector<1x256xf32>
    %173 = arith.mulf %167, %167 : vector<4x256xf32>
    %cst_69 = arith.constant dense<0.000000e+00> : vector<256xf32>
    %174 = vector.multi_reduction <add>, %173, %cst_69 [0] : vector<4x256xf32> to vector<256xf32>
    %175 = vector.shape_cast %174 : vector<256xf32> to vector<1x256xf32>
    %cst_70 = arith.constant 2.500000e-01 : f32
    %176 = vector.broadcast %cst_70 : f32 to vector<1x256xf32>
    %177 = arith.mulf %172, %176 : vector<1x256xf32>
    %cst_71 = arith.constant 2.500000e-01 : f32
    %178 = vector.broadcast %cst_71 : f32 to vector<1x256xf32>
    %179 = arith.mulf %175, %178 : vector<1x256xf32>
    %180 = arith.mulf %177, %177 : vector<1x256xf32>
    %181 = arith.subf %179, %180 : vector<1x256xf32>
    %cst_72 = arith.constant 0.000000e+00 : f32
    %182 = vector.broadcast %cst_72 : f32 to vector<1x256xf32>
    %183 = arith.maximumf %181, %182 : vector<1x256xf32>
    %cst_73 = arith.constant 9.99999974E-6 : f32
    %184 = vector.broadcast %cst_73 : f32 to vector<1x256xf32>
    %185 = arith.addf %183, %184 : vector<1x256xf32>
    %186 = math.rsqrt %185 : vector<1x256xf32>
    %187 = arith.mulf %169, %186 : vector<1x256xf32>
    %188 = arith.mulf %177, %187 : vector<1x256xf32>
    %189 = arith.subf %170, %188 : vector<1x256xf32>
    %190 = vector.broadcast %187 : vector<1x256xf32> to vector<4x256xf32>
    %191 = arith.mulf %167, %190 : vector<4x256xf32>
    %192 = vector.broadcast %189 : vector<1x256xf32> to vector<4x256xf32>
    %193 = arith.addf %191, %192 : vector<4x256xf32>
    %cst_74 = arith.constant 0.000000e+00 : f32
    %194 = vector.broadcast %cst_74 : f32 to vector<4x256xf32>
    %195 = arith.maximumf %193, %194 : vector<4x256xf32>
    %c0_75 = arith.constant 0 : index
    %c0_76 = arith.constant 0 : index
    %196 = vector.load %arg13[%c0_75, %c0_76] : memref<256x64xf32, #tpu.memory_space<vmem>>, vector<256x64xf32>
    %cst_77 = arith.constant dense<0.000000e+00> : vector<4x64xf32>
    %197 = tpu.matmul %195, %196, %cst_77 {dimension_numbers = #tpu.dot_dimension_numbers<[1], [0], [0], [1], [0, 0, 1, 1], [], []>} : vector<4x256xf32>, vector<256x64xf32>, vector<4x64xf32> -> vector<4x64xf32>
    %c0_78 = arith.constant 0 : index
    %c0_79 = arith.constant 0 : index
    %198 = vector.load %arg14[%c0_78, %c0_79] : memref<1x64xf32, #tpu.memory_space<vmem>>, vector<1x64xf32>
    %199 = vector.broadcast %198 : vector<1x64xf32> to vector<4x64xf32>
    %200 = arith.addf %197, %199 : vector<4x64xf32>
    %201 = vector.extract_strided_slice %200 {offsets = [0, 0], sizes = [4, 32], strides = [1, 1]} : vector<4x64xf32> to vector<4x32xf32>
    %202 = vector.extract_strided_slice %200 {offsets = [0, 32], sizes = [4, 32], strides = [1, 1]} : vector<4x64xf32> to vector<4x32xf32>
    %cst_80 = arith.constant 5.000000e-01 : f32
    %203 = vector.broadcast %cst_80 : f32 to vector<4x32xf32>
    %204 = arith.mulf %203, %202 : vector<4x32xf32>
    %205 = math.exp %204 : vector<4x32xf32>
    %c0_81 = arith.constant 0 : index
    %c0_82 = arith.constant 0 : index
    %206 = vector.load %arg15[%c0_81, %c0_82] : memref<4x32xf32, #tpu.memory_space<vmem>>, vector<4x32xf32>
    %207 = arith.mulf %205, %206 : vector<4x32xf32>
    %208 = arith.addf %201, %207 : vector<4x32xf32>
    %c0_83 = arith.constant 0 : index
    %c0_84 = arith.constant 0 : index
    %209 = vector.load %arg16[%c0_83, %c0_84] : memref<4x32xf32, #tpu.memory_space<vmem>>, vector<4x32xf32>
    tpu.vector_store %arg16[%c0_83, %c0_84], %201 {strides = array<i32>} : memref<4x32xf32, #tpu.memory_space<vmem>>, vector<4x32xf32>,
    %c0_85 = arith.constant 0 : index
    %c0_86 = arith.constant 0 : index
    %210 = vector.load %arg17[%c0_85, %c0_86] : memref<4x32xf32, #tpu.memory_space<vmem>>, vector<4x32xf32>
    tpu.vector_store %arg17[%c0_85, %c0_86], %202 {strides = array<i32>} : memref<4x32xf32, #tpu.memory_space<vmem>>, vector<4x32xf32>,
    %c0_87 = arith.constant 0 : index
    %c0_88 = arith.constant 0 : index
    %211 = vector.load %arg18[%c0_87, %c0_88] : memref<4x32xf32, #tpu.memory_space<vmem>>, vector<4x32xf32>
    tpu.vector_store %arg18[%c0_87, %c0_88], %208 {strides = array<i32>} : memref<4x32xf32, #tpu.memory_space<vmem>>, vector<4x32xf32>,
    return
  }
}

</mosaic_0001>

<llo_original>
// kernel: tpu_custom_call.1
$region0: #{tpu_custom_call.1}
  #allocation0 [shape = 'u32[]', space=smem, size = 0x4, offset = 0x4, fixed_abs, tag = 'smem constant byte address 0x4 - core index']
  #allocation1 [shape = 'u32[72,128]{1,0:T(1,128)}', space=vmem, size = 0x9000, scoped, tag = 'internal scratch']
  %s0 = inlined_call_operand.vmem [shape: f32[256,8], index: 0, kind: input, shape index: {}]
  %s1 = inlined_call_operand.hbm [shape: bf16[8,128], index: 1, kind: input, shape index: {}]
  %s2 = inlined_call_operand.hbm [shape: f32[2,128], index: 2, kind: input, shape index: {}]
  %s3 = inlined_call_operand.hbm [shape: bf16[128,256], index: 3, kind: input, shape index: {}]
  %s4 = inlined_call_operand.hbm [shape: f32[2,256], index: 4, kind: input, shape index: {}]
  %s5 = inlined_call_operand.vmem [shape: bf16[256,512], index: 5, kind: input, shape index: {}]
  %s6 = inlined_call_operand.vmem [shape: f32[2,512], index: 6, kind: input, shape index: {}]
  %s7 = inlined_call_operand.hbm [shape: bf16[512,128], index: 7, kind: input, shape index: {}]
  %s8 = inlined_call_operand.vmem [shape: f32[2,128], index: 8, kind: input, shape index: {}]
  %s9 = inlined_call_operand.hbm [shape: f32[128,512], index: 9, kind: input, shape index: {}]
  %s10 = inlined_call_operand.vmem [shape: f32[2,512], index: 10, kind: input, shape index: {}]
  %s11 = inlined_call_operand.hbm [shape: f32[512,256], index: 11, kind: input, shape index: {}]
  %s12 = inlined_call_operand.vmem [shape: f32[2,256], index: 12, kind: input, shape index: {}]
  %s13 = inlined_call_operand.vmem [shape: f32[256,64], index: 13, kind: input, shape index: {}]
  %s14 = inlined_call_operand.vmem [shape: f32[1,64], index: 14, kind: input, shape index: {}]
  %s15 = inlined_call_operand.vmem [shape: f32[4,32], index: 15, kind: input, shape index: {}]
  %s16 = inlined_call_operand.hbm [shape: f32[4,32], index: 16, kind: output, shape index: {0}]
  %s17 = inlined_call_operand.hbm [shape: f32[4,32], index: 17, kind: output, shape index: {1}]
  %s18 = inlined_call_operand.hbm [shape: f32[4,32], index: 18, kind: output, shape index: {2}]
  %19 = xla_tuple %s16, %s17, %s18
  %s20 = sld [smem:[#allocation0]]
  $region118: #{tpu_custom_call.1} parent=0
    _
  %s22 = ssub.s32 1, %s20
  %s23 = scalar_select 0, %s22, %s20
  $region1: #{tpu_custom_call.1} parent=0
    #allocation2 [shape = 'u8[2048]{0}', space=vmem, size = 0x800, scoped, tag = 'input window, operand 1, single buffered']
    #allocation3 [shape = 's32[1]{0}', space=sflag, size = 0x4, scoped, tag = 'scoped memory for tpu_custom_call.1']
    #allocation4 [shape = 's32[1]{0}', space=sflag, size = 0x4, scoped, tag = 'scoped memory for tpu_custom_call.1']
    #allocation5 [shape = 'u8[1024]{0}', space=vmem, size = 0x400, scoped, tag = 'input window, operand 2, single buffered']
    #allocation6 [shape = 's32[1]{0}', space=sflag, size = 0x4, scoped, tag = 'scoped memory for tpu_custom_call.1']
    #allocation7 [shape = 'u8[65536]{0}', space=vmem, size = 0x10000, scoped, tag = 'input window, operand 3, single buffered']
    #allocation8 [shape = 'u8[2048]{0}', space=vmem, size = 0x800, scoped, tag = 'input window, operand 4, single buffered']
    #allocation9 [shape = 's32[1]{0}', space=sflag, size = 0x4, scoped, tag = 'scoped memory for tpu_custom_call.1']
    #allocation10 [shape = 'u8[131072]{0}', space=vmem, size = 0x20000, scoped, tag = 'input window, operand 7, single buffered']
    #allocation11 [shape = 'u8[262144]{0}', space=vmem, size = 0x40000, scoped, tag = 'input window, operand 9, single buffered']
    #allocation12 [shape = 's32[1]{0}', space=sflag, size = 0x4, scoped, tag = 'scoped memory for tpu_custom_call.1']
    #allocation13 [shape = 'u8[524288]{0}', space=vmem, size = 0x80000, scoped, tag = 'input window, operand 11, single buffered']
    #allocation14 [shape = 'u8[2048]{0}', space=vmem, size = 0x800, scoped, tag = 'output window, operand 0, single buffered']
    #allocation15 [shape = 'u8[2048]{0}', space=vmem, size = 0x800, scoped, tag = 'output window, operand 1, single buffered']
    #allocation16 [shape = 's32[1]{0}', space=sflag, size = 0x4, scoped, tag = 'scoped memory for tpu_custom_call.1']
    #allocation17 [shape = 'u8[2048]{0}', space=vmem, size = 0x800, scoped, tag = 'output window, operand 2, single buffered']
    %24 = vsyncpa [#allocation3], 0
    %25 = vsyncpa [#allocation6], 0
    %26 = vsyncpa [#allocation9], 0
    %27 = vsyncpa [#allocation12], 0
    %28 = vsyncpa [#allocation4], 0
    %29 = vsyncpa [#allocation16], 0
    // Predicated region
    $region2: #{tpu_custom_call.1} parent=1 // pred_check
      _
    $region3: #{tpu_custom_call.1} parent=1 // pred_check_branch
      %31 = sbr.rel (0) target = $region5
    $region4: #{tpu_custom_call.1} parent=1 // pred_region
      _
    $region5: #{tpu_custom_call.1} parent=1 // pred_fallthru
      _
    // Predicated region
    $region6: #{tpu_custom_call.1} parent=1 // pred_check
      _
    $region7: #{tpu_custom_call.1} parent=1 // pred_check_branch
      %33 = sbr.rel (0) target = $region9
    $region8: #{tpu_custom_call.1} parent=1 // pred_region
      %35 = vsyncadd [#allocation3], 0
      %s37 = sshll.u32 %s1, 4
      %s38 = int_to_ptr.hbm [resolvable:$true] %s37
      %s39 = sshll.u32 [#allocation2], 4
      %s40 = int_to_ptr.vmem [resolvable:$true] %s39
      %42 = dma.hbm_to_vmem [thread:$0]  %s38, 64, %s40, [#allocation3]
    $region9: #{tpu_custom_call.1} parent=1 // pred_fallthru
      _
    // Predicated region
    $region10: #{tpu_custom_call.1} parent=1 // pred_check
      _
    $region11: #{tpu_custom_call.1} parent=1 // pred_check_branch
      %44 = sbr.rel (0) target = $region13
    $region12: #{tpu_custom_call.1} parent=1 // pred_region
      %46 = vsyncadd [#allocation6], 0
      %s48 = sshll.u32 %s2, 4
      %s49 = int_to_ptr.hbm [resolvable:$true] %s48
      %s50 = sshll.u32 [#allocation5], 4
      %s51 = int_to_ptr.vmem [resolvable:$true] %s50
      %53 = dma.hbm_to_vmem [thread:$0]  %s49, 32, %s51, [#allocation6]
    $region13: #{tpu_custom_call.1} parent=1 // pred_fallthru
      _
    // Predicated region
    $region14: #{tpu_custom_call.1} parent=1 // pred_check
      _
    $region15: #{tpu_custom_call.1} parent=1 // pred_check_branch
      %55 = sbr.rel (0) target = $region17
    $region16: #{tpu_custom_call.1} parent=1 // pred_region
      %57 = vsyncadd [#allocation6], 0
      %s58 = sshll.u32 %s3, 4
      %s59 = int_to_ptr.hbm [resolvable:$true] %s58
      %s60 = sshll.u32 [#allocation7], 4
      %s61 = int_to_ptr.vmem [resolvable:$true] %s60
      %66 = dma.hbm_to_vmem [thread:$0]  %s59, 2048, %s61, [#allocation6], 128, 128, 8
    $region17: #{tpu_custom_call.1} parent=1 // pred_fallthru
      _
    // Predicated region
    $region18: #{tpu_custom_call.1} parent=1 // pred_check
      _
    $region19: #{tpu_custom_call.1} parent=1 // pred_check_branch
      %68 = sbr.rel (0) target = $region21
    $region20: #{tpu_custom_call.1} parent=1 // pred_region
      %70 = vsyncadd [#allocation9], 0
      %s72 = sshll.u32 %s4, 4
      %s73 = int_to_ptr.hbm [resolvable:$true] %s72
      %s74 = sshll.u32 [#allocation8], 4
      %s75 = int_to_ptr.vmem [resolvable:$true] %s74
      %77 = dma.hbm_to_vmem [thread:$0]  %s73, 64, %s75, [#allocation9]
    $region21: #{tpu_custom_call.1} parent=1 // pred_fallthru
      _
    // Predicated region
    $region22: #{tpu_custom_call.1} parent=1 // pred_check
      _
    $region23: #{tpu_custom_call.1} parent=1 // pred_check_branch
      %79 = sbr.rel (0) target = $region25
    $region24: #{tpu_custom_call.1} parent=1 // pred_region
      _
    $region25: #{tpu_custom_call.1} parent=1 // pred_fallthru
      _
    // Predicated region
    $region26: #{tpu_custom_call.1} parent=1 // pred_check
      _
    $region27: #{tpu_custom_call.1} parent=1 // pred_check_branch
      %81 = sbr.rel (0) target = $region29
    $region28: #{tpu_custom_call.1} parent=1 // pred_region
      _
    $region29: #{tpu_custom_call.1} parent=1 // pred_fallthru
      _
    // Predicated region
    $region30: #{tpu_custom_call.1} parent=1 // pred_check
      _
    $region31: #{tpu_custom_call.1} parent=1 // pred_check_branch
      %83 = sbr.rel (0) target = $region33
    $region32: #{tpu_custom_call.1} parent=1 // pred_region
      %85 = vsyncadd [#allocation9], 0
      %s86 = sshll.u32 %s7, 4
      %s87 = int_to_ptr.hbm [resolvable:$true] %s86
      %s88 = sshll.u32 [#allocation10], 4
      %s89 = int_to_ptr.vmem [resolvable:$true] %s88
      %94 = dma.hbm_to_vmem [thread:$0]  %s87, 4096, %s89, [#allocation9], 64, 64, 4
    $region33: #{tpu_custom_call.1} parent=1 // pred_fallthru
      _
    // Predicated region
    $region34: #{tpu_custom_call.1} parent=1 // pred_check
      _
    $region35: #{tpu_custom_call.1} parent=1 // pred_check_branch
      %96 = sbr.rel (0) target = $region37
    $region36: #{tpu_custom_call.1} parent=1 // pred_region
      _
    $region37: #{tpu_custom_call.1} parent=1 // pred_fallthru
      _
    // Predicated region
    $region38: #{tpu_custom_call.1} parent=1 // pred_check
      _
    $region39: #{tpu_custom_call.1} parent=1 // pred_check_branch
      %98 = sbr.rel (0) target = $region41
    $region40: #{tpu_custom_call.1} parent=1 // pred_region
      %100 = vsyncadd [#allocation12], 0
      %s101 = sshll.u32 %s9, 4
      %s102 = int_to_ptr.hbm [resolvable:$true] %s101
      %s103 = sshll.u32 [#allocation11], 4
      %s104 = int_to_ptr.vmem [resolvable:$true] %s103
      %109 = dma.hbm_to_vmem [thread:$0]  %s102, 8192, %s104, [#allocation12], 512, 512, 32
    $region41: #{tpu_custom_call.1} parent=1 // pred_fallthru
      _
    // Predicated region
    $region42: #{tpu_custom_call.1} parent=1 // pred_check
      _
    $region43: #{tpu_custom_call.1} parent=1 // pred_check_branch
      %111 = sbr.rel (0) target = $region45
    $region44: #{tpu_custom_call.1} parent=1 // pred_region
      _
    $region45: #{tpu_custom_call.1} parent=1 // pred_fallthru
      _
    // Predicated region
    $region46: #{tpu_custom_call.1} parent=1 // pred_check
      _
    $region47: #{tpu_custom_call.1} parent=1 // pred_check_branch
      %113 = sbr.rel (0) target = $region49
    $region48: #{tpu_custom_call.1} parent=1 // pred_region
      %115 = vsyncadd [#allocation12], 0
      %s116 = sshll.u32 %s11, 4
      %s117 = int_to_ptr.hbm [resolvable:$true] %s116
      %s118 = sshll.u32 [#allocation13], 4
      %s119 = int_to_ptr.vmem [resolvable:$true] %s118
      %124 = dma.hbm_to_vmem [thread:$0]  %s117, 16384, %s119, [#allocation12], 256, 256, 16
    $region49: #{tpu_custom_call.1} parent=1 // pred_fallthru
      _
    // Predicated region
    $region50: #{tpu_custom_call.1} parent=1 // pred_check
      _
    $region51: #{tpu_custom_call.1} parent=1 // pred_check_branch
      %126 = sbr.rel (0) target = $region53
    $region52: #{tpu_custom_call.1} parent=1 // pred_region
      _
    $region53: #{tpu_custom_call.1} parent=1 // pred_fallthru
      _
    // Predicated region
    $region54: #{tpu_custom_call.1} parent=1 // pred_check
      _
    $region55: #{tpu_custom_call.1} parent=1 // pred_check_branch
      %128 = sbr.rel (0) target = $region57
    $region56: #{tpu_custom_call.1} parent=1 // pred_region
      _
    $region57: #{tpu_custom_call.1} parent=1 // pred_fallthru
      _
    // Predicated region
    $region58: #{tpu_custom_call.1} parent=1 // pred_check
      _
    $region59: #{tpu_custom_call.1} parent=1 // pred_check_branch
      %130 = sbr.rel (0) target = $region61
    $region60: #{tpu_custom_call.1} parent=1 // pred_region
      _
    $region61: #{tpu_custom_call.1} parent=1 // pred_fallthru
      _
    // Predicated region
    $region62: #{tpu_custom_call.1} parent=1 // pred_check
      _
    $region63: #{tpu_custom_call.1} parent=1 // pred_check_branch
      %132 = sbr.rel (0) target = $region65
    $region64: #{tpu_custom_call.1} parent=1 // pred_region
      _
    $region65: #{tpu_custom_call.1} parent=1 // pred_fallthru
      _
    // Predicated region
    $region66: #{tpu_custom_call.1} parent=1 // pred_check
      _
    $region67: #{tpu_custom_call.1} parent=1 // pred_check_branch
      %134 = sbr.rel (0) target = $region69
    $region68: #{tpu_custom_call.1} parent=1 // pred_region
      %136 = dma.done [#allocation3], 64
    $region69: #{tpu_custom_call.1} parent=1 // pred_fallthru
      _
    // Predicated region
    $region70: #{tpu_custom_call.1} parent=1 // pred_check
      _
    $region71: #{tpu_custom_call.1} parent=1 // pred_check_branch
      %138 = sbr.rel (0) target = $region73
    $region72: #{tpu_custom_call.1} parent=1 // pred_region
      %140 = dma.done [#allocation6], 32
    $region73: #{tpu_custom_call.1} parent=1 // pred_fallthru
      _
    // Predicated region
    $region74: #{tpu_custom_call.1} parent=1 // pred_check
      _
    $region75: #{tpu_custom_call.1} parent=1 // pred_check_branch
      %142 = sbr.rel (0) target = $region77
    $region76: #{tpu_custom_call.1} parent=1 // pred_region
      %144 = dma.done [#allocation6], 2048
    $region77: #{tpu_custom_call.1} parent=1 // pred_fallthru
      _
    // Predicated region
    $region78: #{tpu_custom_call.1} parent=1 // pred_check
      _
    $region79: #{tpu_custom_call.1} parent=1 // pred_check_branch
      %146 = sbr.rel (0) target = $region81
    $region80: #{tpu_custom_call.1} parent=1 // pred_region
      %148 = dma.done [#allocation9], 64
    $region81: #{tpu_custom_call.1} parent=1 // pred_fallthru
      _
    // Predicated region
    $region82: #{tpu_custom_call.1} parent=1 // pred_check
      _
    $region83: #{tpu_custom_call.1} parent=1 // pred_check_branch
      %150 = sbr.rel (0) target = $region85
    $region84: #{tpu_custom_call.1} parent=1 // pred_region
      %152 = dma.done [#allocation9], 4096
    $region85: #{tpu_custom_call.1} parent=1 // pred_fallthru
      _
    // Predicated region
    $region86: #{tpu_custom_call.1} parent=1 // pred_check
      _
    $region87: #{tpu_custom_call.1} parent=1 // pred_check_branch
      %154 = sbr.rel (0) target = $region89
    $region88: #{tpu_custom_call.1} parent=1 // pred_region
      %156 = dma.done [#allocation12], 8192
    $region89: #{tpu_custom_call.1} parent=1 // pred_fallthru
      _
    // Predicated region
    $region90: #{tpu_custom_call.1} parent=1 // pred_check
      _
    $region91: #{tpu_custom_call.1} parent=1 // pred_check_branch
      %158 = sbr.rel (0) target = $region93
    $region92: #{tpu_custom_call.1} parent=1 // pred_region
      %160 = dma.done [#allocation12], 16384
    $region93: #{tpu_custom_call.1} parent=1 // pred_fallthru
      _
    %v162 = vld [vmem:[%s0] sm:$0xff]
    %v163 = vld [vmem:[%s0 + $0x8] sm:$0xff]
    %v164 = vld [vmem:[%s0 + $0x10] sm:$0xff]
    %v165 = vld [vmem:[%s0 + $0x18] sm:$0xff]
    %v166 = vld [vmem:[%s0 + $0x20] sm:$0xff]
    %v167 = vld [vmem:[%s0 + $0x28] sm:$0xff]
    %v168 = vld [vmem:[%s0 + $0x30] sm:$0xff]
    %v169 = vld [vmem:[%s0 + $0x38] sm:$0xff]
    %v170 = vld [vmem:[%s0 + $0x40] sm:$0xff]
    %v171 = vld [vmem:[%s0 + $0x48] sm:$0xff]
    %v172 = vld [vmem:[%s0 + $0x50] sm:$0xff]
    %v173 = vld [vmem:[%s0 + $0x58] sm:$0xff]
    %v174 = vld [vmem:[%s0 + $0x60] sm:$0xff]
    %v175 = vld [vmem:[%s0 + $0x68] sm:$0xff]
    %v176 = vld [vmem:[%s0 + $0x70] sm:$0xff]
    %v177 = vld [vmem:[%s0 + $0x78] sm:$0xff]
    %v178 = vld [vmem:[%s0 + $0x80] sm:$0xff]
    %v179 = vld [vmem:[%s0 + $0x88] sm:$0xff]
    %v180 = vld [vmem:[%s0 + $0x90] sm:$0xff]
    %v181 = vld [vmem:[%s0 + $0x98] sm:$0xff]
    %v182 = vld [vmem:[%s0 + $0xa0] sm:$0xff]
    %v183 = vld [vmem:[%s0 + $0xa8] sm:$0xff]
    %v184 = vld [vmem:[%s0 + $0xb0] sm:$0xff]
    %v185 = vld [vmem:[%s0 + $0xb8] sm:$0xff]
    %v186 = vld [vmem:[%s0 + $0xc0] sm:$0xff]
    %v187 = vld [vmem:[%s0 + $0xc8] sm:$0xff]
    %v188 = vld [vmem:[%s0 + $0xd0] sm:$0xff]
    %v189 = vld [vmem:[%s0 + $0xd8] sm:$0xff]
    %v190 = vld [vmem:[%s0 + $0xe0] sm:$0xff]
    %v191 = vld [vmem:[%s0 + $0xe8] sm:$0xff]
    %v192 = vld [vmem:[%s0 + $0xf0] sm:$0xff]
    %v193 = vld [vmem:[%s0 + $0xf8] sm:$0xff]
    %v194 = vpack.c.bf16 %v163, %v162
    %v195 = vpack.c.bf16 %v165, %v164
    %v196 = vpack.c.bf16 %v167, %v166
    %v197 = vpack.c.bf16 %v169, %v168
    %v198 = vpack.c.bf16 %v171, %v170
    %v199 = vpack.c.bf16 %v173, %v172
    %v200 = vpack.c.bf16 %v175, %v174
    %v201 = vpack.c.bf16 %v177, %v176
    %v202 = vpack.c.bf16 %v179, %v178
    %v203 = vpack.c.bf16 %v181, %v180
    %v204 = vpack.c.bf16 %v183, %v182
    %v205 = vpack.c.bf16 %v185, %v184
    %v206 = vpack.c.bf16 %v187, %v186
    %v207 = vpack.c.bf16 %v189, %v188
    %v208 = vpack.c.bf16 %v191, %v190
    %v209 = vpack.c.bf16 %v193, %v192
    %v210 = vld [vmem:[#allocation2] sm:$0xf]
    %vm211 = vcmask 64512
    %v213 = vsel %vm211, %v194, 0
    %v216 = vsel %vm211, %v195, 0
    %v219 = vsel %vm211, %v196, 0
    %v222 = vsel %vm211, %v197, 0
    %v225 = vsel %vm211, %v198, 0
    %v228 = vsel %vm211, %v199, 0
    %v231 = vsel %vm211, %v200, 0
    %v234 = vsel %vm211, %v201, 0
    %v237 = vsel %vm211, %v202, 0
    %v240 = vsel %vm211, %v203, 0
    %v243 = vsel %vm211, %v204, 0
    %v246 = vsel %vm211, %v205, 0
    %v249 = vsel %vm211, %v206, 0
    %v252 = vsel %vm211, %v207, 0
    %v255 = vsel %vm211, %v208, 0
    %v258 = vsel %vm211, %v209, 0
    %vm260 = vcmask 1043456
    %v262 = vsel %vm260, %v210, 0
    %264 = vmatpush.bf16.msra.mxu0 0
    %265 = vmatpush.bf16.msra.mxu0 0
    %266 = vmatpush.bf16.msra.mxu0 0
    %267 = vmatpush.bf16.msra.mxu0 0
    %268 = vmatpush.bf16.msra.mxu0 0
    %269 = vmatpush.bf16.msra.mxu0 0
    %270 = vmatpush.bf16.msra.mxu0 0
    %271 = vmatpush.bf16.msra.mxu0 %v262
    %272 = vmatmul.bf16.gmra.mxu0 %v213
    %v273 = vpop.f32.mrf.mxu0
    %v274 = vadd.f32 0.0, %v273
    %v275 = vpop.f32.mrf.mxu0
    %v276 = vadd.f32 0.0, %v275
    %277 = vmatmul.bf16.gmra.mxu0 %v216
    %v278 = vpop.f32.mrf.mxu0
    %v279 = vadd.f32 0.0, %v278
    %v280 = vpop.f32.mrf.mxu0
    %v281 = vadd.f32 0.0, %v280
    %282 = vmatmul.bf16.gmra.mxu0 %v219
    %v283 = vpop.f32.mrf.mxu0
    %v284 = vadd.f32 0.0, %v283
    %v285 = vpop.f32.mrf.mxu0
    %v286 = vadd.f32 0.0, %v285
    %287 = vmatmul.bf16.gmra.mxu0 %v222
    %v288 = vpop.f32.mrf.mxu0
    %v289 = vadd.f32 0.0, %v288
    %v290 = vpop.f32.mrf.mxu0
    %v291 = vadd.f32 0.0, %v290
    %292 = vmatmul.bf16.gmra.mxu0 %v225
    %v293 = vpop.f32.mrf.mxu0
    %v294 = vadd.f32 0.0, %v293
    %v295 = vpop.f32.mrf.mxu0
    %v296 = vadd.f32 0.0, %v295
    %297 = vmatmul.bf16.gmra.mxu0 %v228
    %v298 = vpop.f32.mrf.mxu0
    %v299 = vadd.f32 0.0, %v298
    %v300 = vpop.f32.mrf.mxu0
    %v301 = vadd.f32 0.0, %v300
    %302 = vmatmul.bf16.gmra.mxu0 %v231
    %v303 = vpop.f32.mrf.mxu0
    %v304 = vadd.f32 0.0, %v303
    %v305 = vpop.f32.mrf.mxu0
    %v306 = vadd.f32 0.0, %v305
    %307 = vmatmul.bf16.gmra.mxu0 %v234
    %v308 = vpop.f32.mrf.mxu0
    %v309 = vadd.f32 0.0, %v308
    %v310 = vpop.f32.mrf.mxu0
    %v311 = vadd.f32 0.0, %v310
    %312 = vmatmul.bf16.gmra.mxu0 %v237
    %v313 = vpop.f32.mrf.mxu0
    %v314 = vadd.f32 0.0, %v313
    %v315 = vpop.f32.mrf.mxu0
    %v316 = vadd.f32 0.0, %v315
    %317 = vmatmul.bf16.gmra.mxu0 %v240
    %v318 = vpop.f32.mrf.mxu0
    %v319 = vadd.f32 0.0, %v318
    %v320 = vpop.f32.mrf.mxu0
    %v321 = vadd.f32 0.0, %v320
    %322 = vmatmul.bf16.gmra.mxu0 %v243
    %v323 = vpop.f32.mrf.mxu0
    %v324 = vadd.f32 0.0, %v323
    %v325 = vpop.f32.mrf.mxu0
    %v326 = vadd.f32 0.0, %v325
    %327 = vmatmul.bf16.gmra.mxu0 %v246
    %v328 = vpop.f32.mrf.mxu0
    %v329 = vadd.f32 0.0, %v328
    %v330 = vpop.f32.mrf.mxu0
    %v331 = vadd.f32 0.0, %v330
    %332 = vmatmul.bf16.gmra.mxu0 %v249
    %v333 = vpop.f32.mrf.mxu0
    %v334 = vadd.f32 0.0, %v333
    %v335 = vpop.f32.mrf.mxu0
    %v336 = vadd.f32 0.0, %v335
    %337 = vmatmul.bf16.gmra.mxu0 %v252
    %v338 = vpop.f32.mrf.mxu0
    %v339 = vadd.f32 0.0, %v338
    %v340 = vpop.f32.mrf.mxu0
    %v341 = vadd.f32 0.0, %v340
    %342 = vmatmul.bf16.gmra.mxu0 %v255
    %v343 = vpop.f32.mrf.mxu0
    %v344 = vadd.f32 0.0, %v343
    %v345 = vpop.f32.mrf.mxu0
    %v346 = vadd.f32 0.0, %v345
    %347 = vmatmul.bf16.gmra.mxu0 %v258
    %v348 = vpop.f32.mrf.mxu0
    %v349 = vadd.f32 0.0, %v348
    %v350 = vpop.f32.mrf.mxu0
    %v351 = vadd.f32 0.0, %v350
    %352 = vdwg.mxu0
    %v353 = vld [vmem:[#allocation5] sm:$0x3]
    %v354 = vadd.f32 %v274, %v276
    %v355 = vadd.f32 %v354, %v279
    %v356 = vadd.f32 %v355, %v281
    %v357 = vadd.f32 %v356, %v284
    %v358 = vadd.f32 %v357, %v286
    %v359 = vadd.f32 %v358, %v289
    %v360 = vadd.f32 %v359, %v291
    %v361 = vadd.f32 %v360, %v294
    %v362 = vadd.f32 %v361, %v296
    %v363 = vadd.f32 %v362, %v299
    %v364 = vadd.f32 %v363, %v301
    %v365 = vadd.f32 %v364, %v304
    %v366 = vadd.f32 %v365, %v306
    %v367 = vadd.f32 %v366, %v309
    %v368 = vadd.f32 %v367, %v311
    %v369 = vadd.f32 %v368, %v314
    %v370 = vadd.f32 %v369, %v316
    %v371 = vadd.f32 %v370, %v319
    %v372 = vadd.f32 %v371, %v321
    %v373 = vadd.f32 %v372, %v324
    %v374 = vadd.f32 %v373, %v326
    %v375 = vadd.f32 %v374, %v329
    %v376 = vadd.f32 %v375, %v331
    %v377 = vadd.f32 %v376, %v334
    %v378 = vadd.f32 %v377, %v336
    %v379 = vadd.f32 %v378, %v339
    %v380 = vadd.f32 %v379, %v341
    %v381 = vadd.f32 %v380, %v344
    %v382 = vadd.f32 %v381, %v346
    %v383 = vadd.f32 %v382, %v349
    %v384 = vadd.f32 %v383, %v351
    %v385 = vrot.slane %v384, 4
    %v386 = vadd.f32 %v384, %v385
    %v387 = vrot.slane %v386, 2
    %v388 = vadd.f32 %v386, %v387
    %v389 = vrot.slane %v388, 1
    %v390 = vadd.f32 %v388, %v389
    %v391 = vmul.f32 %v274, %v274
    %v392 = vmul.f32 %v276, %v276
    %v393 = vmul.f32 %v279, %v279
    %v394 = vmul.f32 %v281, %v281
    %v395 = vmul.f32 %v284, %v284
    %v396 = vmul.f32 %v286, %v286
    %v397 = vmul.f32 %v289, %v289
    %v398 = vmul.f32 %v291, %v291
    %v399 = vmul.f32 %v294, %v294
    %v400 = vmul.f32 %v296, %v296
    %v401 = vmul.f32 %v299, %v299
    %v402 = vmul.f32 %v301, %v301
    %v403 = vmul.f32 %v304, %v304
    %v404 = vmul.f32 %v306, %v306
    %v405 = vmul.f32 %v309, %v309
    %v406 = vmul.f32 %v311, %v311
    %v407 = vmul.f32 %v314, %v314
    %v408 = vmul.f32 %v316, %v316
    %v409 = vmul.f32 %v319, %v319
    %v410 = vmul.f32 %v321, %v321
    %v411 = vmul.f32 %v324, %v324
    %v412 = vmul.f32 %v326, %v326
    %v413 = vmul.f32 %v329, %v329
    %v414 = vmul.f32 %v331, %v331
    %v415 = vmul.f32 %v334, %v334
    %v416 = vmul.f32 %v336, %v336
    %v417 = vmul.f32 %v339, %v339
    %v418 = vmul.f32 %v341, %v341
    %v419 = vmul.f32 %v344, %v344
    %v420 = vmul.f32 %v346, %v346
    %v421 = vmul.f32 %v349, %v349
    %v422 = vmul.f32 %v351, %v351
    %v423 = vadd.f32 %v391, %v392
    %v424 = vadd.f32 %v423, %v393
    %v425 = vadd.f32 %v424, %v394
    %v426 = vadd.f32 %v425, %v395
    %v427 = vadd.f32 %v426, %v396
    %v428 = vadd.f32 %v427, %v397
    %v429 = vadd.f32 %v428, %v398
    %v430 = vadd.f32 %v429, %v399
    %v431 = vadd.f32 %v430, %v400
    %v432 = vadd.f32 %v431, %v401
    %v433 = vadd.f32 %v432, %v402
    %v434 = vadd.f32 %v433, %v403
    %v435 = vadd.f32 %v434, %v404
    %v436 = vadd.f32 %v435, %v405
    %v437 = vadd.f32 %v436, %v406
    %v438 = vadd.f32 %v437, %v407
    %v439 = vadd.f32 %v438, %v408
    %v440 = vadd.f32 %v439, %v409
    %v441 = vadd.f32 %v440, %v410
    %v442 = vadd.f32 %v441, %v411
    %v443 = vadd.f32 %v442, %v412
    %v444 = vadd.f32 %v443, %v413
    %v445 = vadd.f32 %v444, %v414
    %v446 = vadd.f32 %v445, %v415
    %v447 = vadd.f32 %v446, %v416
    %v448 = vadd.f32 %v447, %v417
    %v449 = vadd.f32 %v448, %v418
    %v450 = vadd.f32 %v449, %v419
    %v451 = vadd.f32 %v450, %v420
    %v452 = vadd.f32 %v451, %v421
    %v453 = vadd.f32 %v452, %v422
    %v454 = vrot.slane %v453, 4
    %v455 = vadd.f32 %v453, %v454
    %v456 = vrot.slane %v455, 2
    %v457 = vadd.f32 %v455, %v456
    %v458 = vrot.slane %v457, 1
    %v459 = vadd.f32 %v457, %v458
    %v460 = vmul.f32 %v390, 0.00390625
    %v461 = vmul.f32 %v459, 0.00390625
    %v462 = vmul.f32 %v460, %v460
    %v463 = vsub.f32 %v461, %v462
    %v464 = vmax.f32 %v463, 0.0
    %v465 = vadd.f32 %v464, 1e-05
    %v466 = vrsqrt.pop %v465
    %v467 = vmul.f32 %v466, %v465
    %v468 = vmul.f32 %v467, %v466
    %v469 = vmul.f32 0.5, %v468
    %v470 = vsub.f32 1.5, %v469
    %v471 = vmul.f32 %v466, %v470
    %vm472 = vweird.f32 %v465
    %vm473 = vweird.f32 %v466
    %vm474 = vmor %vm472, %vm473
    %v475 = vsel %vm474, %v466, %v471
    %v476 = vmul.f32 %v353, %v475
    %v477 = vmul.f32 %v460, %v476
    %v479 = vrot.slane %v477, 7
    %v481 = vsub.f32 %v353, %v479
    %v482 = vperm.slane %v476, 0
    %v483 = vmul.f32 %v274, %v482
    %v484 = vmul.f32 %v276, %v482
    %v485 = vmul.f32 %v279, %v482
    %v486 = vmul.f32 %v281, %v482
    %v487 = vmul.f32 %v284, %v482
    %v488 = vmul.f32 %v286, %v482
    %v489 = vmul.f32 %v289, %v482
    %v490 = vmul.f32 %v291, %v482
    %v491 = vmul.f32 %v294, %v482
    %v492 = vmul.f32 %v296, %v482
    %v493 = vmul.f32 %v299, %v482
    %v494 = vmul.f32 %v301, %v482
    %v495 = vmul.f32 %v304, %v482
    %v496 = vmul.f32 %v306, %v482
    %v497 = vmul.f32 %v309, %v482
    %v498 = vmul.f32 %v311, %v482
    %v499 = vmul.f32 %v314, %v482
    %v500 = vmul.f32 %v316, %v482
    %v501 = vmul.f32 %v319, %v482
    %v502 = vmul.f32 %v321, %v482
    %v503 = vmul.f32 %v324, %v482
    %v504 = vmul.f32 %v326, %v482
    %v505 = vmul.f32 %v329, %v482
    %v506 = vmul.f32 %v331, %v482
    %v507 = vmul.f32 %v334, %v482
    %v508 = vmul.f32 %v336, %v482
    %v509 = vmul.f32 %v339, %v482
    %v510 = vmul.f32 %v341, %v482
    %v511 = vmul.f32 %v344, %v482
    %v512 = vmul.f32 %v346, %v482
    %v513 = vmul.f32 %v349, %v482
    %v514 = vmul.f32 %v351, %v482
    %v515 = vperm.slane %v481, 1
    %v516 = vadd.f32 %v483, %v515
    %v517 = vadd.f32 %v484, %v515
    %v518 = vadd.f32 %v485, %v515
    %v519 = vadd.f32 %v486, %v515
    %v520 = vadd.f32 %v487, %v515
    %v521 = vadd.f32 %v488, %v515
    %v522 = vadd.f32 %v489, %v515
    %v523 = vadd.f32 %v490, %v515
    %v524 = vadd.f32 %v491, %v515
    %v525 = vadd.f32 %v492, %v515
    %v526 = vadd.f32 %v493, %v515
    %v527 = vadd.f32 %v494, %v515
    %v528 = vadd.f32 %v495, %v515
    %v529 = vadd.f32 %v496, %v515
    %v530 = vadd.f32 %v497, %v515
    %v531 = vadd.f32 %v498, %v515
    %v532 = vadd.f32 %v499, %v515
    %v533 = vadd.f32 %v500, %v515
    %v534 = vadd.f32 %v501, %v515
    %v535 = vadd.f32 %v502, %v515
    %v536 = vadd.f32 %v503, %v515
    %v537 = vadd.f32 %v504, %v515
    %v538 = vadd.f32 %v505, %v515
    %v539 = vadd.f32 %v506, %v515
    %v540 = vadd.f32 %v507, %v515
    %v541 = vadd.f32 %v508, %v515
    %v542 = vadd.f32 %v509, %v515
    %v543 = vadd.f32 %v510, %v515
    %v544 = vadd.f32 %v511, %v515
    %v545 = vadd.f32 %v512, %v515
    %v546 = vadd.f32 %v513, %v515
    %v547 = vadd.f32 %v514, %v515
    %v548 = vmax.f32 %v516, 0.0
    %v549 = vmax.f32 %v517, 0.0
    %v550 = vmax.f32 %v518, 0.0
    %v551 = vmax.f32 %v519, 0.0
    %v552 = vmax.f32 %v520, 0.0
    %v553 = vmax.f32 %v521, 0.0
    %v554 = vmax.f32 %v522, 0.0
    %v555 = vmax.f32 %v523, 0.0
    %v556 = vmax.f32 %v524, 0.0
    %v557 = vmax.f32 %v525, 0.0
    %v558 = vmax.f32 %v526, 0.0
    %v559 = vmax.f32 %v527, 0.0
    %v560 = vmax.f32 %v528, 0.0
    %v561 = vmax.f32 %v529, 0.0
    %v562 = vmax.f32 %v530, 0.0
    %v563 = vmax.f32 %v531, 0.0
    %v564 = vmax.f32 %v532, 0.0
    %v565 = vmax.f32 %v533, 0.0
    %v566 = vmax.f32 %v534, 0.0
    %v567 = vmax.f32 %v535, 0.0
    %v568 = vmax.f32 %v536, 0.0
    %v569 = vmax.f32 %v537, 0.0
    %v570 = vmax.f32 %v538, 0.0
    %v571 = vmax.f32 %v539, 0.0
    %v572 = vmax.f32 %v540, 0.0
    %v573 = vmax.f32 %v541, 0.0
    %v574 = vmax.f32 %v542, 0.0
    %v575 = vmax.f32 %v543, 0.0
    %v576 = vmax.f32 %v544, 0.0
    %v577 = vmax.f32 %v545, 0.0
    %v578 = vmax.f32 %v546, 0.0
    %v579 = vmax.f32 %v547, 0.0
    %v580 = vpack.c.bf16 %v549, %v548
    %v581 = vpack.c.bf16 %v551, %v550
    %v582 = vpack.c.bf16 %v553, %v552
    %v583 = vpack.c.bf16 %v555, %v554
    %v584 = vpack.c.bf16 %v557, %v556
    %v585 = vpack.c.bf16 %v559, %v558
    %v586 = vpack.c.bf16 %v561, %v560
    %v587 = vpack.c.bf16 %v563, %v562
    %v588 = vpack.c.bf16 %v565, %v564
    %v589 = vpack.c.bf16 %v567, %v566
    %v590 = vpack.c.bf16 %v569, %v568
    %v591 = vpack.c.bf16 %v571, %v570
    %v592 = vpack.c.bf16 %v573, %v572
    %v593 = vpack.c.bf16 %v575, %v574
    %v594 = vpack.c.bf16 %v577, %v576
    %v595 = vpack.c.bf16 %v579, %v578
    %v596 = vld [vmem:[#allocation7] sm:$0xff]
    %v597 = vld [vmem:[#allocation7 + $0x8] sm:$0xff]
    %v598 = vld [vmem:[#allocation7 + $0x10] sm:$0xff]
    %v599 = vld [vmem:[#allocation7 + $0x18] sm:$0xff]
    %v600 = vld [vmem:[#allocation7 + $0x20] sm:$0xff]
    %v601 = vld [vmem:[#allocation7 + $0x28] sm:$0xff]
    %v602 = vld [vmem:[#allocation7 + $0x30] sm:$0xff]
    %v603 = vld [vmem:[#allocation7 + $0x38] sm:$0xff]
    %v604 = vld [vmem:[#allocation7 + $0x40] sm:$0xff]
    %v605 = vld [vmem:[#allocation7 + $0x48] sm:$0xff]
    %v606 = vld [vmem:[#allocation7 + $0x50] sm:$0xff]
    %v607 = vld [vmem:[#allocation7 + $0x58] sm:$0xff]
    %v608 = vld [vmem:[#allocation7 + $0x60] sm:$0xff]
    %v609 = vld [vmem:[#allocation7 + $0x68] sm:$0xff]
    %v610 = vld [vmem:[#allocation7 + $0x70] sm:$0xff]
    %v611 = vld [vmem:[#allocation7 + $0x78] sm:$0xff]
    %v628 = vunpack.c.l.b16 %v596
    %v629 = vunpack.c.h.b16 %v596
    %v630 = vunpack.c.l.b16 %v597
    %v631 = vunpack.c.h.b16 %v597
    %v632 = vunpack.c.l.b16 %v598
    %v633 = vunpack.c.h.b16 %v598
    %v634 = vunpack.c.l.b16 %v599
    %v635 = vunpack.c.h.b16 %v599
    %v636 = vunpack.c.l.b16 %v600
    %v637 = vunpack.c.h.b16 %v600
    %v638 = vunpack.c.l.b16 %v601
    %v639 = vunpack.c.h.b16 %v601
    %v640 = vunpack.c.l.b16 %v602
    %v641 = vunpack.c.h.b16 %v602
    %v642 = vunpack.c.l.b16 %v603
    %v643 = vunpack.c.h.b16 %v603
    %v644 = vunpack.c.l.b16 %v604
    %v645 = vunpack.c.h.b16 %v604
    %v646 = vunpack.c.l.b16 %v605
    %v647 = vunpack.c.h.b16 %v605
    %v648 = vunpack.c.l.b16 %v606
    %v649 = vunpack.c.h.b16 %v606
    %v650 = vunpack.c.l.b16 %v607
    %v651 = vunpack.c.h.b16 %v607
    %v652 = vunpack.c.l.b16 %v608
    %v653 = vunpack.c.h.b16 %v608
    %v654 = vunpack.c.l.b16 %v609
    %v655 = vunpack.c.h.b16 %v609
    %v656 = vunpack.c.l.b16 %v610
    %v657 = vunpack.c.h.b16 %v610
    %v658 = vunpack.c.l.b16 %v611
    %v659 = vunpack.c.h.b16 %v611
    %v660 = vpack.c.b16 %v630, %v628
    %v661 = vpack.c.b16 %v631, %v629
    %v662 = vpack.c.b16 %v634, %v632
    %v663 = vpack.c.b16 %v635, %v633
    %v664 = vpack.c.b16 %v638, %v636
    %v665 = vpack.c.b16 %v639, %v637
    %v666 = vpack.c.b16 %v642, %v640
    %v667 = vpack.c.b16 %v643, %v641
    %v668 = vpack.c.b16 %v646, %v644
    %v669 = vpack.c.b16 %v647, %v645
    %v670 = vpack.c.b16 %v650, %v648
    %v671 = vpack.c.b16 %v651, %v649
    %v672 = vpack.c.b16 %v654, %v652
    %v673 = vpack.c.b16 %v655, %v653
    %v674 = vpack.c.b16 %v658, %v656
    %v675 = vpack.c.b16 %v659, %v657
    %692 = vmatpush.bf16.msra.mxu0 %v674
    %693 = vmatpush.bf16.msra.mxu0 %v672
    %694 = vmatpush.bf16.msra.mxu0 %v670
    %695 = vmatpush.bf16.msra.mxu0 %v668
    %696 = vmatpush.bf16.msra.mxu0 %v666
    %697 = vmatpush.bf16.msra.mxu0 %v664
    %698 = vmatpush.bf16.msra.mxu0 %v662
    %699 = vmatpush.bf16.msra.mxu0 %v660
    %700 = vmatmul.bf16.gmra.mxu0 %v580
    %v701 = vpop.f32.mrf.mxu0
    %v702 = vadd.f32 0.0, %v701
    %v703 = vpop.f32.mrf.mxu0
    %v704 = vadd.f32 0.0, %v703
    %705 = vmatmul.bf16.gmra.mxu0 %v581
    %v706 = vpop.f32.mrf.mxu0
    %v707 = vadd.f32 0.0, %v706
    %v708 = vpop.f32.mrf.mxu0
    %v709 = vadd.f32 0.0, %v708
    %710 = vmatmul.bf16.gmra.mxu0 %v582
    %v711 = vpop.f32.mrf.mxu0
    %v712 = vadd.f32 0.0, %v711
    %v713 = vpop.f32.mrf.mxu0
    %v714 = vadd.f32 0.0, %v713
    %715 = vmatmul.bf16.gmra.mxu0 %v583
    %v716 = vpop.f32.mrf.mxu0
    %v717 = vadd.f32 0.0, %v716
    %v718 = vpop.f32.mrf.mxu0
    %v719 = vadd.f32 0.0, %v718
    %720 = vmatmul.bf16.gmra.mxu0 %v584
    %v721 = vpop.f32.mrf.mxu0
    %v722 = vadd.f32 0.0, %v721
    %v723 = vpop.f32.mrf.mxu0
    %v724 = vadd.f32 0.0, %v723
    %725 = vmatmul.bf16.gmra.mxu0 %v585
    %v726 = vpop.f32.mrf.mxu0
    %v727 = vadd.f32 0.0, %v726
    %v728 = vpop.f32.mrf.mxu0
    %v729 = vadd.f32 0.0, %v728
    %730 = vmatmul.bf16.gmra.mxu0 %v586
    %v731 = vpop.f32.mrf.mxu0
    %v732 = vadd.f32 0.0, %v731
    %v733 = vpop.f32.mrf.mxu0
    %v734 = vadd.f32 0.0, %v733
    %735 = vmatmul.bf16.gmra.mxu0 %v587
    %v736 = vpop.f32.mrf.mxu0
    %v737 = vadd.f32 0.0, %v736
    %v738 = vpop.f32.mrf.mxu0
    %v739 = vadd.f32 0.0, %v738
    %740 = vmatmul.bf16.gmra.mxu0 %v588
    %v741 = vpop.f32.mrf.mxu0
    %v742 = vadd.f32 0.0, %v741
    %v743 = vpop.f32.mrf.mxu0
    %v744 = vadd.f32 0.0, %v743
    %745 = vmatmul.bf16.gmra.mxu0 %v589
    %v746 = vpop.f32.mrf.mxu0
    %v747 = vadd.f32 0.0, %v746
    %v748 = vpop.f32.mrf.mxu0
    %v749 = vadd.f32 0.0, %v748
    %750 = vmatmul.bf16.gmra.mxu0 %v590
    %v751 = vpop.f32.mrf.mxu0
    %v752 = vadd.f32 0.0, %v751
    %v753 = vpop.f32.mrf.mxu0
    %v754 = vadd.f32 0.0, %v753
    %755 = vmatmul.bf16.gmra.mxu0 %v591
    %v756 = vpop.f32.mrf.mxu0
    %v757 = vadd.f32 0.0, %v756
    %v758 = vpop.f32.mrf.mxu0
    %v759 = vadd.f32 0.0, %v758
    %760 = vmatmul.bf16.gmra.mxu0 %v592
    %v761 = vpop.f32.mrf.mxu0
    %v762 = vadd.f32 0.0, %v761
    %v763 = vpop.f32.mrf.mxu0
    %v764 = vadd.f32 0.0, %v763
    %765 = vmatmul.bf16.gmra.mxu0 %v593
    %v766 = vpop.f32.mrf.mxu0
    %v767 = vadd.f32 0.0, %v766
    %v768 = vpop.f32.mrf.mxu0
    %v769 = vadd.f32 0.0, %v768
    %770 = vmatmul.bf16.gmra.mxu0 %v594
    %v771 = vpop.f32.mrf.mxu0
    %v772 = vadd.f32 0.0, %v771
    %v773 = vpop.f32.mrf.mxu0
    %v774 = vadd.f32 0.0, %v773
    %775 = vmatmul.bf16.gmra.mxu0 %v595
    %v776 = vpop.f32.mrf.mxu0
    %v777 = vadd.f32 0.0, %v776
    %v778 = vpop.f32.mrf.mxu0
    %v779 = vadd.f32 0.0, %v778
    %780 = vdwg.mxu0
    %781 = vmatpush.bf16.msra.mxu0 %v675
    %782 = vmatpush.bf16.msra.mxu0 %v673
    %783 = vmatpush.bf16.msra.mxu0 %v671
    %784 = vmatpush.bf16.msra.mxu0 %v669
    %785 = vmatpush.bf16.msra.mxu0 %v667
    %786 = vmatpush.bf16.msra.mxu0 %v665
    %787 = vmatpush.bf16.msra.mxu0 %v663
    %788 = vmatpush.bf16.msra.mxu0 %v661
    %789 = vmatmul.bf16.gmra.mxu0 %v580
    %v790 = vpop.f32.mrf.mxu0
    %v791 = vadd.f32 0.0, %v790
    %v792 = vpop.f32.mrf.mxu0
    %v793 = vadd.f32 0.0, %v792
    %794 = vmatmul.bf16.gmra.mxu0 %v581
    %v795 = vpop.f32.mrf.mxu0
    %v796 = vadd.f32 0.0, %v795
    %v797 = vpop.f32.mrf.mxu0
    %v798 = vadd.f32 0.0, %v797
    %799 = vmatmul.bf16.gmra.mxu0 %v582
    %v800 = vpop.f32.mrf.mxu0
    %v801 = vadd.f32 0.0, %v800
    %v802 = vpop.f32.mrf.mxu0
    %v803 = vadd.f32 0.0, %v802
    %804 = vmatmul.bf16.gmra.mxu0 %v583
    %v805 = vpop.f32.mrf.mxu0
    %v806 = vadd.f32 0.0, %v805
    %v807 = vpop.f32.mrf.mxu0
    %v808 = vadd.f32 0.0, %v807
    %809 = vmatmul.bf16.gmra.mxu0 %v584
    %v810 = vpop.f32.mrf.mxu0
    %v811 = vadd.f32 0.0, %v810
    %v812 = vpop.f32.mrf.mxu0
    %v813 = vadd.f32 0.0, %v812
    %814 = vmatmul.bf16.gmra.mxu0 %v585
    %v815 = vpop.f32.mrf.mxu0
    %v816 = vadd.f32 0.0, %v815
    %v817 = vpop.f32.mrf.mxu0
    %v818 = vadd.f32 0.0, %v817
    %819 = vmatmul.bf16.gmra.mxu0 %v586
    %v820 = vpop.f32.mrf.mxu0
    %v821 = vadd.f32 0.0, %v820
    %v822 = vpop.f32.mrf.mxu0
    %v823 = vadd.f32 0.0, %v822
    %824 = vmatmul.bf16.gmra.mxu0 %v587
    %v825 = vpop.f32.mrf.mxu0
    %v826 = vadd.f32 0.0, %v825
    %v827 = vpop.f32.mrf.mxu0
    %v828 = vadd.f32 0.0, %v827
    %829 = vmatmul.bf16.gmra.mxu0 %v588
    %v830 = vpop.f32.mrf.mxu0
    %v831 = vadd.f32 0.0, %v830
    %v832 = vpop.f32.mrf.mxu0
    %v833 = vadd.f32 0.0, %v832
    %834 = vmatmul.bf16.gmra.mxu0 %v589
    %v835 = vpop.f32.mrf.mxu0
    %v836 = vadd.f32 0.0, %v835
    %v837 = vpop.f32.mrf.mxu0
    %v838 = vadd.f32 0.0, %v837
    %839 = vmatmul.bf16.gmra.mxu0 %v590
    %v840 = vpop.f32.mrf.mxu0
    %v841 = vadd.f32 0.0, %v840
    %v842 = vpop.f32.mrf.mxu0
    %v843 = vadd.f32 0.0, %v842
    %844 = vmatmul.bf16.gmra.mxu0 %v591
    %v845 = vpop.f32.mrf.mxu0
    %v846 = vadd.f32 0.0, %v845
    %v847 = vpop.f32.mrf.mxu0
    %v848 = vadd.f32 0.0, %v847
    %849 = vmatmul.bf16.gmra.mxu0 %v592
    %v850 = vpop.f32.mrf.mxu0
    %v851 = vadd.f32 0.0, %v850
    %v852 = vpop.f32.mrf.mxu0
    %v853 = vadd.f32 0.0, %v852
    %854 = vmatmul.bf16.gmra.mxu0 %v593
    %v855 = vpop.f32.mrf.mxu0
    %v856 = vadd.f32 0.0, %v855
    %v857 = vpop.f32.mrf.mxu0
    %v858 = vadd.f32 0.0, %v857
    %859 = vmatmul.bf16.gmra.mxu0 %v594
    %v860 = vpop.f32.mrf.mxu0
    %v861 = vadd.f32 0.0, %v860
    %v862 = vpop.f32.mrf.mxu0
    %v863 = vadd.f32 0.0, %v862
    %864 = vmatmul.bf16.gmra.mxu0 %v595
    %v865 = vpop.f32.mrf.mxu0
    %v866 = vadd.f32 0.0, %v865
    %v867 = vpop.f32.mrf.mxu0
    %v868 = vadd.f32 0.0, %v867
    %869 = vdwg.mxu0
    %v870 = vld [vmem:[#allocation8] sm:$0xf]
    %v871 = vadd.f32 %v702, %v704
    %v872 = vadd.f32 %v871, %v707
    %v873 = vadd.f32 %v872, %v709
    %v874 = vadd.f32 %v873, %v712
    %v875 = vadd.f32 %v874, %v714
    %v876 = vadd.f32 %v875, %v717
    %v877 = vadd.f32 %v876, %v719
    %v878 = vadd.f32 %v877, %v722
    %v879 = vadd.f32 %v878, %v724
    %v880 = vadd.f32 %v879, %v727
    %v881 = vadd.f32 %v880, %v729
    %v882 = vadd.f32 %v881, %v732
    %v883 = vadd.f32 %v882, %v734
    %v884 = vadd.f32 %v883, %v737
    %v885 = vadd.f32 %v884, %v739
    %v886 = vadd.f32 %v885, %v742
    %v887 = vadd.f32 %v886, %v744
    %v888 = vadd.f32 %v887, %v747
    %v889 = vadd.f32 %v888, %v749
    %v890 = vadd.f32 %v889, %v752
    %v891 = vadd.f32 %v890, %v754
    %v892 = vadd.f32 %v891, %v757
    %v893 = vadd.f32 %v892, %v759
    %v894 = vadd.f32 %v893, %v762
    %v895 = vadd.f32 %v894, %v764
    %v896 = vadd.f32 %v895, %v767
    %v897 = vadd.f32 %v896, %v769
    %v898 = vadd.f32 %v897, %v772
    %v899 = vadd.f32 %v898, %v774
    %v900 = vadd.f32 %v899, %v777
    %v901 = vadd.f32 %v900, %v779
    %v902 = vrot.slane %v901, 4
    %v903 = vadd.f32 %v901, %v902
    %v904 = vrot.slane %v903, 2
    %v905 = vadd.f32 %v903, %v904
    %v906 = vrot.slane %v905, 1
    %v907 = vadd.f32 %v905, %v906
    %v908 = vadd.f32 %v791, %v793
    %v909 = vadd.f32 %v908, %v796
    %v910 = vadd.f32 %v909, %v798
    %v911 = vadd.f32 %v910, %v801
    %v912 = vadd.f32 %v911, %v803
    %v913 = vadd.f32 %v912, %v806
    %v914 = vadd.f32 %v913, %v808
    %v915 = vadd.f32 %v914, %v811
    %v916 = vadd.f32 %v915, %v813
    %v917 = vadd.f32 %v916, %v816
    %v918 = vadd.f32 %v917, %v818
    %v919 = vadd.f32 %v918, %v821
    %v920 = vadd.f32 %v919, %v823
    %v921 = vadd.f32 %v920, %v826
    %v922 = vadd.f32 %v921, %v828
    %v923 = vadd.f32 %v922, %v831
    %v924 = vadd.f32 %v923, %v833
    %v925 = vadd.f32 %v924, %v836
    %v926 = vadd.f32 %v925, %v838
    %v927 = vadd.f32 %v926, %v841
    %v928 = vadd.f32 %v927, %v843
    %v929 = vadd.f32 %v928, %v846
    %v930 = vadd.f32 %v929, %v848
    %v931 = vadd.f32 %v930, %v851
    %v932 = vadd.f32 %v931, %v853
    %v933 = vadd.f32 %v932, %v856
    %v934 = vadd.f32 %v933, %v858
    %v935 = vadd.f32 %v934, %v861
    %v936 = vadd.f32 %v935, %v863
    %v937 = vadd.f32 %v936, %v866
    %v938 = vadd.f32 %v937, %v868
    %v939 = vrot.slane %v938, 4
    %v940 = vadd.f32 %v938, %v939
    %v941 = vrot.slane %v940, 2
    %v942 = vadd.f32 %v940, %v941
    %v943 = vrot.slane %v942, 1
    %v944 = vadd.f32 %v942, %v943
    %v945 = vmul.f32 %v702, %v702
    %v946 = vmul.f32 %v791, %v791
    %v947 = vmul.f32 %v704, %v704
    %v948 = vmul.f32 %v793, %v793
    %v949 = vmul.f32 %v707, %v707
    %v950 = vmul.f32 %v796, %v796
    %v951 = vmul.f32 %v709, %v709
    %v952 = vmul.f32 %v798, %v798
    %v953 = vmul.f32 %v712, %v712
    %v954 = vmul.f32 %v801, %v801
    %v955 = vmul.f32 %v714, %v714
    %v956 = vmul.f32 %v803, %v803
    %v957 = vmul.f32 %v717, %v717
    %v958 = vmul.f32 %v806, %v806
    %v959 = vmul.f32 %v719, %v719
    %v960 = vmul.f32 %v808, %v808
    %v961 = vmul.f32 %v722, %v722
    %v962 = vmul.f32 %v811, %v811
    %v963 = vmul.f32 %v724, %v724
    %v964 = vmul.f32 %v813, %v813
    %v965 = vmul.f32 %v727, %v727
    %v966 = vmul.f32 %v816, %v816
    %v967 = vmul.f32 %v729, %v729
    %v968 = vmul.f32 %v818, %v818
    %v969 = vmul.f32 %v732, %v732
    %v970 = vmul.f32 %v821, %v821
    %v971 = vmul.f32 %v734, %v734
    %v972 = vmul.f32 %v823, %v823
    %v973 = vmul.f32 %v737, %v737
    %v974 = vmul.f32 %v826, %v826
    %v975 = vmul.f32 %v739, %v739
    %v976 = vmul.f32 %v828, %v828
    %v977 = vmul.f32 %v742, %v742
    %v978 = vmul.f32 %v831, %v831
    %v979 = vmul.f32 %v744, %v744
    %v980 = vmul.f32 %v833, %v833
    %v981 = vmul.f32 %v747, %v747
    %v982 = vmul.f32 %v836, %v836
    %v983 = vmul.f32 %v749, %v749
    %v984 = vmul.f32 %v838, %v838
    %v985 = vmul.f32 %v752, %v752
    %v986 = vmul.f32 %v841, %v841
    %v987 = vmul.f32 %v754, %v754
    %v988 = vmul.f32 %v843, %v843
    %v989 = vmul.f32 %v757, %v757
    %v990 = vmul.f32 %v846, %v846
    %v991 = vmul.f32 %v759, %v759
    %v992 = vmul.f32 %v848, %v848
    %v993 = vmul.f32 %v762, %v762
    %v994 = vmul.f32 %v851, %v851
    %v995 = vmul.f32 %v764, %v764
    %v996 = vmul.f32 %v853, %v853
    %v997 = vmul.f32 %v767, %v767
    %v998 = vmul.f32 %v856, %v856
    %v999 = vmul.f32 %v769, %v769
    %v1000 = vmul.f32 %v858, %v858
    %v1001 = vmul.f32 %v772, %v772
    %v1002 = vmul.f32 %v861, %v861
    %v1003 = vmul.f32 %v774, %v774
    %v1004 = vmul.f32 %v863, %v863
    %v1005 = vmul.f32 %v777, %v777
    %v1006 = vmul.f32 %v866, %v866
    %v1007 = vmul.f32 %v779, %v779
    %v1008 = vmul.f32 %v868, %v868
    %v1009 = vadd.f32 %v945, %v947
    %v1010 = vadd.f32 %v1009, %v949
    %v1011 = vadd.f32 %v1010, %v951
    %v1012 = vadd.f32 %v1011, %v953
    %v1013 = vadd.f32 %v1012, %v955
    %v1014 = vadd.f32 %v1013, %v957
    %v1015 = vadd.f32 %v1014, %v959
    %v1016 = vadd.f32 %v1015, %v961
    %v1017 = vadd.f32 %v1016, %v963
    %v1018 = vadd.f32 %v1017, %v965
    %v1019 = vadd.f32 %v1018, %v967
    %v1020 = vadd.f32 %v1019, %v969
    %v1021 = vadd.f32 %v1020, %v971
    %v1022 = vadd.f32 %v1021, %v973
    %v1023 = vadd.f32 %v1022, %v975
    %v1024 = vadd.f32 %v1023, %v977
    %v1025 = vadd.f32 %v1024, %v979
    %v1026 = vadd.f32 %v1025, %v981
    %v1027 = vadd.f32 %v1026, %v983
    %v1028 = vadd.f32 %v1027, %v985
    %v1029 = vadd.f32 %v1028, %v987
    %v1030 = vadd.f32 %v1029, %v989
    %v1031 = vadd.f32 %v1030, %v991
    %v1032 = vadd.f32 %v1031, %v993
    %v1033 = vadd.f32 %v1032, %v995
    %v1034 = vadd.f32 %v1033, %v997
    %v1035 = vadd.f32 %v1034, %v999
    %v1036 = vadd.f32 %v1035, %v1001
    %v1037 = vadd.f32 %v1036, %v1003
    %v1038 = vadd.f32 %v1037, %v1005
    %v1039 = vadd.f32 %v1038, %v1007
    %v1040 = vrot.slane %v1039, 4
    %v1041 = vadd.f32 %v1039, %v1040
    %v1042 = vrot.slane %v1041, 2
    %v1043 = vadd.f32 %v1041, %v1042
    %v1044 = vrot.slane %v1043, 1
    %v1045 = vadd.f32 %v1043, %v1044
    %v1046 = vadd.f32 %v946, %v948
    %v1047 = vadd.f32 %v1046, %v950
    %v1048 = vadd.f32 %v1047, %v952
    %v1049 = vadd.f32 %v1048, %v954
    %v1050 = vadd.f32 %v1049, %v956
    %v1051 = vadd.f32 %v1050, %v958
    %v1052 = vadd.f32 %v1051, %v960
    %v1053 = vadd.f32 %v1052, %v962
    %v1054 = vadd.f32 %v1053, %v964
    %v1055 = vadd.f32 %v1054, %v966
    %v1056 = vadd.f32 %v1055, %v968
    %v1057 = vadd.f32 %v1056, %v970
    %v1058 = vadd.f32 %v1057, %v972
    %v1059 = vadd.f32 %v1058, %v974
    %v1060 = vadd.f32 %v1059, %v976
    %v1061 = vadd.f32 %v1060, %v978
    %v1062 = vadd.f32 %v1061, %v980
    %v1063 = vadd.f32 %v1062, %v982
    %v1064 = vadd.f32 %v1063, %v984
    %v1065 = vadd.f32 %v1064, %v986
    %v1066 = vadd.f32 %v1065, %v988
    %v1067 = vadd.f32 %v1066, %v990
    %v1068 = vadd.f32 %v1067, %v992
    %v1069 = vadd.f32 %v1068, %v994
    %v1070 = vadd.f32 %v1069, %v996
    %v1071 = vadd.f32 %v1070, %v998
    %v1072 = vadd.f32 %v1071, %v1000
    %v1073 = vadd.f32 %v1072, %v1002
    %v1074 = vadd.f32 %v1073, %v1004
    %v1075 = vadd.f32 %v1074, %v1006
    %v1076 = vadd.f32 %v1075, %v1008
    %v1077 = vrot.slane %v1076, 4
    %v1078 = vadd.f32 %v1076, %v1077
    %v1079 = vrot.slane %v1078, 2
    %v1080 = vadd.f32 %v1078, %v1079
    %v1081 = vrot.slane %v1080, 1
    %v1082 = vadd.f32 %v1080, %v1081
    %v1083 = vmul.f32 %v907, 0.00390625
    %v1084 = vmul.f32 %v944, 0.00390625
    %v1085 = vmul.f32 %v1045, 0.00390625
    %v1086 = vmul.f32 %v1082, 0.00390625
    %v1087 = vmul.f32 %v1083, %v1083
    %v1088 = vmul.f32 %v1084, %v1084
    %v1089 = vsub.f32 %v1085, %v1087
    %v1090 = vsub.f32 %v1086, %v1088
    %v1091 = vmax.f32 %v1089, 0.0
    %v1092 = vmax.f32 %v1090, 0.0
    %v1093 = vadd.f32 %v1091, 1e-05
    %v1094 = vadd.f32 %v1092, 1e-05
    %v1095 = vrsqrt.pop %v1093
    %v1096 = vmul.f32 %v1095, %v1093
    %v1097 = vmul.f32 %v1096, %v1095
    %v1098 = vmul.f32 0.5, %v1097
    %v1099 = vsub.f32 1.5, %v1098
    %v1100 = vmul.f32 %v1095, %v1099
    %vm1101 = vweird.f32 %v1093
    %vm1102 = vweird.f32 %v1095
    %vm1103 = vmor %vm1101, %vm1102
    %v1104 = vsel %vm1103, %v1095, %v1100
    %v1105 = vrsqrt.pop %v1094
    %v1106 = vmul.f32 %v1105, %v1094
    %v1107 = vmul.f32 %v1106, %v1105
    %v1108 = vmul.f32 0.5, %v1107
    %v1109 = vsub.f32 1.5, %v1108
    %v1110 = vmul.f32 %v1105, %v1109
    %vm1111 = vweird.f32 %v1094
    %vm1112 = vweird.f32 %v1105
    %vm1113 = vmor %vm1111, %vm1112
    %v1114 = vsel %vm1113, %v1105, %v1110
    %v1117 = vrot.slane %v1114, 6
    %vm1118 = vcmask 1041408
    %v1119 = vsel %vm1118, %v1104, %v1117
    %v1121 = vmul.f32 %v870, %v1119
    %v1123 = vperm.slane %v1121, 0
    %v1124 = vperm.slane %v1121, 2
    %v1127 = vmul.f32 %v1083, %v1123
    %v1128 = vmul.f32 %v1084, %v1124
    %v1131 = vrot.slane %v1128, 6
    %v1132 = vsel %vm1118, %v1127, %v1131
    %v1133 = vrot.slane %v1132, 7
    %v1135 = vsub.f32 %v870, %v1133
    %v1136 = vperm.slane %v1123, 0
    %v1137 = vperm.slane %v1124, 0
    %v1138 = vmul.f32 %v702, %v1136
    %v1139 = vmul.f32 %v791, %v1137
    %v1140 = vmul.f32 %v704, %v1136
    %v1141 = vmul.f32 %v793, %v1137
    %v1142 = vmul.f32 %v707, %v1136
    %v1143 = vmul.f32 %v796, %v1137
    %v1144 = vmul.f32 %v709, %v1136
    %v1145 = vmul.f32 %v798, %v1137
    %v1146 = vmul.f32 %v712, %v1136
    %v1147 = vmul.f32 %v801, %v1137
    %v1148 = vmul.f32 %v714, %v1136
    %v1149 = vmul.f32 %v803, %v1137
    %v1150 = vmul.f32 %v717, %v1136
    %v1151 = vmul.f32 %v806, %v1137
    %v1152 = vmul.f32 %v719, %v1136
    %v1153 = vmul.f32 %v808, %v1137
    %v1154 = vmul.f32 %v722, %v1136
    %v1155 = vmul.f32 %v811, %v1137
    %v1156 = vmul.f32 %v724, %v1136
    %v1157 = vmul.f32 %v813, %v1137
    %v1158 = vmul.f32 %v727, %v1136
    %v1159 = vmul.f32 %v816, %v1137
    %v1160 = vmul.f32 %v729, %v1136
    %v1161 = vmul.f32 %v818, %v1137
    %v1162 = vmul.f32 %v732, %v1136
    %v1163 = vmul.f32 %v821, %v1137
    %v1164 = vmul.f32 %v734, %v1136
    %v1165 = vmul.f32 %v823, %v1137
    %v1166 = vmul.f32 %v737, %v1136
    %v1167 = vmul.f32 %v826, %v1137
    %v1168 = vmul.f32 %v739, %v1136
    %v1169 = vmul.f32 %v828, %v1137
    %v1170 = vmul.f32 %v742, %v1136
    %v1171 = vmul.f32 %v831, %v1137
    %v1172 = vmul.f32 %v744, %v1136
    %v1173 = vmul.f32 %v833, %v1137
    %v1174 = vmul.f32 %v747, %v1136
    %v1175 = vmul.f32 %v836, %v1137
    %v1176 = vmul.f32 %v749, %v1136
    %v1177 = vmul.f32 %v838, %v1137
    %v1178 = vmul.f32 %v752, %v1136
    %v1179 = vmul.f32 %v841, %v1137
    %v1180 = vmul.f32 %v754, %v1136
    %v1181 = vmul.f32 %v843, %v1137
    %v1182 = vmul.f32 %v757, %v1136
    %v1183 = vmul.f32 %v846, %v1137
    %v1184 = vmul.f32 %v759, %v1136
    %v1185 = vmul.f32 %v848, %v1137
    %v1186 = vmul.f32 %v762, %v1136
    %v1187 = vmul.f32 %v851, %v1137
    %v1188 = vmul.f32 %v764, %v1136
    %v1189 = vmul.f32 %v853, %v1137
    %v1190 = vmul.f32 %v767, %v1136
    %v1191 = vmul.f32 %v856, %v1137
    %v1192 = vmul.f32 %v769, %v1136
    %v1193 = vmul.f32 %v858, %v1137
    %v1194 = vmul.f32 %v772, %v1136
    %v1195 = vmul.f32 %v861, %v1137
    %v1196 = vmul.f32 %v774, %v1136
    %v1197 = vmul.f32 %v863, %v1137
    %v1198 = vmul.f32 %v777, %v1136
    %v1199 = vmul.f32 %v866, %v1137
    %v1200 = vmul.f32 %v779, %v1136
    %v1201 = vmul.f32 %v868, %v1137
    %v1203 = vperm.slane %v1135, 1
    %v1204 = vperm.slane %v1135, 3
    %v1207 = vperm.slane %v1203, 1
    %v1208 = vperm.slane %v1204, 1
    %v1209 = vadd.f32 %v1138, %v1207
    %v1210 = vadd.f32 %v1139, %v1208
    %v1211 = vadd.f32 %v1140, %v1207
    %v1212 = vadd.f32 %v1141, %v1208
    %v1213 = vadd.f32 %v1142, %v1207
    %v1214 = vadd.f32 %v1143, %v1208
    %v1215 = vadd.f32 %v1144, %v1207
    %v1216 = vadd.f32 %v1145, %v1208
    %v1217 = vadd.f32 %v1146, %v1207
    %v1218 = vadd.f32 %v1147, %v1208
    %v1219 = vadd.f32 %v1148, %v1207
    %v1220 = vadd.f32 %v1149, %v1208
    %v1221 = vadd.f32 %v1150, %v1207
    %v1222 = vadd.f32 %v1151, %v1208
    %v1223 = vadd.f32 %v1152, %v1207
    %v1224 = vadd.f32 %v1153, %v1208
    %v1225 = vadd.f32 %v1154, %v1207
    %v1226 = vadd.f32 %v1155, %v1208
    %v1227 = vadd.f32 %v1156, %v1207
    %v1228 = vadd.f32 %v1157, %v1208
    %v1229 = vadd.f32 %v1158, %v1207
    %v1230 = vadd.f32 %v1159, %v1208
    %v1231 = vadd.f32 %v1160, %v1207
    %v1232 = vadd.f32 %v1161, %v1208
    %v1233 = vadd.f32 %v1162, %v1207
    %v1234 = vadd.f32 %v1163, %v1208
    %v1235 = vadd.f32 %v1164, %v1207
    %v1236 = vadd.f32 %v1165, %v1208
    %v1237 = vadd.f32 %v1166, %v1207
    %v1238 = vadd.f32 %v1167, %v1208
    %v1239 = vadd.f32 %v1168, %v1207
    %v1240 = vadd.f32 %v1169, %v1208
    %v1241 = vadd.f32 %v1170, %v1207
    %v1242 = vadd.f32 %v1171, %v1208
    %v1243 = vadd.f32 %v1172, %v1207
    %v1244 = vadd.f32 %v1173, %v1208
    %v1245 = vadd.f32 %v1174, %v1207
    %v1246 = vadd.f32 %v1175, %v1208
    %v1247 = vadd.f32 %v1176, %v1207
    %v1248 = vadd.f32 %v1177, %v1208
    %v1249 = vadd.f32 %v1178, %v1207
    %v1250 = vadd.f32 %v1179, %v1208
    %v1251 = vadd.f32 %v1180, %v1207
    %v1252 = vadd.f32 %v1181, %v1208
    %v1253 = vadd.f32 %v1182, %v1207
    %v1254 = vadd.f32 %v1183, %v1208
    %v1255 = vadd.f32 %v1184, %v1207
    %v1256 = vadd.f32 %v1185, %v1208
    %v1257 = vadd.f32 %v1186, %v1207
    %v1258 = vadd.f32 %v1187, %v1208
    %v1259 = vadd.f32 %v1188, %v1207
    %v1260 = vadd.f32 %v1189, %v1208
    %v1261 = vadd.f32 %v1190, %v1207
    %v1262 = vadd.f32 %v1191, %v1208
    %v1263 = vadd.f32 %v1192, %v1207
    %v1264 = vadd.f32 %v1193, %v1208
    %v1265 = vadd.f32 %v1194, %v1207
    %v1266 = vadd.f32 %v1195, %v1208
    %v1267 = vadd.f32 %v1196, %v1207
    %v1268 = vadd.f32 %v1197, %v1208
    %v1269 = vadd.f32 %v1198, %v1207
    %v1270 = vadd.f32 %v1199, %v1208
    %v1271 = vadd.f32 %v1200, %v1207
    %v1272 = vadd.f32 %v1201, %v1208
    %v1273 = vmax.f32 %v1209, 0.0
    %v1274 = vmax.f32 %v1210, 0.0
    %v1275 = vmax.f32 %v1211, 0.0
    %v1276 = vmax.f32 %v1212, 0.0
    %v1277 = vmax.f32 %v1213, 0.0
    %v1278 = vmax.f32 %v1214, 0.0
    %v1279 = vmax.f32 %v1215, 0.0
    %v1280 = vmax.f32 %v1216, 0.0
    %v1281 = vmax.f32 %v1217, 0.0
    %v1282 = vmax.f32 %v1218, 0.0
    %v1283 = vmax.f32 %v1219, 0.0
    %v1284 = vmax.f32 %v1220, 0.0
    %v1285 = vmax.f32 %v1221, 0.0
    %v1286 = vmax.f32 %v1222, 0.0
    %v1287 = vmax.f32 %v1223, 0.0
    %v1288 = vmax.f32 %v1224, 0.0
    %v1289 = vmax.f32 %v1225, 0.0
    %v1290 = vmax.f32 %v1226, 0.0
    %v1291 = vmax.f32 %v1227, 0.0
    %v1292 = vmax.f32 %v1228, 0.0
    %v1293 = vmax.f32 %v1229, 0.0
    %v1294 = vmax.f32 %v1230, 0.0
    %v1295 = vmax.f32 %v1231, 0.0
    %v1296 = vmax.f32 %v1232, 0.0
    %v1297 = vmax.f32 %v1233, 0.0
    %v1298 = vmax.f32 %v1234, 0.0
    %v1299 = vmax.f32 %v1235, 0.0
    %v1300 = vmax.f32 %v1236, 0.0
    %v1301 = vmax.f32 %v1237, 0.0
    %v1302 = vmax.f32 %v1238, 0.0
    %v1303 = vmax.f32 %v1239, 0.0
    %v1304 = vmax.f32 %v1240, 0.0
    %v1305 = vmax.f32 %v1241, 0.0
    %v1306 = vmax.f32 %v1242, 0.0
    %v1307 = vmax.f32 %v1243, 0.0
    %v1308 = vmax.f32 %v1244, 0.0
    %v1309 = vmax.f32 %v1245, 0.0
    %v1310 = vmax.f32 %v1246, 0.0
    %v1311 = vmax.f32 %v1247, 0.0
    %v1312 = vmax.f32 %v1248, 0.0
    %v1313 = vmax.f32 %v1249, 0.0
    %v1314 = vmax.f32 %v1250, 0.0
    %v1315 = vmax.f32 %v1251, 0.0
    %v1316 = vmax.f32 %v1252, 0.0
    %v1317 = vmax.f32 %v1253, 0.0
    %v1318 = vmax.f32 %v1254, 0.0
    %v1319 = vmax.f32 %v1255, 0.0
    %v1320 = vmax.f32 %v1256, 0.0
    %v1321 = vmax.f32 %v1257, 0.0
    %v1322 = vmax.f32 %v1258, 0.0
    %v1323 = vmax.f32 %v1259, 0.0
    %v1324 = vmax.f32 %v1260, 0.0
    %v1325 = vmax.f32 %v1261, 0.0
    %v1326 = vmax.f32 %v1262, 0.0
    %v1327 = vmax.f32 %v1263, 0.0
    %v1328 = vmax.f32 %v1264, 0.0
    %v1329 = vmax.f32 %v1265, 0.0
    %v1330 = vmax.f32 %v1266, 0.0
    %v1331 = vmax.f32 %v1267, 0.0
    %v1332 = vmax.f32 %v1268, 0.0
    %v1333 = vmax.f32 %v1269, 0.0
    %v1334 = vmax.f32 %v1270, 0.0
    %v1335 = vmax.f32 %v1271, 0.0
    %v1336 = vmax.f32 %v1272, 0.0
    %v1337 = vpack.c.bf16 %v1275, %v1273
    %v1338 = vpack.c.bf16 %v1276, %v1274
    %v1339 = vpack.c.bf16 %v1279, %v1277
    %v1340 = vpack.c.bf16 %v1280, %v1278
    %v1341 = vpack.c.bf16 %v1283, %v1281
    %v1342 = vpack.c.bf16 %v1284, %v1282
    %v1343 = vpack.c.bf16 %v1287, %v1285
    %v1344 = vpack.c.bf16 %v1288, %v1286
    %v1345 = vpack.c.bf16 %v1291, %v1289
    %v1346 = vpack.c.bf16 %v1292, %v1290
    %v1347 = vpack.c.bf16 %v1295, %v1293
    %v1348 = vpack.c.bf16 %v1296, %v1294
    %v1349 = vpack.c.bf16 %v1299, %v1297
    %v1350 = vpack.c.bf16 %v1300, %v1298
    %v1351 = vpack.c.bf16 %v1303, %v1301
    %v1352 = vpack.c.bf16 %v1304, %v1302
    %v1353 = vpack.c.bf16 %v1307, %v1305
    %v1354 = vpack.c.bf16 %v1308, %v1306
    %v1355 = vpack.c.bf16 %v1311, %v1309
    %v1356 = vpack.c.bf16 %v1312, %v1310
    %v1357 = vpack.c.bf16 %v1315, %v1313
    %v1358 = vpack.c.bf16 %v1316, %v1314
    %v1359 = vpack.c.bf16 %v1319, %v1317
    %v1360 = vpack.c.bf16 %v1320, %v1318
    %v1361 = vpack.c.bf16 %v1323, %v1321
    %v1362 = vpack.c.bf16 %v1324, %v1322
    %v1363 = vpack.c.bf16 %v1327, %v1325
    %v1364 = vpack.c.bf16 %v1328, %v1326
    %v1365 = vpack.c.bf16 %v1331, %v1329
    %v1366 = vpack.c.bf16 %v1332, %v1330
    %v1367 = vpack.c.bf16 %v1335, %v1333
    %v1368 = vpack.c.bf16 %v1336, %v1334
    %v1369 = vld [vmem:[%s5] sm:$0xff]
    %v1370 = vld [vmem:[%s5 + $0x8] sm:$0xff]
    %v1371 = vld [vmem:[%s5 + $0x10] sm:$0xff]
    %v1372 = vld [vmem:[%s5 + $0x18] sm:$0xff]
    %v1373 = vld [vmem:[%s5 + $0x20] sm:$0xff]
    %v1374 = vld [vmem:[%s5 + $0x28] sm:$0xff]
    %v1375 = vld [vmem:[%s5 + $0x30] sm:$0xff]
    %v1376 = vld [vmem:[%s5 + $0x38] sm:$0xff]
    %v1377 = vld [vmem:[%s5 + $0x40] sm:$0xff]
    %v1378 = vld [vmem:[%s5 + $0x48] sm:$0xff]
    %v1379 = vld [vmem:[%s5 + $0x50] sm:$0xff]
    %v1380 = vld [vmem:[%s5 + $0x58] sm:$0xff]
    %v1381 = vld [vmem:[%s5 + $0x60] sm:$0xff]
    %v1382 = vld [vmem:[%s5 + $0x68] sm:$0xff]
    %v1383 = vld [vmem:[%s5 + $0x70] sm:$0xff]
    %v1384 = vld [vmem:[%s5 + $0x78] sm:$0xff]
    %v1385 = vld [vmem:[%s5 + $0x80] sm:$0xff]
    %v1386 = vld [vmem:[%s5 + $0x88] sm:$0xff]
    %v1387 = vld [vmem:[%s5 + $0x90] sm:$0xff]
    %v1388 = vld [vmem:[%s5 + $0x98] sm:$0xff]
    %v1389 = vld [vmem:[%s5 + $0xa0] sm:$0xff]
    %v1390 = vld [vmem:[%s5 + $0xa8] sm:$0xff]
    %v1391 = vld [vmem:[%s5 + $0xb0] sm:$0xff]
    %v1392 = vld [vmem:[%s5 + $0xb8] sm:$0xff]
    %v1393 = vld [vmem:[%s5 + $0xc0] sm:$0xff]
    %v1394 = vld [vmem:[%s5 + $0xc8] sm:$0xff]
    %v1395 = vld [vmem:[%s5 + $0xd0] sm:$0xff]
    %v1396 = vld [vmem:[%s5 + $0xd8] sm:$0xff]
    %v1397 = vld [vmem:[%s5 + $0xe0] sm:$0xff]
    %v1398 = vld [vmem:[%s5 + $0xe8] sm:$0xff]
    %v1399 = vld [vmem:[%s5 + $0xf0] sm:$0xff]
    %v1400 = vld [vmem:[%s5 + $0xf8] sm:$0xff]
    %v1401 = vld [vmem:[%s5 + $0x100] sm:$0xff]
    %v1402 = vld [vmem:[%s5 + $0x108] sm:$0xff]
    %v1403 = vld [vmem:[%s5 + $0x110] sm:$0xff]
    %v1404 = vld [vmem:[%s5 + $0x118] sm:$0xff]
    %v1405 = vld [vmem:[%s5 + $0x120] sm:$0xff]
    %v1406 = vld [vmem:[%s5 + $0x128] sm:$0xff]
    %v1407 = vld [vmem:[%s5 + $0x130] sm:$0xff]
    %v1408 = vld [vmem:[%s5 + $0x138] sm:$0xff]
    %v1409 = vld [vmem:[%s5 + $0x140] sm:$0xff]
    %v1410 = vld [vmem:[%s5 + $0x148] sm:$0xff]
    %v1411 = vld [vmem:[%s5 + $0x150] sm:$0xff]
    %v1412 = vld [vmem:[%s5 + $0x158] sm:$0xff]
    %v1413 = vld [vmem:[%s5 + $0x160] sm:$0xff]
    %v1414 = vld [vmem:[%s5 + $0x168] sm:$0xff]
    %v1415 = vld [vmem:[%s5 + $0x170] sm:$0xff]
    %v1416 = vld [vmem:[%s5 + $0x178] sm:$0xff]
    %v1417 = vld [vmem:[%s5 + $0x180] sm:$0xff]
    %v1418 = vld [vmem:[%s5 + $0x188] sm:$0xff]
    %v1419 = vld [vmem:[%s5 + $0x190] sm:$0xff]
    %v1420 = vld [vmem:[%s5 + $0x198] sm:$0xff]
    %v1421 = vld [vmem:[%s5 + $0x1a0] sm:$0xff]
    %v1422 = vld [vmem:[%s5 + $0x1a8] sm:$0xff]
    %v1423 = vld [vmem:[%s5 + $0x1b0] sm:$0xff]
    %v1424 = vld [vmem:[%s5 + $0x1b8] sm:$0xff]
    %v1425 = vld [vmem:[%s5 + $0x1c0] sm:$0xff]
    %v1426 = vld [vmem:[%s5 + $0x1c8] sm:$0xff]
    %v1427 = vld [vmem:[%s5 + $0x1d0] sm:$0xff]
    %v1428 = vld [vmem:[%s5 + $0x1d8] sm:$0xff]
    %v1429 = vld [vmem:[%s5 + $0x1e0] sm:$0xff]
    %v1430 = vld [vmem:[%s5 + $0x1e8] sm:$0xff]
    %v1431 = vld [vmem:[%s5 + $0x1f0] sm:$0xff]
    %v1432 = vld [vmem:[%s5 + $0x1f8] sm:$0xff]
    %v1497 = vunpack.c.l.b16 %v1369
    %v1498 = vunpack.c.h.b16 %v1369
    %v1499 = vunpack.c.l.b16 %v1370
    %v1500 = vunpack.c.h.b16 %v1370
    %v1501 = vunpack.c.l.b16 %v1371
    %v1502 = vunpack.c.h.b16 %v1371
    %v1503 = vunpack.c.l.b16 %v1372
    %v1504 = vunpack.c.h.b16 %v1372
    %v1505 = vunpack.c.l.b16 %v1373
    %v1506 = vunpack.c.h.b16 %v1373
    %v1507 = vunpack.c.l.b16 %v1374
    %v1508 = vunpack.c.h.b16 %v1374
    %v1509 = vunpack.c.l.b16 %v1375
    %v1510 = vunpack.c.h.b16 %v1375
    %v1511 = vunpack.c.l.b16 %v1376
    %v1512 = vunpack.c.h.b16 %v1376
    %v1513 = vunpack.c.l.b16 %v1377
    %v1514 = vunpack.c.h.b16 %v1377
    %v1515 = vunpack.c.l.b16 %v1378
    %v1516 = vunpack.c.h.b16 %v1378
    %v1517 = vunpack.c.l.b16 %v1379
    %v1518 = vunpack.c.h.b16 %v1379
    %v1519 = vunpack.c.l.b16 %v1380
    %v1520 = vunpack.c.h.b16 %v1380
    %v1521 = vunpack.c.l.b16 %v1381
    %v1522 = vunpack.c.h.b16 %v1381
    %v1523 = vunpack.c.l.b16 %v1382
    %v1524 = vunpack.c.h.b16 %v1382
    %v1525 = vunpack.c.l.b16 %v1383
    %v1526 = vunpack.c.h.b16 %v1383
    %v1527 = vunpack.c.l.b16 %v1384
    %v1528 = vunpack.c.h.b16 %v1384
    %v1529 = vunpack.c.l.b16 %v1385
    %v1530 = vunpack.c.h.b16 %v1385
    %v1531 = vunpack.c.l.b16 %v1386
    %v1532 = vunpack.c.h.b16 %v1386
    %v1533 = vunpack.c.l.b16 %v1387
    %v1534 = vunpack.c.h.b16 %v1387
    %v1535 = vunpack.c.l.b16 %v1388
    %v1536 = vunpack.c.h.b16 %v1388
    %v1537 = vunpack.c.l.b16 %v1389
    %v1538 = vunpack.c.h.b16 %v1389
    %v1539 = vunpack.c.l.b16 %v1390
    %v1540 = vunpack.c.h.b16 %v1390
    %v1541 = vunpack.c.l.b16 %v1391
    %v1542 = vunpack.c.h.b16 %v1391
    %v1543 = vunpack.c.l.b16 %v1392
    %v1544 = vunpack.c.h.b16 %v1392
    %v1545 = vunpack.c.l.b16 %v1393
    %v1546 = vunpack.c.h.b16 %v1393
    %v1547 = vunpack.c.l.b16 %v1394
    %v1548 = vunpack.c.h.b16 %v1394
    %v1549 = vunpack.c.l.b16 %v1395
    %v1550 = vunpack.c.h.b16 %v1395
    %v1551 = vunpack.c.l.b16 %v1396
    %v1552 = vunpack.c.h.b16 %v1396
    %v1553 = vunpack.c.l.b16 %v1397
    %v1554 = vunpack.c.h.b16 %v1397
    %v1555 = vunpack.c.l.b16 %v1398
    %v1556 = vunpack.c.h.b16 %v1398
    %v1557 = vunpack.c.l.b16 %v1399
    %v1558 = vunpack.c.h.b16 %v1399
    %v1559 = vunpack.c.l.b16 %v1400
    %v1560 = vunpack.c.h.b16 %v1400
    %v1561 = vunpack.c.l.b16 %v1401
    %v1562 = vunpack.c.h.b16 %v1401
    %v1563 = vunpack.c.l.b16 %v1402
    %v1564 = vunpack.c.h.b16 %v1402
    %v1565 = vunpack.c.l.b16 %v1403
    %v1566 = vunpack.c.h.b16 %v1403
    %v1567 = vunpack.c.l.b16 %v1404
    %v1568 = vunpack.c.h.b16 %v1404
    %v1569 = vunpack.c.l.b16 %v1405
    %v1570 = vunpack.c.h.b16 %v1405
    %v1571 = vunpack.c.l.b16 %v1406
    %v1572 = vunpack.c.h.b16 %v1406
    %v1573 = vunpack.c.l.b16 %v1407
    %v1574 = vunpack.c.h.b16 %v1407
    %v1575 = vunpack.c.l.b16 %v1408
    %v1576 = vunpack.c.h.b16 %v1408
    %v1577 = vunpack.c.l.b16 %v1409
    %v1578 = vunpack.c.h.b16 %v1409
    %v1579 = vunpack.c.l.b16 %v1410
    %v1580 = vunpack.c.h.b16 %v1410
    %v1581 = vunpack.c.l.b16 %v1411
    %v1582 = vunpack.c.h.b16 %v1411
    %v1583 = vunpack.c.l.b16 %v1412
    %v1584 = vunpack.c.h.b16 %v1412
    %v1585 = vunpack.c.l.b16 %v1413
    %v1586 = vunpack.c.h.b16 %v1413
    %v1587 = vunpack.c.l.b16 %v1414
    %v1588 = vunpack.c.h.b16 %v1414
    %v1589 = vunpack.c.l.b16 %v1415
    %v1590 = vunpack.c.h.b16 %v1415
    %v1591 = vunpack.c.l.b16 %v1416
    %v1592 = vunpack.c.h.b16 %v1416
    %v1593 = vunpack.c.l.b16 %v1417
    %v1594 = vunpack.c.h.b16 %v1417
    %v1595 = vunpack.c.l.b16 %v1418
    %v1596 = vunpack.c.h.b16 %v1418
    %v1597 = vunpack.c.l.b16 %v1419
    %v1598 = vunpack.c.h.b16 %v1419
    %v1599 = vunpack.c.l.b16 %v1420
    %v1600 = vunpack.c.h.b16 %v1420
    %v1601 = vunpack.c.l.b16 %v1421
    %v1602 = vunpack.c.h.b16 %v1421
    %v1603 = vunpack.c.l.b16 %v1422
    %v1604 = vunpack.c.h.b16 %v1422
    %v1605 = vunpack.c.l.b16 %v1423
    %v1606 = vunpack.c.h.b16 %v1423
    %v1607 = vunpack.c.l.b16 %v1424
    %v1608 = vunpack.c.h.b16 %v1424
    %v1609 = vunpack.c.l.b16 %v1425
    %v1610 = vunpack.c.h.b16 %v1425
    %v1611 = vunpack.c.l.b16 %v1426
    %v1612 = vunpack.c.h.b16 %v1426
    %v1613 = vunpack.c.l.b16 %v1427
    %v1614 = vunpack.c.h.b16 %v1427
    %v1615 = vunpack.c.l.b16 %v1428
    %v1616 = vunpack.c.h.b16 %v1428
    %v1617 = vunpack.c.l.b16 %v1429
    %v1618 = vunpack.c.h.b16 %v1429
    %v1619 = vunpack.c.l.b16 %v1430
    %v1620 = vunpack.c.h.b16 %v1430
    %v1621 = vunpack.c.l.b16 %v1431
    %v1622 = vunpack.c.h.b16 %v1431
    %v1623 = vunpack.c.l.b16 %v1432
    %v1624 = vunpack.c.h.b16 %v1432
    %v1625 = vpack.c.b16 %v1501, %v1497
    %v1626 = vpack.c.b16 %v1502, %v1498
    %v1627 = vpack.c.b16 %v1503, %v1499
    %v1628 = vpack.c.b16 %v1504, %v1500
    %v1629 = vpack.c.b16 %v1509, %v1505
    %v1630 = vpack.c.b16 %v1510, %v1506
    %v1631 = vpack.c.b16 %v1511, %v1507
    %v1632 = vpack.c.b16 %v1512, %v1508
    %v1633 = vpack.c.b16 %v1517, %v1513
    %v1634 = vpack.c.b16 %v1518, %v1514
    %v1635 = vpack.c.b16 %v1519, %v1515
    %v1636 = vpack.c.b16 %v1520, %v1516
    %v1637 = vpack.c.b16 %v1525, %v1521
    %v1638 = vpack.c.b16 %v1526, %v1522
    %v1639 = vpack.c.b16 %v1527, %v1523
    %v1640 = vpack.c.b16 %v1528, %v1524
    %v1641 = vpack.c.b16 %v1533, %v1529
    %v1642 = vpack.c.b16 %v1534, %v1530
    %v1643 = vpack.c.b16 %v1535, %v1531
    %v1644 = vpack.c.b16 %v1536, %v1532
    %v1645 = vpack.c.b16 %v1541, %v1537
    %v1646 = vpack.c.b16 %v1542, %v1538
    %v1647 = vpack.c.b16 %v1543, %v1539
    %v1648 = vpack.c.b16 %v1544, %v1540
    %v1649 = vpack.c.b16 %v1549, %v1545
    %v1650 = vpack.c.b16 %v1550, %v1546
    %v1651 = vpack.c.b16 %v1551, %v1547
    %v1652 = vpack.c.b16 %v1552, %v1548
    %v1653 = vpack.c.b16 %v1557, %v1553
    %v1654 = vpack.c.b16 %v1558, %v1554
    %v1655 = vpack.c.b16 %v1559, %v1555
    %v1656 = vpack.c.b16 %v1560, %v1556
    %v1657 = vpack.c.b16 %v1565, %v1561
    %v1658 = vpack.c.b16 %v1566, %v1562
    %v1659 = vpack.c.b16 %v1567, %v1563
    %v1660 = vpack.c.b16 %v1568, %v1564
    %v1661 = vpack.c.b16 %v1573, %v1569
    %v1662 = vpack.c.b16 %v1574, %v1570
    %v1663 = vpack.c.b16 %v1575, %v1571
    %v1664 = vpack.c.b16 %v1576, %v1572
    %v1665 = vpack.c.b16 %v1581, %v1577
    %v1666 = vpack.c.b16 %v1582, %v1578
    %v1667 = vpack.c.b16 %v1583, %v1579
    %v1668 = vpack.c.b16 %v1584, %v1580
    %v1669 = vpack.c.b16 %v1589, %v1585
    %v1670 = vpack.c.b16 %v1590, %v1586
    %v1671 = vpack.c.b16 %v1591, %v1587
    %v1672 = vpack.c.b16 %v1592, %v1588
    %v1673 = vpack.c.b16 %v1597, %v1593
    %v1674 = vpack.c.b16 %v1598, %v1594
    %v1675 = vpack.c.b16 %v1599, %v1595
    %v1676 = vpack.c.b16 %v1600, %v1596
    %v1677 = vpack.c.b16 %v1605, %v1601
    %v1678 = vpack.c.b16 %v1606, %v1602
    %v1679 = vpack.c.b16 %v1607, %v1603
    %v1680 = vpack.c.b16 %v1608, %v1604
    %v1681 = vpack.c.b16 %v1613, %v1609
    %v1682 = vpack.c.b16 %v1614, %v1610
    %v1683 = vpack.c.b16 %v1615, %v1611
    %v1684 = vpack.c.b16 %v1616, %v1612
    %v1685 = vpack.c.b16 %v1621, %v1617
    %v1686 = vpack.c.b16 %v1622, %v1618
    %v1687 = vpack.c.b16 %v1623, %v1619
    %v1688 = vpack.c.b16 %v1624, %v1620
    %1753 = vmatpush.bf16.msra.mxu0 %v1653
    %1754 = vmatpush.bf16.msra.mxu0 %v1649
    %1755 = vmatpush.bf16.msra.mxu0 %v1645
    %1756 = vmatpush.bf16.msra.mxu0 %v1641
    %1757 = vmatpush.bf16.msra.mxu0 %v1637
    %1758 = vmatpush.bf16.msra.mxu0 %v1633
    %1759 = vmatpush.bf16.msra.mxu0 %v1629
    %1760 = vmatpush.bf16.msra.mxu0 %v1625
    %1761 = vmatmul.bf16.gmra.mxu0 %v1337
    %v1762 = vpop.f32.mrf.mxu0
    %v1763 = vadd.f32 0.0, %v1762
    %v1764 = vpop.f32.mrf.mxu0
    %v1765 = vadd.f32 0.0, %v1764
    %1766 = vmatmul.bf16.gmra.mxu0 %v1339
    %v1767 = vpop.f32.mrf.mxu0
    %v1768 = vadd.f32 0.0, %v1767
    %v1769 = vpop.f32.mrf.mxu0
    %v1770 = vadd.f32 0.0, %v1769
    %1771 = vmatmul.bf16.gmra.mxu0 %v1341
    %v1772 = vpop.f32.mrf.mxu0
    %v1773 = vadd.f32 0.0, %v1772
    %v1774 = vpop.f32.mrf.mxu0
    %v1775 = vadd.f32 0.0, %v1774
    %1776 = vmatmul.bf16.gmra.mxu0 %v1343
    %v1777 = vpop.f32.mrf.mxu0
    %v1778 = vadd.f32 0.0, %v1777
    %v1779 = vpop.f32.mrf.mxu0
    %v1780 = vadd.f32 0.0, %v1779
    %1781 = vmatmul.bf16.gmra.mxu0 %v1345
    %v1782 = vpop.f32.mrf.mxu0
    %v1783 = vadd.f32 0.0, %v1782
    %v1784 = vpop.f32.mrf.mxu0
    %v1785 = vadd.f32 0.0, %v1784
    %1786 = vmatmul.bf16.gmra.mxu0 %v1347
    %v1787 = vpop.f32.mrf.mxu0
    %v1788 = vadd.f32 0.0, %v1787
    %v1789 = vpop.f32.mrf.mxu0
    %v1790 = vadd.f32 0.0, %v1789
    %1791 = vmatmul.bf16.gmra.mxu0 %v1349
    %v1792 = vpop.f32.mrf.mxu0
    %v1793 = vadd.f32 0.0, %v1792
    %v1794 = vpop.f32.mrf.mxu0
    %v1795 = vadd.f32 0.0, %v1794
    %1796 = vmatmul.bf16.gmra.mxu0 %v1351
    %v1797 = vpop.f32.mrf.mxu0
    %v1798 = vadd.f32 0.0, %v1797
    %v1799 = vpop.f32.mrf.mxu0
    %v1800 = vadd.f32 0.0, %v1799
    %1801 = vmatmul.bf16.gmra.mxu0 %v1353
    %v1802 = vpop.f32.mrf.mxu0
    %v1803 = vadd.f32 0.0, %v1802
    %v1804 = vpop.f32.mrf.mxu0
    %v1805 = vadd.f32 0.0, %v1804
    %1806 = vmatmul.bf16.gmra.mxu0 %v1355
    %v1807 = vpop.f32.mrf.mxu0
    %v1808 = vadd.f32 0.0, %v1807
    %v1809 = vpop.f32.mrf.mxu0
    %v1810 = vadd.f32 0.0, %v1809
    %1811 = vmatmul.bf16.gmra.mxu0 %v1357
    %v1812 = vpop.f32.mrf.mxu0
    %v1813 = vadd.f32 0.0, %v1812
    %v1814 = vpop.f32.mrf.mxu0
    %v1815 = vadd.f32 0.0, %v1814
    %1816 = vmatmul.bf16.gmra.mxu0 %v1359
    %v1817 = vpop.f32.mrf.mxu0
    %v1818 = vadd.f32 0.0, %v1817
    %v1819 = vpop.f32.mrf.mxu0
    %v1820 = vadd.f32 0.0, %v1819
    %1821 = vmatmul.bf16.gmra.mxu0 %v1361
    %v1822 = vpop.f32.mrf.mxu0
    %v1823 = vadd.f32 0.0, %v1822
    %v1824 = vpop.f32.mrf.mxu0
    %v1825 = vadd.f32 0.0, %v1824
    %1826 = vmatmul.bf16.gmra.mxu0 %v1363
    %v1827 = vpop.f32.mrf.mxu0
    %v1828 = vadd.f32 0.0, %v1827
    %v1829 = vpop.f32.mrf.mxu0
    %v1830 = vadd.f32 0.0, %v1829
    %1831 = vmatmul.bf16.gmra.mxu0 %v1365
    %v1832 = vpop.f32.mrf.mxu0
    %v1833 = vadd.f32 0.0, %v1832
    %v1834 = vpop.f32.mrf.mxu0
    %v1835 = vadd.f32 0.0, %v1834
    %1836 = vmatmul.bf16.gmra.mxu0 %v1367
    %v1837 = vpop.f32.mrf.mxu0
    %v1838 = vadd.f32 0.0, %v1837
    %v1839 = vpop.f32.mrf.mxu0
    %v1840 = vadd.f32 0.0, %v1839
    %1841 = vdwg.mxu0
    %1842 = vmatpush.bf16.msra.mxu0 %v1685
    %1843 = vmatpush.bf16.msra.mxu0 %v1681
    %1844 = vmatpush.bf16.msra.mxu0 %v1677
    %1845 = vmatpush.bf16.msra.mxu0 %v1673
    %1846 = vmatpush.bf16.msra.mxu0 %v1669
    %1847 = vmatpush.bf16.msra.mxu0 %v1665
    %1848 = vmatpush.bf16.msra.mxu0 %v1661
    %1849 = vmatpush.bf16.msra.mxu0 %v1657
    %1850 = vmatmul.bf16.gmra.mxu0 %v1338
    %v1851 = vpop.f32.mrf.mxu0
    %v1852 = vadd.f32 %v1763, %v1851
    %v1853 = vpop.f32.mrf.mxu0
    %v1854 = vadd.f32 %v1765, %v1853
    %1855 = vmatmul.bf16.gmra.mxu0 %v1340
    %v1856 = vpop.f32.mrf.mxu0
    %v1857 = vadd.f32 %v1768, %v1856
    %v1858 = vpop.f32.mrf.mxu0
    %v1859 = vadd.f32 %v1770, %v1858
    %1860 = vmatmul.bf16.gmra.mxu0 %v1342
    %v1861 = vpop.f32.mrf.mxu0
    %v1862 = vadd.f32 %v1773, %v1861
    %v1863 = vpop.f32.mrf.mxu0
    %v1864 = vadd.f32 %v1775, %v1863
    %1865 = vmatmul.bf16.gmra.mxu0 %v1344
    %v1866 = vpop.f32.mrf.mxu0
    %v1867 = vadd.f32 %v1778, %v1866
    %v1868 = vpop.f32.mrf.mxu0
    %v1869 = vadd.f32 %v1780, %v1868
    %1870 = vmatmul.bf16.gmra.mxu0 %v1346
    %v1871 = vpop.f32.mrf.mxu0
    %v1872 = vadd.f32 %v1783, %v1871
    %v1873 = vpop.f32.mrf.mxu0
    %v1874 = vadd.f32 %v1785, %v1873
    %1875 = vmatmul.bf16.gmra.mxu0 %v1348
    %v1876 = vpop.f32.mrf.mxu0
    %v1877 = vadd.f32 %v1788, %v1876
    %v1878 = vpop.f32.mrf.mxu0
    %v1879 = vadd.f32 %v1790, %v1878
    %1880 = vmatmul.bf16.gmra.mxu0 %v1350
    %v1881 = vpop.f32.mrf.mxu0
    %v1882 = vadd.f32 %v1793, %v1881
    %v1883 = vpop.f32.mrf.mxu0
    %v1884 = vadd.f32 %v1795, %v1883
    %1885 = vmatmul.bf16.gmra.mxu0 %v1352
    %v1886 = vpop.f32.mrf.mxu0
    %v1887 = vadd.f32 %v1798, %v1886
    %v1888 = vpop.f32.mrf.mxu0
    %v1889 = vadd.f32 %v1800, %v1888
    %1890 = vmatmul.bf16.gmra.mxu0 %v1354
    %v1891 = vpop.f32.mrf.mxu0
    %v1892 = vadd.f32 %v1803, %v1891
    %v1893 = vpop.f32.mrf.mxu0
    %v1894 = vadd.f32 %v1805, %v1893
    %1895 = vmatmul.bf16.gmra.mxu0 %v1356
    %v1896 = vpop.f32.mrf.mxu0
    %v1897 = vadd.f32 %v1808, %v1896
    %v1898 = vpop.f32.mrf.mxu0
    %v1899 = vadd.f32 %v1810, %v1898
    %1900 = vmatmul.bf16.gmra.mxu0 %v1358
    %v1901 = vpop.f32.mrf.mxu0
    %v1902 = vadd.f32 %v1813, %v1901
    %v1903 = vpop.f32.mrf.mxu0
    %v1904 = vadd.f32 %v1815, %v1903
    %1905 = vmatmul.bf16.gmra.mxu0 %v1360
    %v1906 = vpop.f32.mrf.mxu0
    %v1907 = vadd.f32 %v1818, %v1906
    %v1908 = vpop.f32.mrf.mxu0
    %v1909 = vadd.f32 %v1820, %v1908
    %1910 = vmatmul.bf16.gmra.mxu0 %v1362
    %v1911 = vpop.f32.mrf.mxu0
    %v1912 = vadd.f32 %v1823, %v1911
    %v1913 = vpop.f32.mrf.mxu0
    %v1914 = vadd.f32 %v1825, %v1913
    %1915 = vmatmul.bf16.gmra.mxu0 %v1364
    %v1916 = vpop.f32.mrf.mxu0
    %v1917 = vadd.f32 %v1828, %v1916
    %v1918 = vpop.f32.mrf.mxu0
    %v1919 = vadd.f32 %v1830, %v1918
    %1920 = vmatmul.bf16.gmra.mxu0 %v1366
    %v1921 = vpop.f32.mrf.mxu0
    %v1922 = vadd.f32 %v1833, %v1921
    %v1923 = vpop.f32.mrf.mxu0
    %v1924 = vadd.f32 %v1835, %v1923
    %1925 = vmatmul.bf16.gmra.mxu0 %v1368
    %v1926 = vpop.f32.mrf.mxu0
    %v1927 = vadd.f32 %v1838, %v1926
    %v1928 = vpop.f32.mrf.mxu0
    %v1929 = vadd.f32 %v1840, %v1928
    %1930 = vdwg.mxu0
    %1931 = vmatpush.bf16.msra.mxu0 %v1654
    %1932 = vmatpush.bf16.msra.mxu0 %v1650
    %1933 = vmatpush.bf16.msra.mxu0 %v1646
    %1934 = vmatpush.bf16.msra.mxu0 %v1642
    %1935 = vmatpush.bf16.msra.mxu0 %v1638
    %1936 = vmatpush.bf16.msra.mxu0 %v1634
    %1937 = vmatpush.bf16.msra.mxu0 %v1630
    %1938 = vmatpush.bf16.msra.mxu0 %v1626
    %1939 = vmatmul.bf16.gmra.mxu0 %v1337
    %v1940 = vpop.f32.mrf.mxu0
    %v1941 = vadd.f32 0.0, %v1940
    %v1942 = vpop.f32.mrf.mxu0
    %v1943 = vadd.f32 0.0, %v1942
    %1944 = vmatmul.bf16.gmra.mxu0 %v1339
    %v1945 = vpop.f32.mrf.mxu0
    %v1946 = vadd.f32 0.0, %v1945
    %v1947 = vpop.f32.mrf.mxu0
    %v1948 = vadd.f32 0.0, %v1947
    %1949 = vmatmul.bf16.gmra.mxu0 %v1341
    %v1950 = vpop.f32.mrf.mxu0
    %v1951 = vadd.f32 0.0, %v1950
    %v1952 = vpop.f32.mrf.mxu0
    %v1953 = vadd.f32 0.0, %v1952
    %1954 = vmatmul.bf16.gmra.mxu0 %v1343
    %v1955 = vpop.f32.mrf.mxu0
    %v1956 = vadd.f32 0.0, %v1955
    %v1957 = vpop.f32.mrf.mxu0
    %v1958 = vadd.f32 0.0, %v1957
    %1959 = vmatmul.bf16.gmra.mxu0 %v1345
    %v1960 = vpop.f32.mrf.mxu0
    %v1961 = vadd.f32 0.0, %v1960
    %v1962 = vpop.f32.mrf.mxu0
    %v1963 = vadd.f32 0.0, %v1962
    %1964 = vmatmul.bf16.gmra.mxu0 %v1347
    %v1965 = vpop.f32.mrf.mxu0
    %v1966 = vadd.f32 0.0, %v1965
    %v1967 = vpop.f32.mrf.mxu0
    %v1968 = vadd.f32 0.0, %v1967
    %1969 = vmatmul.bf16.gmra.mxu0 %v1349
    %v1970 = vpop.f32.mrf.mxu0
    %v1971 = vadd.f32 0.0, %v1970
    %v1972 = vpop.f32.mrf.mxu0
    %v1973 = vadd.f32 0.0, %v1972
    %1974 = vmatmul.bf16.gmra.mxu0 %v1351
    %v1975 = vpop.f32.mrf.mxu0
    %v1976 = vadd.f32 0.0, %v1975
    %v1977 = vpop.f32.mrf.mxu0
    %v1978 = vadd.f32 0.0, %v1977
    %1979 = vmatmul.bf16.gmra.mxu0 %v1353
    %v1980 = vpop.f32.mrf.mxu0
    %v1981 = vadd.f32 0.0, %v1980
    %v1982 = vpop.f32.mrf.mxu0
    %v1983 = vadd.f32 0.0, %v1982
    %1984 = vmatmul.bf16.gmra.mxu0 %v1355
    %v1985 = vpop.f32.mrf.mxu0
    %v1986 = vadd.f32 0.0, %v1985
    %v1987 = vpop.f32.mrf.mxu0
    %v1988 = vadd.f32 0.0, %v1987
    %1989 = vmatmul.bf16.gmra.mxu0 %v1357
    %v1990 = vpop.f32.mrf.mxu0
    %v1991 = vadd.f32 0.0, %v1990
    %v1992 = vpop.f32.mrf.mxu0
    %v1993 = vadd.f32 0.0, %v1992
    %1994 = vmatmul.bf16.gmra.mxu0 %v1359
    %v1995 = vpop.f32.mrf.mxu0
    %v1996 = vadd.f32 0.0, %v1995
    %v1997 = vpop.f32.mrf.mxu0
    %v1998 = vadd.f32 0.0, %v1997
    %1999 = vmatmul.bf16.gmra.mxu0 %v1361
    %v2000 = vpop.f32.mrf.mxu0
    %v2001 = vadd.f32 0.0, %v2000
    %v2002 = vpop.f32.mrf.mxu0
    %v2003 = vadd.f32 0.0, %v2002
    %2004 = vmatmul.bf16.gmra.mxu0 %v1363
    %v2005 = vpop.f32.mrf.mxu0
    %v2006 = vadd.f32 0.0, %v2005
    %v2007 = vpop.f32.mrf.mxu0
    %v2008 = vadd.f32 0.0, %v2007
    %2009 = vmatmul.bf16.gmra.mxu0 %v1365
    %v2010 = vpop.f32.mrf.mxu0
    %v2011 = vadd.f32 0.0, %v2010
    %v2012 = vpop.f32.mrf.mxu0
    %v2013 = vadd.f32 0.0, %v2012
    %2014 = vmatmul.bf16.gmra.mxu0 %v1367
    %v2015 = vpop.f32.mrf.mxu0
    %v2016 = vadd.f32 0.0, %v2015
    %v2017 = vpop.f32.mrf.mxu0
    %v2018 = vadd.f32 0.0, %v2017
    %2019 = vdwg.mxu0
    %2020 = vmatpush.bf16.msra.mxu0 %v1686
    %2021 = vmatpush.bf16.msra.mxu0 %v1682
    %2022 = vmatpush.bf16.msra.mxu0 %v1678
    %2023 = vmatpush.bf16.msra.mxu0 %v1674
    %2024 = vmatpush.bf16.msra.mxu0 %v1670
    %2025 = vmatpush.bf16.msra.mxu0 %v1666
    %2026 = vmatpush.bf16.msra.mxu0 %v1662
    %2027 = vmatpush.bf16.msra.mxu0 %v1658
    %2028 = vmatmul.bf16.gmra.mxu0 %v1338
    %v2029 = vpop.f32.mrf.mxu0
    %v2030 = vadd.f32 %v1941, %v2029
    %v2031 = vpop.f32.mrf.mxu0
    %v2032 = vadd.f32 %v1943, %v2031
    %2033 = vmatmul.bf16.gmra.mxu0 %v1340
    %v2034 = vpop.f32.mrf.mxu0
    %v2035 = vadd.f32 %v1946, %v2034
    %v2036 = vpop.f32.mrf.mxu0
    %v2037 = vadd.f32 %v1948, %v2036
    %2038 = vmatmul.bf16.gmra.mxu0 %v1342
    %v2039 = vpop.f32.mrf.mxu0
    %v2040 = vadd.f32 %v1951, %v2039
    %v2041 = vpop.f32.mrf.mxu0
    %v2042 = vadd.f32 %v1953, %v2041
    %2043 = vmatmul.bf16.gmra.mxu0 %v1344
    %v2044 = vpop.f32.mrf.mxu0
    %v2045 = vadd.f32 %v1956, %v2044
    %v2046 = vpop.f32.mrf.mxu0
    %v2047 = vadd.f32 %v1958, %v2046
    %2048 = vmatmul.bf16.gmra.mxu0 %v1346
    %v2049 = vpop.f32.mrf.mxu0
    %v2050 = vadd.f32 %v1961, %v2049
    %v2051 = vpop.f32.mrf.mxu0
    %v2052 = vadd.f32 %v1963, %v2051
    %2053 = vmatmul.bf16.gmra.mxu0 %v1348
    %v2054 = vpop.f32.mrf.mxu0
    %v2055 = vadd.f32 %v1966, %v2054
    %v2056 = vpop.f32.mrf.mxu0
    %v2057 = vadd.f32 %v1968, %v2056
    %2058 = vmatmul.bf16.gmra.mxu0 %v1350
    %v2059 = vpop.f32.mrf.mxu0
    %v2060 = vadd.f32 %v1971, %v2059
    %v2061 = vpop.f32.mrf.mxu0
    %v2062 = vadd.f32 %v1973, %v2061
    %2063 = vmatmul.bf16.gmra.mxu0 %v1352
    %v2064 = vpop.f32.mrf.mxu0
    %v2065 = vadd.f32 %v1976, %v2064
    %v2066 = vpop.f32.mrf.mxu0
    %v2067 = vadd.f32 %v1978, %v2066
    %2068 = vmatmul.bf16.gmra.mxu0 %v1354
    %v2069 = vpop.f32.mrf.mxu0
    %v2070 = vadd.f32 %v1981, %v2069
    %v2071 = vpop.f32.mrf.mxu0
    %v2072 = vadd.f32 %v1983, %v2071
    %2073 = vmatmul.bf16.gmra.mxu0 %v1356
    %v2074 = vpop.f32.mrf.mxu0
    %v2075 = vadd.f32 %v1986, %v2074
    %v2076 = vpop.f32.mrf.mxu0
    %v2077 = vadd.f32 %v1988, %v2076
    %2078 = vmatmul.bf16.gmra.mxu0 %v1358
    %v2079 = vpop.f32.mrf.mxu0
    %v2080 = vadd.f32 %v1991, %v2079
    %v2081 = vpop.f32.mrf.mxu0
    %v2082 = vadd.f32 %v1993, %v2081
    %2083 = vmatmul.bf16.gmra.mxu0 %v1360
    %v2084 = vpop.f32.mrf.mxu0
    %v2085 = vadd.f32 %v1996, %v2084
    %v2086 = vpop.f32.mrf.mxu0
    %v2087 = vadd.f32 %v1998, %v2086
    %2088 = vmatmul.bf16.gmra.mxu0 %v1362
    %v2089 = vpop.f32.mrf.mxu0
    %v2090 = vadd.f32 %v2001, %v2089
    %v2091 = vpop.f32.mrf.mxu0
    %v2092 = vadd.f32 %v2003, %v2091
    %2093 = vmatmul.bf16.gmra.mxu0 %v1364
    %v2094 = vpop.f32.mrf.mxu0
    %v2095 = vadd.f32 %v2006, %v2094
    %v2096 = vpop.f32.mrf.mxu0
    %v2097 = vadd.f32 %v2008, %v2096
    %2098 = vmatmul.bf16.gmra.mxu0 %v1366
    %v2099 = vpop.f32.mrf.mxu0
    %v2100 = vadd.f32 %v2011, %v2099
    %v2101 = vpop.f32.mrf.mxu0
    %v2102 = vadd.f32 %v2013, %v2101
    %2103 = vmatmul.bf16.gmra.mxu0 %v1368
    %v2104 = vpop.f32.mrf.mxu0
    %v2105 = vadd.f32 %v2016, %v2104
    %v2106 = vpop.f32.mrf.mxu0
    %v2107 = vadd.f32 %v2018, %v2106
    %2108 = vdwg.mxu0
    %2109 = vmatpush.bf16.msra.mxu0 %v1655
    %2110 = vmatpush.bf16.msra.mxu0 %v1651
    %2111 = vmatpush.bf16.msra.mxu0 %v1647
    %2112 = vmatpush.bf16.msra.mxu0 %v1643
    %2113 = vmatpush.bf16.msra.mxu0 %v1639
    %2114 = vmatpush.bf16.msra.mxu0 %v1635
    %2115 = vmatpush.bf16.msra.mxu0 %v1631
    %2116 = vmatpush.bf16.msra.mxu0 %v1627
    %2117 = vmatmul.bf16.gmra.mxu0 %v1337
    %v2118 = vpop.f32.mrf.mxu0
    %v2119 = vadd.f32 0.0, %v2118
    %v2120 = vpop.f32.mrf.mxu0
    %v2121 = vadd.f32 0.0, %v2120
    %2122 = vmatmul.bf16.gmra.mxu0 %v1339
    %v2123 = vpop.f32.mrf.mxu0
    %v2124 = vadd.f32 0.0, %v2123
    %v2125 = vpop.f32.mrf.mxu0
    %v2126 = vadd.f32 0.0, %v2125
    %2127 = vmatmul.bf16.gmra.mxu0 %v1341
    %v2128 = vpop.f32.mrf.mxu0
    %v2129 = vadd.f32 0.0, %v2128
    %v2130 = vpop.f32.mrf.mxu0
    %v2131 = vadd.f32 0.0, %v2130
    %2132 = vmatmul.bf16.gmra.mxu0 %v1343
    %v2133 = vpop.f32.mrf.mxu0
    %v2134 = vadd.f32 0.0, %v2133
    %v2135 = vpop.f32.mrf.mxu0
    %v2136 = vadd.f32 0.0, %v2135
    %2137 = vmatmul.bf16.gmra.mxu0 %v1345
    %v2138 = vpop.f32.mrf.mxu0
    %v2139 = vadd.f32 0.0, %v2138
    %v2140 = vpop.f32.mrf.mxu0
    %v2141 = vadd.f32 0.0, %v2140
    %2142 = vmatmul.bf16.gmra.mxu0 %v1347
    %v2143 = vpop.f32.mrf.mxu0
    %v2144 = vadd.f32 0.0, %v2143
    %v2145 = vpop.f32.mrf.mxu0
    %v2146 = vadd.f32 0.0, %v2145
    %2147 = vmatmul.bf16.gmra.mxu0 %v1349
    %v2148 = vpop.f32.mrf.mxu0
    %v2149 = vadd.f32 0.0, %v2148
    %v2150 = vpop.f32.mrf.mxu0
    %v2151 = vadd.f32 0.0, %v2150
    %2152 = vmatmul.bf16.gmra.mxu0 %v1351
    %v2153 = vpop.f32.mrf.mxu0
    %v2154 = vadd.f32 0.0, %v2153
    %v2155 = vpop.f32.mrf.mxu0
    %v2156 = vadd.f32 0.0, %v2155
    %2157 = vmatmul.bf16.gmra.mxu0 %v1353
    %v2158 = vpop.f32.mrf.mxu0
    %v2159 = vadd.f32 0.0, %v2158
    %v2160 = vpop.f32.mrf.mxu0
    %v2161 = vadd.f32 0.0, %v2160
    %2162 = vmatmul.bf16.gmra.mxu0 %v1355
    %v2163 = vpop.f32.mrf.mxu0
    %v2164 = vadd.f32 0.0, %v2163
    %v2165 = vpop.f32.mrf.mxu0
    %v2166 = vadd.f32 0.0, %v2165
    %2167 = vmatmul.bf16.gmra.mxu0 %v1357
    %v2168 = vpop.f32.mrf.mxu0
    %v2169 = vadd.f32 0.0, %v2168
    %v2170 = vpop.f32.mrf.mxu0
    %v2171 = vadd.f32 0.0, %v2170
    %2172 = vmatmul.bf16.gmra.mxu0 %v1359
    %v2173 = vpop.f32.mrf.mxu0
    %v2174 = vadd.f32 0.0, %v2173
    %v2175 = vpop.f32.mrf.mxu0
    %v2176 = vadd.f32 0.0, %v2175
    %2177 = vmatmul.bf16.gmra.mxu0 %v1361
    %v2178 = vpop.f32.mrf.mxu0
    %v2179 = vadd.f32 0.0, %v2178
    %v2180 = vpop.f32.mrf.mxu0
    %v2181 = vadd.f32 0.0, %v2180
    %2182 = vmatmul.bf16.gmra.mxu0 %v1363
    %v2183 = vpop.f32.mrf.mxu0
    %v2184 = vadd.f32 0.0, %v2183
    %v2185 = vpop.f32.mrf.mxu0
    %v2186 = vadd.f32 0.0, %v2185
    %2187 = vmatmul.bf16.gmra.mxu0 %v1365
    %v2188 = vpop.f32.mrf.mxu0
    %v2189 = vadd.f32 0.0, %v2188
    %v2190 = vpop.f32.mrf.mxu0
    %v2191 = vadd.f32 0.0, %v2190
    %2192 = vmatmul.bf16.gmra.mxu0 %v1367
    %v2193 = vpop.f32.mrf.mxu0
    %v2194 = vadd.f32 0.0, %v2193
    %v2195 = vpop.f32.mrf.mxu0
    %v2196 = vadd.f32 0.0, %v2195
    %2197 = vdwg.mxu0
    %2198 = vmatpush.bf16.msra.mxu0 %v1687
    %2199 = vmatpush.bf16.msra.mxu0 %v1683
    %2200 = vmatpush.bf16.msra.mxu0 %v1679
    %2201 = vmatpush.bf16.msra.mxu0 %v1675
    %2202 = vmatpush.bf16.msra.mxu0 %v1671
    %2203 = vmatpush.bf16.msra.mxu0 %v1667
    %2204 = vmatpush.bf16.msra.mxu0 %v1663
    %2205 = vmatpush.bf16.msra.mxu0 %v1659
    %2206 = vmatmul.bf16.gmra.mxu0 %v1338
    %v2207 = vpop.f32.mrf.mxu0
    %v2208 = vadd.f32 %v2119, %v2207
    %v2209 = vpop.f32.mrf.mxu0
    %v2210 = vadd.f32 %v2121, %v2209
    %2211 = vmatmul.bf16.gmra.mxu0 %v1340
    %v2212 = vpop.f32.mrf.mxu0
    %v2213 = vadd.f32 %v2124, %v2212
    %v2214 = vpop.f32.mrf.mxu0
    %v2215 = vadd.f32 %v2126, %v2214
    %2216 = vmatmul.bf16.gmra.mxu0 %v1342
    %v2217 = vpop.f32.mrf.mxu0
    %v2218 = vadd.f32 %v2129, %v2217
    %v2219 = vpop.f32.mrf.mxu0
    %v2220 = vadd.f32 %v2131, %v2219
    %2221 = vmatmul.bf16.gmra.mxu0 %v1344
    %v2222 = vpop.f32.mrf.mxu0
    %v2223 = vadd.f32 %v2134, %v2222
    %v2224 = vpop.f32.mrf.mxu0
    %v2225 = vadd.f32 %v2136, %v2224
    %2226 = vmatmul.bf16.gmra.mxu0 %v1346
    %v2227 = vpop.f32.mrf.mxu0
    %v2228 = vadd.f32 %v2139, %v2227
    %v2229 = vpop.f32.mrf.mxu0
    %v2230 = vadd.f32 %v2141, %v2229
    %2231 = vmatmul.bf16.gmra.mxu0 %v1348
    %v2232 = vpop.f32.mrf.mxu0
    %v2233 = vadd.f32 %v2144, %v2232
    %v2234 = vpop.f32.mrf.mxu0
    %v2235 = vadd.f32 %v2146, %v2234
    %2236 = vmatmul.bf16.gmra.mxu0 %v1350
    %v2237 = vpop.f32.mrf.mxu0
    %v2238 = vadd.f32 %v2149, %v2237
    %v2239 = vpop.f32.mrf.mxu0
    %v2240 = vadd.f32 %v2151, %v2239
    %2241 = vmatmul.bf16.gmra.mxu0 %v1352
    %v2242 = vpop.f32.mrf.mxu0
    %v2243 = vadd.f32 %v2154, %v2242
    %v2244 = vpop.f32.mrf.mxu0
    %v2245 = vadd.f32 %v2156, %v2244
    %2246 = vmatmul.bf16.gmra.mxu0 %v1354
    %v2247 = vpop.f32.mrf.mxu0
    %v2248 = vadd.f32 %v2159, %v2247
    %v2249 = vpop.f32.mrf.mxu0
    %v2250 = vadd.f32 %v2161, %v2249
    %2251 = vmatmul.bf16.gmra.mxu0 %v1356
    %v2252 = vpop.f32.mrf.mxu0
    %v2253 = vadd.f32 %v2164, %v2252
    %v2254 = vpop.f32.mrf.mxu0
    %v2255 = vadd.f32 %v2166, %v2254
    %2256 = vmatmul.bf16.gmra.mxu0 %v1358
    %v2257 = vpop.f32.mrf.mxu0
    %v2258 = vadd.f32 %v2169, %v2257
    %v2259 = vpop.f32.mrf.mxu0
    %v2260 = vadd.f32 %v2171, %v2259
    %2261 = vmatmul.bf16.gmra.mxu0 %v1360
    %v2262 = vpop.f32.mrf.mxu0
    %v2263 = vadd.f32 %v2174, %v2262
    %v2264 = vpop.f32.mrf.mxu0
    %v2265 = vadd.f32 %v2176, %v2264
    %2266 = vmatmul.bf16.gmra.mxu0 %v1362
    %v2267 = vpop.f32.mrf.mxu0
    %v2268 = vadd.f32 %v2179, %v2267
    %v2269 = vpop.f32.mrf.mxu0
    %v2270 = vadd.f32 %v2181, %v2269
    %2271 = vmatmul.bf16.gmra.mxu0 %v1364
    %v2272 = vpop.f32.mrf.mxu0
    %v2273 = vadd.f32 %v2184, %v2272
    %v2274 = vpop.f32.mrf.mxu0
    %v2275 = vadd.f32 %v2186, %v2274
    %2276 = vmatmul.bf16.gmra.mxu0 %v1366
    %v2277 = vpop.f32.mrf.mxu0
    %v2278 = vadd.f32 %v2189, %v2277
    %v2279 = vpop.f32.mrf.mxu0
    %v2280 = vadd.f32 %v2191, %v2279
    %2281 = vmatmul.bf16.gmra.mxu0 %v1368
    %v2282 = vpop.f32.mrf.mxu0
    %v2283 = vadd.f32 %v2194, %v2282
    %v2284 = vpop.f32.mrf.mxu0
    %v2285 = vadd.f32 %v2196, %v2284
    %2286 = vdwg.mxu0
    %2287 = vmatpush.bf16.msra.mxu0 %v1656
    %2288 = vmatpush.bf16.msra.mxu0 %v1652
    %2289 = vmatpush.bf16.msra.mxu0 %v1648
    %2290 = vmatpush.bf16.msra.mxu0 %v1644
    %2291 = vmatpush.bf16.msra.mxu0 %v1640
    %2292 = vmatpush.bf16.msra.mxu0 %v1636
    %2293 = vmatpush.bf16.msra.mxu0 %v1632
    %2294 = vmatpush.bf16.msra.mxu0 %v1628
    %2295 = vmatmul.bf16.gmra.mxu0 %v1337
    %v2296 = vpop.f32.mrf.mxu0
    %v2297 = vadd.f32 0.0, %v2296
    %v2298 = vpop.f32.mrf.mxu0
    %v2299 = vadd.f32 0.0, %v2298
    %2300 = vmatmul.bf16.gmra.mxu0 %v1339
    %v2301 = vpop.f32.mrf.mxu0
    %v2302 = vadd.f32 0.0, %v2301
    %v2303 = vpop.f32.mrf.mxu0
    %v2304 = vadd.f32 0.0, %v2303
    %2305 = vmatmul.bf16.gmra.mxu0 %v1341
    %v2306 = vpop.f32.mrf.mxu0
    %v2307 = vadd.f32 0.0, %v2306
    %v2308 = vpop.f32.mrf.mxu0
    %v2309 = vadd.f32 0.0, %v2308
    %2310 = vmatmul.bf16.gmra.mxu0 %v1343
    %v2311 = vpop.f32.mrf.mxu0
    %v2312 = vadd.f32 0.0, %v2311
    %v2313 = vpop.f32.mrf.mxu0
    %v2314 = vadd.f32 0.0, %v2313
    %2315 = vmatmul.bf16.gmra.mxu0 %v1345
    %v2316 = vpop.f32.mrf.mxu0
    %v2317 = vadd.f32 0.0, %v2316
    %v2318 = vpop.f32.mrf.mxu0
    %v2319 = vadd.f32 0.0, %v2318
    %2320 = vmatmul.bf16.gmra.mxu0 %v1347
    %v2321 = vpop.f32.mrf.mxu0
    %v2322 = vadd.f32 0.0, %v2321
    %v2323 = vpop.f32.mrf.mxu0
    %v2324 = vadd.f32 0.0, %v2323
    %2325 = vmatmul.bf16.gmra.mxu0 %v1349
    %v2326 = vpop.f32.mrf.mxu0
    %v2327 = vadd.f32 0.0, %v2326
    %v2328 = vpop.f32.mrf.mxu0
    %v2329 = vadd.f32 0.0, %v2328
    %2330 = vmatmul.bf16.gmra.mxu0 %v1351
    %v2331 = vpop.f32.mrf.mxu0
    %v2332 = vadd.f32 0.0, %v2331
    %v2333 = vpop.f32.mrf.mxu0
    %v2334 = vadd.f32 0.0, %v2333
    %2335 = vmatmul.bf16.gmra.mxu0 %v1353
    %v2336 = vpop.f32.mrf.mxu0
    %v2337 = vadd.f32 0.0, %v2336
    %v2338 = vpop.f32.mrf.mxu0
    %v2339 = vadd.f32 0.0, %v2338
    %2340 = vmatmul.bf16.gmra.mxu0 %v1355
    %v2341 = vpop.f32.mrf.mxu0
    %v2342 = vadd.f32 0.0, %v2341
    %v2343 = vpop.f32.mrf.mxu0
    %v2344 = vadd.f32 0.0, %v2343
    %2345 = vmatmul.bf16.gmra.mxu0 %v1357
    %v2346 = vpop.f32.mrf.mxu0
    %v2347 = vadd.f32 0.0, %v2346
    %v2348 = vpop.f32.mrf.mxu0
    %v2349 = vadd.f32 0.0, %v2348
    %2350 = vmatmul.bf16.gmra.mxu0 %v1359
    %v2351 = vpop.f32.mrf.mxu0
    %v2352 = vadd.f32 0.0, %v2351
    %v2353 = vpop.f32.mrf.mxu0
    %v2354 = vadd.f32 0.0, %v2353
    %2355 = vmatmul.bf16.gmra.mxu0 %v1361
    %v2356 = vpop.f32.mrf.mxu0
    %v2357 = vadd.f32 0.0, %v2356
    %v2358 = vpop.f32.mrf.mxu0
    %v2359 = vadd.f32 0.0, %v2358
    %2360 = vmatmul.bf16.gmra.mxu0 %v1363
    %v2361 = vpop.f32.mrf.mxu0
    %v2362 = vadd.f32 0.0, %v2361
    %v2363 = vpop.f32.mrf.mxu0
    %v2364 = vadd.f32 0.0, %v2363
    %2365 = vmatmul.bf16.gmra.mxu0 %v1365
    %v2366 = vpop.f32.mrf.mxu0
    %v2367 = vadd.f32 0.0, %v2366
    %v2368 = vpop.f32.mrf.mxu0
    %v2369 = vadd.f32 0.0, %v2368
    %2370 = vmatmul.bf16.gmra.mxu0 %v1367
    %v2371 = vpop.f32.mrf.mxu0
    %v2372 = vadd.f32 0.0, %v2371
    %v2373 = vpop.f32.mrf.mxu0
    %v2374 = vadd.f32 0.0, %v2373
    %2375 = vdwg.mxu0
    %2376 = vmatpush.bf16.msra.mxu0 %v1688
    %2377 = vmatpush.bf16.msra.mxu0 %v1684
    %2378 = vmatpush.bf16.msra.mxu0 %v1680
    %2379 = vmatpush.bf16.msra.mxu0 %v1676
    %2380 = vmatpush.bf16.msra.mxu0 %v1672
    %2381 = vmatpush.bf16.msra.mxu0 %v1668
    %2382 = vmatpush.bf16.msra.mxu0 %v1664
    %2383 = vmatpush.bf16.msra.mxu0 %v1660
    %2384 = vmatmul.bf16.gmra.mxu0 %v1338
    %v2385 = vpop.f32.mrf.mxu0
    %v2386 = vadd.f32 %v2297, %v2385
    %v2387 = vpop.f32.mrf.mxu0
    %v2388 = vadd.f32 %v2299, %v2387
    %2389 = vmatmul.bf16.gmra.mxu0 %v1340
    %v2390 = vpop.f32.mrf.mxu0
    %v2391 = vadd.f32 %v2302, %v2390
    %v2392 = vpop.f32.mrf.mxu0
    %v2393 = vadd.f32 %v2304, %v2392
    %2394 = vmatmul.bf16.gmra.mxu0 %v1342
    %v2395 = vpop.f32.mrf.mxu0
    %v2396 = vadd.f32 %v2307, %v2395
    %v2397 = vpop.f32.mrf.mxu0
    %v2398 = vadd.f32 %v2309, %v2397
    %2399 = vmatmul.bf16.gmra.mxu0 %v1344
    %v2400 = vpop.f32.mrf.mxu0
    %v2401 = vadd.f32 %v2312, %v2400
    %v2402 = vpop.f32.mrf.mxu0
    %v2403 = vadd.f32 %v2314, %v2402
    %2404 = vmatmul.bf16.gmra.mxu0 %v1346
    %v2405 = vpop.f32.mrf.mxu0
    %v2406 = vadd.f32 %v2317, %v2405
    %v2407 = vpop.f32.mrf.mxu0
    %v2408 = vadd.f32 %v2319, %v2407
    %2409 = vmatmul.bf16.gmra.mxu0 %v1348
    %v2410 = vpop.f32.mrf.mxu0
    %v2411 = vadd.f32 %v2322, %v2410
    %v2412 = vpop.f32.mrf.mxu0
    %v2413 = vadd.f32 %v2324, %v2412
    %2414 = vmatmul.bf16.gmra.mxu0 %v1350
    %v2415 = vpop.f32.mrf.mxu0
    %v2416 = vadd.f32 %v2327, %v2415
    %v2417 = vpop.f32.mrf.mxu0
    %v2418 = vadd.f32 %v2329, %v2417
    %2419 = vmatmul.bf16.gmra.mxu0 %v1352
    %v2420 = vpop.f32.mrf.mxu0
    %v2421 = vadd.f32 %v2332, %v2420
    %v2422 = vpop.f32.mrf.mxu0
    %v2423 = vadd.f32 %v2334, %v2422
    %2424 = vmatmul.bf16.gmra.mxu0 %v1354
    %v2425 = vpop.f32.mrf.mxu0
    %v2426 = vadd.f32 %v2337, %v2425
    %v2427 = vpop.f32.mrf.mxu0
    %v2428 = vadd.f32 %v2339, %v2427
    %2429 = vmatmul.bf16.gmra.mxu0 %v1356
    %v2430 = vpop.f32.mrf.mxu0
    %v2431 = vadd.f32 %v2342, %v2430
    %v2432 = vpop.f32.mrf.mxu0
    %v2433 = vadd.f32 %v2344, %v2432
    %2434 = vmatmul.bf16.gmra.mxu0 %v1358
    %v2435 = vpop.f32.mrf.mxu0
    %v2436 = vadd.f32 %v2347, %v2435
    %v2437 = vpop.f32.mrf.mxu0
    %v2438 = vadd.f32 %v2349, %v2437
    %2439 = vmatmul.bf16.gmra.mxu0 %v1360
    %v2440 = vpop.f32.mrf.mxu0
    %v2441 = vadd.f32 %v2352, %v2440
    %v2442 = vpop.f32.mrf.mxu0
    %v2443 = vadd.f32 %v2354, %v2442
    %2444 = vmatmul.bf16.gmra.mxu0 %v1362
    %v2445 = vpop.f32.mrf.mxu0
    %v2446 = vadd.f32 %v2357, %v2445
    %v2447 = vpop.f32.mrf.mxu0
    %v2448 = vadd.f32 %v2359, %v2447
    %2449 = vmatmul.bf16.gmra.mxu0 %v1364
    %v2450 = vpop.f32.mrf.mxu0
    %v2451 = vadd.f32 %v2362, %v2450
    %v2452 = vpop.f32.mrf.mxu0
    %v2453 = vadd.f32 %v2364, %v2452
    %2454 = vmatmul.bf16.gmra.mxu0 %v1366
    %v2455 = vpop.f32.mrf.mxu0
    %v2456 = vadd.f32 %v2367, %v2455
    %v2457 = vpop.f32.mrf.mxu0
    %v2458 = vadd.f32 %v2369, %v2457
    %2459 = vmatmul.bf16.gmra.mxu0 %v1368
    %v2460 = vpop.f32.mrf.mxu0
    %v2461 = vadd.f32 %v2372, %v2460
    %v2462 = vpop.f32.mrf.mxu0
    %v2463 = vadd.f32 %v2374, %v2462
    %2464 = vdwg.mxu0
    %v2465 = vld [vmem:[%s6] sm:$0xff]
    %v2466 = vadd.f32 %v1852, %v1854
    %v2467 = vadd.f32 %v2466, %v1857
    %v2468 = vadd.f32 %v2467, %v1859
    %v2469 = vadd.f32 %v2468, %v1862
    %v2470 = vadd.f32 %v2469, %v1864
    %v2471 = vadd.f32 %v2470, %v1867
    %v2472 = vadd.f32 %v2471, %v1869
    %v2473 = vadd.f32 %v2472, %v1872
    %v2474 = vadd.f32 %v2473, %v1874
    %v2475 = vadd.f32 %v2474, %v1877
    %v2476 = vadd.f32 %v2475, %v1879
    %v2477 = vadd.f32 %v2476, %v1882
    %v2478 = vadd.f32 %v2477, %v1884
    %v2479 = vadd.f32 %v2478, %v1887
    %v2480 = vadd.f32 %v2479, %v1889
    %v2481 = vadd.f32 %v2480, %v1892
    %v2482 = vadd.f32 %v2481, %v1894
    %v2483 = vadd.f32 %v2482, %v1897
    %v2484 = vadd.f32 %v2483, %v1899
    %v2485 = vadd.f32 %v2484, %v1902
    %v2486 = vadd.f32 %v2485, %v1904
    %v2487 = vadd.f32 %v2486, %v1907
    %v2488 = vadd.f32 %v2487, %v1909
    %v2489 = vadd.f32 %v2488, %v1912
    %v2490 = vadd.f32 %v2489, %v1914
    %v2491 = vadd.f32 %v2490, %v1917
    %v2492 = vadd.f32 %v2491, %v1919
    %v2493 = vadd.f32 %v2492, %v1922
    %v2494 = vadd.f32 %v2493, %v1924
    %v2495 = vadd.f32 %v2494, %v1927
    %v2496 = vadd.f32 %v2495, %v1929
    %v2497 = vrot.slane %v2496, 4
    %v2498 = vadd.f32 %v2496, %v2497
    %v2499 = vrot.slane %v2498, 2
    %v2500 = vadd.f32 %v2498, %v2499
    %v2501 = vrot.slane %v2500, 1
    %v2502 = vadd.f32 %v2500, %v2501
    %v2503 = vadd.f32 %v2030, %v2032
    %v2504 = vadd.f32 %v2503, %v2035
    %v2505 = vadd.f32 %v2504, %v2037
    %v2506 = vadd.f32 %v2505, %v2040
    %v2507 = vadd.f32 %v2506, %v2042
    %v2508 = vadd.f32 %v2507, %v2045
    %v2509 = vadd.f32 %v2508, %v2047
    %v2510 = vadd.f32 %v2509, %v2050
    %v2511 = vadd.f32 %v2510, %v2052
    %v2512 = vadd.f32 %v2511, %v2055
    %v2513 = vadd.f32 %v2512, %v2057
    %v2514 = vadd.f32 %v2513, %v2060
    %v2515 = vadd.f32 %v2514, %v2062
    %v2516 = vadd.f32 %v2515, %v2065
    %v2517 = vadd.f32 %v2516, %v2067
    %v2518 = vadd.f32 %v2517, %v2070
    %v2519 = vadd.f32 %v2518, %v2072
    %v2520 = vadd.f32 %v2519, %v2075
    %v2521 = vadd.f32 %v2520, %v2077
    %v2522 = vadd.f32 %v2521, %v2080
    %v2523 = vadd.f32 %v2522, %v2082
    %v2524 = vadd.f32 %v2523, %v2085
    %v2525 = vadd.f32 %v2524, %v2087
    %v2526 = vadd.f32 %v2525, %v2090
    %v2527 = vadd.f32 %v2526, %v2092
    %v2528 = vadd.f32 %v2527, %v2095
    %v2529 = vadd.f32 %v2528, %v2097
    %v2530 = vadd.f32 %v2529, %v2100
    %v2531 = vadd.f32 %v2530, %v2102
    %v2532 = vadd.f32 %v2531, %v2105
    %v2533 = vadd.f32 %v2532, %v2107
    %v2534 = vrot.slane %v2533, 4
    %v2535 = vadd.f32 %v2533, %v2534
    %v2536 = vrot.slane %v2535, 2
    %v2537 = vadd.f32 %v2535, %v2536
    %v2538 = vrot.slane %v2537, 1
    %v2539 = vadd.f32 %v2537, %v2538
    %v2540 = vadd.f32 %v2208, %v2210
    %v2541 = vadd.f32 %v2540, %v2213
    %v2542 = vadd.f32 %v2541, %v2215
    %v2543 = vadd.f32 %v2542, %v2218
    %v2544 = vadd.f32 %v2543, %v2220
    %v2545 = vadd.f32 %v2544, %v2223
    %v2546 = vadd.f32 %v2545, %v2225
    %v2547 = vadd.f32 %v2546, %v2228
    %v2548 = vadd.f32 %v2547, %v2230
    %v2549 = vadd.f32 %v2548, %v2233
    %v2550 = vadd.f32 %v2549, %v2235
    %v2551 = vadd.f32 %v2550, %v2238
    %v2552 = vadd.f32 %v2551, %v2240
    %v2553 = vadd.f32 %v2552, %v2243
    %v2554 = vadd.f32 %v2553, %v2245
    %v2555 = vadd.f32 %v2554, %v2248
    %v2556 = vadd.f32 %v2555, %v2250
    %v2557 = vadd.f32 %v2556, %v2253
    %v2558 = vadd.f32 %v2557, %v2255
    %v2559 = vadd.f32 %v2558, %v2258
    %v2560 = vadd.f32 %v2559, %v2260
    %v2561 = vadd.f32 %v2560, %v2263
    %v2562 = vadd.f32 %v2561, %v2265
    %v2563 = vadd.f32 %v2562, %v2268
    %v2564 = vadd.f32 %v2563, %v2270
    %v2565 = vadd.f32 %v2564, %v2273
    %v2566 = vadd.f32 %v2565, %v2275
    %v2567 = vadd.f32 %v2566, %v2278
    %v2568 = vadd.f32 %v2567, %v2280
    %v2569 = vadd.f32 %v2568, %v2283
    %v2570 = vadd.f32 %v2569, %v2285
    %v2571 = vrot.slane %v2570, 4
    %v2572 = vadd.f32 %v2570, %v2571
    %v2573 = vrot.slane %v2572, 2
    %v2574 = vadd.f32 %v2572, %v2573
    %v2575 = vrot.slane %v2574, 1
    %v2576 = vadd.f32 %v2574, %v2575
    %v2577 = vadd.f32 %v2386, %v2388
    %v2578 = vadd.f32 %v2577, %v2391
    %v2579 = vadd.f32 %v2578, %v2393
    %v2580 = vadd.f32 %v2579, %v2396
    %v2581 = vadd.f32 %v2580, %v2398
    %v2582 = vadd.f32 %v2581, %v2401
    %v2583 = vadd.f32 %v2582, %v2403
    %v2584 = vadd.f32 %v2583, %v2406
    %v2585 = vadd.f32 %v2584, %v2408
    %v2586 = vadd.f32 %v2585, %v2411
    %v2587 = vadd.f32 %v2586, %v2413
    %v2588 = vadd.f32 %v2587, %v2416
    %v2589 = vadd.f32 %v2588, %v2418
    %v2590 = vadd.f32 %v2589, %v2421
    %v2591 = vadd.f32 %v2590, %v2423
    %v2592 = vadd.f32 %v2591, %v2426
    %v2593 = vadd.f32 %v2592, %v2428
    %v2594 = vadd.f32 %v2593, %v2431
    %v2595 = vadd.f32 %v2594, %v2433
    %v2596 = vadd.f32 %v2595, %v2436
    %v2597 = vadd.f32 %v2596, %v2438
    %v2598 = vadd.f32 %v2597, %v2441
    %v2599 = vadd.f32 %v2598, %v2443
    %v2600 = vadd.f32 %v2599, %v2446
    %v2601 = vadd.f32 %v2600, %v2448
    %v2602 = vadd.f32 %v2601, %v2451
    %v2603 = vadd.f32 %v2602, %v2453
    %v2604 = vadd.f32 %v2603, %v2456
    %v2605 = vadd.f32 %v2604, %v2458
    %v2606 = vadd.f32 %v2605, %v2461
    %v2607 = vadd.f32 %v2606, %v2463
    %v2608 = vrot.slane %v2607, 4
    %v2609 = vadd.f32 %v2607, %v2608
    %v2610 = vrot.slane %v2609, 2
    %v2611 = vadd.f32 %v2609, %v2610
    %v2612 = vrot.slane %v2611, 1
    %v2613 = vadd.f32 %v2611, %v2612
    %v2614 = vmul.f32 %v1852, %v1852
    %v2615 = vmul.f32 %v2030, %v2030
    %v2616 = vmul.f32 %v2208, %v2208
    %v2617 = vmul.f32 %v2386, %v2386
    %v2618 = vmul.f32 %v1854, %v1854
    %v2619 = vmul.f32 %v2032, %v2032
    %v2620 = vmul.f32 %v2210, %v2210
    %v2621 = vmul.f32 %v2388, %v2388
    %v2622 = vmul.f32 %v1857, %v1857
    %v2623 = vmul.f32 %v2035, %v2035
    %v2624 = vmul.f32 %v2213, %v2213
    %v2625 = vmul.f32 %v2391, %v2391
    %v2626 = vmul.f32 %v1859, %v1859
    %v2627 = vmul.f32 %v2037, %v2037
    %v2628 = vmul.f32 %v2215, %v2215
    %v2629 = vmul.f32 %v2393, %v2393
    %v2630 = vmul.f32 %v1862, %v1862
    %v2631 = vmul.f32 %v2040, %v2040
    %v2632 = vmul.f32 %v2218, %v2218
    %v2633 = vmul.f32 %v2396, %v2396
    %v2634 = vmul.f32 %v1864, %v1864
    %v2635 = vmul.f32 %v2042, %v2042
    %v2636 = vmul.f32 %v2220, %v2220
    %v2637 = vmul.f32 %v2398, %v2398
    %v2638 = vmul.f32 %v1867, %v1867
    %v2639 = vmul.f32 %v2045, %v2045
    %v2640 = vmul.f32 %v2223, %v2223
    %v2641 = vmul.f32 %v2401, %v2401
    %v2642 = vmul.f32 %v1869, %v1869
    %v2643 = vmul.f32 %v2047, %v2047
    %v2644 = vmul.f32 %v2225, %v2225
    %v2645 = vmul.f32 %v2403, %v2403
    %v2646 = vmul.f32 %v1872, %v1872
    %v2647 = vmul.f32 %v2050, %v2050
    %v2648 = vmul.f32 %v2228, %v2228
    %v2649 = vmul.f32 %v2406, %v2406
    %v2650 = vmul.f32 %v1874, %v1874
    %v2651 = vmul.f32 %v2052, %v2052
    %v2652 = vmul.f32 %v2230, %v2230
    %v2653 = vmul.f32 %v2408, %v2408
    %v2654 = vmul.f32 %v1877, %v1877
    %v2655 = vmul.f32 %v2055, %v2055
    %v2656 = vmul.f32 %v2233, %v2233
    %v2657 = vmul.f32 %v2411, %v2411
    %v2658 = vmul.f32 %v1879, %v1879
    %v2659 = vmul.f32 %v2057, %v2057
    %v2660 = vmul.f32 %v2235, %v2235
    %v2661 = vmul.f32 %v2413, %v2413
    %v2662 = vmul.f32 %v1882, %v1882
    %v2663 = vmul.f32 %v2060, %v2060
    %v2664 = vmul.f32 %v2238, %v2238
    %v2665 = vmul.f32 %v2416, %v2416
    %v2666 = vmul.f32 %v1884, %v1884
    %v2667 = vmul.f32 %v2062, %v2062
    %v2668 = vmul.f32 %v2240, %v2240
    %v2669 = vmul.f32 %v2418, %v2418
    %v2670 = vmul.f32 %v1887, %v1887
    %v2671 = vmul.f32 %v2065, %v2065
    %v2672 = vmul.f32 %v2243, %v2243
    %v2673 = vmul.f32 %v2421, %v2421
    %v2674 = vmul.f32 %v1889, %v1889
    %v2675 = vmul.f32 %v2067, %v2067
    %v2676 = vmul.f32 %v2245, %v2245
    %v2677 = vmul.f32 %v2423, %v2423
    %v2678 = vmul.f32 %v1892, %v1892
    %v2679 = vmul.f32 %v2070, %v2070
    %v2680 = vmul.f32 %v2248, %v2248
    %v2681 = vmul.f32 %v2426, %v2426
    %v2682 = vmul.f32 %v1894, %v1894
    %v2683 = vmul.f32 %v2072, %v2072
    %v2684 = vmul.f32 %v2250, %v2250
    %v2685 = vmul.f32 %v2428, %v2428
    %v2686 = vmul.f32 %v1897, %v1897
    %v2687 = vmul.f32 %v2075, %v2075
    %v2688 = vmul.f32 %v2253, %v2253
    %v2689 = vmul.f32 %v2431, %v2431
    %v2690 = vmul.f32 %v1899, %v1899
    %v2691 = vmul.f32 %v2077, %v2077
    %v2692 = vmul.f32 %v2255, %v2255
    %v2693 = vmul.f32 %v2433, %v2433
    %v2694 = vmul.f32 %v1902, %v1902
    %v2695 = vmul.f32 %v2080, %v2080
    %v2696 = vmul.f32 %v2258, %v2258
    %v2697 = vmul.f32 %v2436, %v2436
    %v2698 = vmul.f32 %v1904, %v1904
    %v2699 = vmul.f32 %v2082, %v2082
    %v2700 = vmul.f32 %v2260, %v2260
    %v2701 = vmul.f32 %v2438, %v2438
    %v2702 = vmul.f32 %v1907, %v1907
    %v2703 = vmul.f32 %v2085, %v2085
    %v2704 = vmul.f32 %v2263, %v2263
    %v2705 = vmul.f32 %v2441, %v2441
    %v2706 = vmul.f32 %v1909, %v1909
    %v2707 = vmul.f32 %v2087, %v2087
    %v2708 = vmul.f32 %v2265, %v2265
    %v2709 = vmul.f32 %v2443, %v2443
    %v2710 = vmul.f32 %v1912, %v1912
    %v2711 = vmul.f32 %v2090, %v2090
    %v2712 = vmul.f32 %v2268, %v2268
    %v2713 = vmul.f32 %v2446, %v2446
    %v2714 = vmul.f32 %v1914, %v1914
    %v2715 = vmul.f32 %v2092, %v2092
    %v2716 = vmul.f32 %v2270, %v2270
    %v2717 = vmul.f32 %v2448, %v2448
    %v2718 = vmul.f32 %v1917, %v1917
    %v2719 = vmul.f32 %v2095, %v2095
    %v2720 = vmul.f32 %v2273, %v2273
    %v2721 = vmul.f32 %v2451, %v2451
    %v2722 = vmul.f32 %v1919, %v1919
    %v2723 = vmul.f32 %v2097, %v2097
    %v2724 = vmul.f32 %v2275, %v2275
    %v2725 = vmul.f32 %v2453, %v2453
    %v2726 = vmul.f32 %v1922, %v1922
    %v2727 = vmul.f32 %v2100, %v2100
    %v2728 = vmul.f32 %v2278, %v2278
    %v2729 = vmul.f32 %v2456, %v2456
    %v2730 = vmul.f32 %v1924, %v1924
    %v2731 = vmul.f32 %v2102, %v2102
    %v2732 = vmul.f32 %v2280, %v2280
    %v2733 = vmul.f32 %v2458, %v2458
    %v2734 = vmul.f32 %v1927, %v1927
    %v2735 = vmul.f32 %v2105, %v2105
    %v2736 = vmul.f32 %v2283, %v2283
    %v2737 = vmul.f32 %v2461, %v2461
    %v2738 = vmul.f32 %v1929, %v1929
    %v2739 = vmul.f32 %v2107, %v2107
    %v2740 = vmul.f32 %v2285, %v2285
    %v2741 = vmul.f32 %v2463, %v2463
    %v2742 = vadd.f32 %v2614, %v2618
    %v2743 = vadd.f32 %v2742, %v2622
    %v2744 = vadd.f32 %v2743, %v2626
    %v2745 = vadd.f32 %v2744, %v2630
    %v2746 = vadd.f32 %v2745, %v2634
    %v2747 = vadd.f32 %v2746, %v2638
    %v2748 = vadd.f32 %v2747, %v2642
    %v2749 = vadd.f32 %v2748, %v2646
    %v2750 = vadd.f32 %v2749, %v2650
    %v2751 = vadd.f32 %v2750, %v2654
    %v2752 = vadd.f32 %v2751, %v2658
    %v2753 = vadd.f32 %v2752, %v2662
    %v2754 = vadd.f32 %v2753, %v2666
    %v2755 = vadd.f32 %v2754, %v2670
    %v2756 = vadd.f32 %v2755, %v2674
    %v2757 = vadd.f32 %v2756, %v2678
    %v2758 = vadd.f32 %v2757, %v2682
    %v2759 = vadd.f32 %v2758, %v2686
    %v2760 = vadd.f32 %v2759, %v2690
    %v2761 = vadd.f32 %v2760, %v2694
    %v2762 = vadd.f32 %v2761, %v2698
    %v2763 = vadd.f32 %v2762, %v2702
    %v2764 = vadd.f32 %v2763, %v2706
    %v2765 = vadd.f32 %v2764, %v2710
    %v2766 = vadd.f32 %v2765, %v2714
    %v2767 = vadd.f32 %v2766, %v2718
    %v2768 = vadd.f32 %v2767, %v2722
    %v2769 = vadd.f32 %v2768, %v2726
    %v2770 = vadd.f32 %v2769, %v2730
    %v2771 = vadd.f32 %v2770, %v2734
    %v2772 = vadd.f32 %v2771, %v2738
    %v2773 = vrot.slane %v2772, 4
    %v2774 = vadd.f32 %v2772, %v2773
    %v2775 = vrot.slane %v2774, 2
    %v2776 = vadd.f32 %v2774, %v2775
    %v2777 = vrot.slane %v2776, 1
    %v2778 = vadd.f32 %v2776, %v2777
    %v2779 = vadd.f32 %v2615, %v2619
    %v2780 = vadd.f32 %v2779, %v2623
    %v2781 = vadd.f32 %v2780, %v2627
    %v2782 = vadd.f32 %v2781, %v2631
    %v2783 = vadd.f32 %v2782, %v2635
    %v2784 = vadd.f32 %v2783, %v2639
    %v2785 = vadd.f32 %v2784, %v2643
    %v2786 = vadd.f32 %v2785, %v2647
    %v2787 = vadd.f32 %v2786, %v2651
    %v2788 = vadd.f32 %v2787, %v2655
    %v2789 = vadd.f32 %v2788, %v2659
    %v2790 = vadd.f32 %v2789, %v2663
    %v2791 = vadd.f32 %v2790, %v2667
    %v2792 = vadd.f32 %v2791, %v2671
    %v2793 = vadd.f32 %v2792, %v2675
    %v2794 = vadd.f32 %v2793, %v2679
    %v2795 = vadd.f32 %v2794, %v2683
    %v2796 = vadd.f32 %v2795, %v2687
    %v2797 = vadd.f32 %v2796, %v2691
    %v2798 = vadd.f32 %v2797, %v2695
    %v2799 = vadd.f32 %v2798, %v2699
    %v2800 = vadd.f32 %v2799, %v2703
    %v2801 = vadd.f32 %v2800, %v2707
    %v2802 = vadd.f32 %v2801, %v2711
    %v2803 = vadd.f32 %v2802, %v2715
    %v2804 = vadd.f32 %v2803, %v2719
    %v2805 = vadd.f32 %v2804, %v2723
    %v2806 = vadd.f32 %v2805, %v2727
    %v2807 = vadd.f32 %v2806, %v2731
    %v2808 = vadd.f32 %v2807, %v2735
    %v2809 = vadd.f32 %v2808, %v2739
    %v2810 = vrot.slane %v2809, 4
    %v2811 = vadd.f32 %v2809, %v2810
    %v2812 = vrot.slane %v2811, 2
    %v2813 = vadd.f32 %v2811, %v2812
    %v2814 = vrot.slane %v2813, 1
    %v2815 = vadd.f32 %v2813, %v2814
    %v2816 = vadd.f32 %v2616, %v2620
    %v2817 = vadd.f32 %v2816, %v2624
    %v2818 = vadd.f32 %v2817, %v2628
    %v2819 = vadd.f32 %v2818, %v2632
    %v2820 = vadd.f32 %v2819, %v2636
    %v2821 = vadd.f32 %v2820, %v2640
    %v2822 = vadd.f32 %v2821, %v2644
    %v2823 = vadd.f32 %v2822, %v2648
    %v2824 = vadd.f32 %v2823, %v2652
    %v2825 = vadd.f32 %v2824, %v2656
    %v2826 = vadd.f32 %v2825, %v2660
    %v2827 = vadd.f32 %v2826, %v2664
    %v2828 = vadd.f32 %v2827, %v2668
    %v2829 = vadd.f32 %v2828, %v2672
    %v2830 = vadd.f32 %v2829, %v2676
    %v2831 = vadd.f32 %v2830, %v2680
    %v2832 = vadd.f32 %v2831, %v2684
    %v2833 = vadd.f32 %v2832, %v2688
    %v2834 = vadd.f32 %v2833, %v2692
    %v2835 = vadd.f32 %v2834, %v2696
    %v2836 = vadd.f32 %v2835, %v2700
    %v2837 = vadd.f32 %v2836, %v2704
    %v2838 = vadd.f32 %v2837, %v2708
    %v2839 = vadd.f32 %v2838, %v2712
    %v2840 = vadd.f32 %v2839, %v2716
    %v2841 = vadd.f32 %v2840, %v2720
    %v2842 = vadd.f32 %v2841, %v2724
    %v2843 = vadd.f32 %v2842, %v2728
    %v2844 = vadd.f32 %v2843, %v2732
    %v2845 = vadd.f32 %v2844, %v2736
    %v2846 = vadd.f32 %v2845, %v2740
    %v2847 = vrot.slane %v2846, 4
    %v2848 = vadd.f32 %v2846, %v2847
    %v2849 = vrot.slane %v2848, 2
    %v2850 = vadd.f32 %v2848, %v2849
    %v2851 = vrot.slane %v2850, 1
    %v2852 = vadd.f32 %v2850, %v2851
    %v2853 = vadd.f32 %v2617, %v2621
    %v2854 = vadd.f32 %v2853, %v2625
    %v2855 = vadd.f32 %v2854, %v2629
    %v2856 = vadd.f32 %v2855, %v2633
    %v2857 = vadd.f32 %v2856, %v2637
    %v2858 = vadd.f32 %v2857, %v2641
    %v2859 = vadd.f32 %v2858, %v2645
    %v2860 = vadd.f32 %v2859, %v2649
    %v2861 = vadd.f32 %v2860, %v2653
    %v2862 = vadd.f32 %v2861, %v2657
    %v2863 = vadd.f32 %v2862, %v2661
    %v2864 = vadd.f32 %v2863, %v2665
    %v2865 = vadd.f32 %v2864, %v2669
    %v2866 = vadd.f32 %v2865, %v2673
    %v2867 = vadd.f32 %v2866, %v2677
    %v2868 = vadd.f32 %v2867, %v2681
    %v2869 = vadd.f32 %v2868, %v2685
    %v2870 = vadd.f32 %v2869, %v2689
    %v2871 = vadd.f32 %v2870, %v2693
    %v2872 = vadd.f32 %v2871, %v2697
    %v2873 = vadd.f32 %v2872, %v2701
    %v2874 = vadd.f32 %v2873, %v2705
    %v2875 = vadd.f32 %v2874, %v2709
    %v2876 = vadd.f32 %v2875, %v2713
    %v2877 = vadd.f32 %v2876, %v2717
    %v2878 = vadd.f32 %v2877, %v2721
    %v2879 = vadd.f32 %v2878, %v2725
    %v2880 = vadd.f32 %v2879, %v2729
    %v2881 = vadd.f32 %v2880, %v2733
    %v2882 = vadd.f32 %v2881, %v2737
    %v2883 = vadd.f32 %v2882, %v2741
    %v2884 = vrot.slane %v2883, 4
    %v2885 = vadd.f32 %v2883, %v2884
    %v2886 = vrot.slane %v2885, 2
    %v2887 = vadd.f32 %v2885, %v2886
    %v2888 = vrot.slane %v2887, 1
    %v2889 = vadd.f32 %v2887, %v2888
    %v2890 = vmul.f32 %v2502, 0.00390625
    %v2891 = vmul.f32 %v2539, 0.00390625
    %v2892 = vmul.f32 %v2576, 0.00390625
    %v2893 = vmul.f32 %v2613, 0.00390625
    %v2894 = vmul.f32 %v2778, 0.00390625
    %v2895 = vmul.f32 %v2815, 0.00390625
    %v2896 = vmul.f32 %v2852, 0.00390625
    %v2897 = vmul.f32 %v2889, 0.00390625
    %v2898 = vmul.f32 %v2890, %v2890
    %v2899 = vmul.f32 %v2891, %v2891
    %v2900 = vmul.f32 %v2892, %v2892
    %v2901 = vmul.f32 %v2893, %v2893
    %v2902 = vsub.f32 %v2894, %v2898
    %v2903 = vsub.f32 %v2895, %v2899
    %v2904 = vsub.f32 %v2896, %v2900
    %v2905 = vsub.f32 %v2897, %v2901
    %v2906 = vmax.f32 %v2902, 0.0
    %v2907 = vmax.f32 %v2903, 0.0
    %v2908 = vmax.f32 %v2904, 0.0
    %v2909 = vmax.f32 %v2905, 0.0
    %v2910 = vadd.f32 %v2906, 1e-05
    %v2911 = vadd.f32 %v2907, 1e-05
    %v2912 = vadd.f32 %v2908, 1e-05
    %v2913 = vadd.f32 %v2909, 1e-05
    %v2914 = vrsqrt.pop %v2910
    %v2915 = vmul.f32 %v2914, %v2910
    %v2916 = vmul.f32 %v2915, %v2914
    %v2917 = vmul.f32 0.5, %v2916
    %v2918 = vsub.f32 1.5, %v2917
    %v2919 = vmul.f32 %v2914, %v2918
    %vm2920 = vweird.f32 %v2910
    %vm2921 = vweird.f32 %v2914
    %vm2922 = vmor %vm2920, %vm2921
    %v2923 = vsel %vm2922, %v2914, %v2919
    %v2924 = vrsqrt.pop %v2911
    %v2925 = vmul.f32 %v2924, %v2911
    %v2926 = vmul.f32 %v2925, %v2924
    %v2927 = vmul.f32 0.5, %v2926
    %v2928 = vsub.f32 1.5, %v2927
    %v2929 = vmul.f32 %v2924, %v2928
    %vm2930 = vweird.f32 %v2911
    %vm2931 = vweird.f32 %v2924
    %vm2932 = vmor %vm2930, %vm2931
    %v2933 = vsel %vm2932, %v2924, %v2929
    %v2934 = vrsqrt.pop %v2912
    %v2935 = vmul.f32 %v2934, %v2912
    %v2936 = vmul.f32 %v2935, %v2934
    %v2937 = vmul.f32 0.5, %v2936
    %v2938 = vsub.f32 1.5, %v2937
    %v2939 = vmul.f32 %v2934, %v2938
    %vm2940 = vweird.f32 %v2912
    %vm2941 = vweird.f32 %v2934
    %vm2942 = vmor %vm2940, %vm2941
    %v2943 = vsel %vm2942, %v2934, %v2939
    %v2944 = vrsqrt.pop %v2913
    %v2945 = vmul.f32 %v2944, %v2913
    %v2946 = vmul.f32 %v2945, %v2944
    %v2947 = vmul.f32 0.5, %v2946
    %v2948 = vsub.f32 1.5, %v2947
    %v2949 = vmul.f32 %v2944, %v2948
    %vm2950 = vweird.f32 %v2913
    %vm2951 = vweird.f32 %v2944
    %vm2952 = vmor %vm2950, %vm2951
    %v2953 = vsel %vm2952, %v2944, %v2949
    %v2958 = vrot.slane %v2933, 6
    %v2959 = vrot.slane %v2943, 4
    %v2960 = vrot.slane %v2953, 2
    %v2961 = vsel %vm1118, %v2923, %v2958
    %vm2962 = vcmask 1045508
    %v2963 = vsel %vm2962, %v2959, %v2960
    %v2964 = vsel %vm260, %v2961, %v2963
    %v2966 = vmul.f32 %v2465, %v2964
    %v2968 = vperm.slane %v2966, 0
    %v2969 = vperm.slane %v2966, 2
    %v2970 = vperm.slane %v2966, 4
    %v2971 = vperm.slane %v2966, 6
    %v2976 = vmul.f32 %v2890, %v2968
    %v2977 = vmul.f32 %v2891, %v2969
    %v2978 = vmul.f32 %v2892, %v2970
    %v2979 = vmul.f32 %v2893, %v2971
    %v2984 = vrot.slane %v2977, 6
    %v2985 = vrot.slane %v2978, 4
    %v2986 = vrot.slane %v2979, 2
    %v2987 = vsel %vm1118, %v2976, %v2984
    %v2988 = vsel %vm2962, %v2985, %v2986
    %v2989 = vsel %vm260, %v2987, %v2988
    %v2990 = vrot.slane %v2989, 7
    %v2992 = vsub.f32 %v2465, %v2990
    %v2993 = vperm.slane %v2968, 0
    %v2994 = vperm.slane %v2969, 0
    %v2995 = vperm.slane %v2970, 0
    %v2996 = vperm.slane %v2971, 0
    %v2997 = vmul.f32 %v1852, %v2993
    %v2998 = vmul.f32 %v2030, %v2994
    %v2999 = vmul.f32 %v2208, %v2995
    %v3000 = vmul.f32 %v2386, %v2996
    %v3001 = vmul.f32 %v1854, %v2993
    %v3002 = vmul.f32 %v2032, %v2994
    %v3003 = vmul.f32 %v2210, %v2995
    %v3004 = vmul.f32 %v2388, %v2996
    %v3005 = vmul.f32 %v1857, %v2993
    %v3006 = vmul.f32 %v2035, %v2994
    %v3007 = vmul.f32 %v2213, %v2995
    %v3008 = vmul.f32 %v2391, %v2996
    %v3009 = vmul.f32 %v1859, %v2993
    %v3010 = vmul.f32 %v2037, %v2994
    %v3011 = vmul.f32 %v2215, %v2995
    %v3012 = vmul.f32 %v2393, %v2996
    %v3013 = vmul.f32 %v1862, %v2993
    %v3014 = vmul.f32 %v2040, %v2994
    %v3015 = vmul.f32 %v2218, %v2995
    %v3016 = vmul.f32 %v2396, %v2996
    %v3017 = vmul.f32 %v1864, %v2993
    %v3018 = vmul.f32 %v2042, %v2994
    %v3019 = vmul.f32 %v2220, %v2995
    %v3020 = vmul.f32 %v2398, %v2996
    %v3021 = vmul.f32 %v1867, %v2993
    %v3022 = vmul.f32 %v2045, %v2994
    %v3023 = vmul.f32 %v2223, %v2995
    %v3024 = vmul.f32 %v2401, %v2996
    %v3025 = vmul.f32 %v1869, %v2993
    %v3026 = vmul.f32 %v2047, %v2994
    %v3027 = vmul.f32 %v2225, %v2995
    %v3028 = vmul.f32 %v2403, %v2996
    %v3029 = vmul.f32 %v1872, %v2993
    %v3030 = vmul.f32 %v2050, %v2994
    %v3031 = vmul.f32 %v2228, %v2995
    %v3032 = vmul.f32 %v2406, %v2996
    %v3033 = vmul.f32 %v1874, %v2993
    %v3034 = vmul.f32 %v2052, %v2994
    %v3035 = vmul.f32 %v2230, %v2995
    %v3036 = vmul.f32 %v2408, %v2996
    %v3037 = vmul.f32 %v1877, %v2993
    %v3038 = vmul.f32 %v2055, %v2994
    %v3039 = vmul.f32 %v2233, %v2995
    %v3040 = vmul.f32 %v2411, %v2996
    %v3041 = vmul.f32 %v1879, %v2993
    %v3042 = vmul.f32 %v2057, %v2994
    %v3043 = vmul.f32 %v2235, %v2995
    %v3044 = vmul.f32 %v2413, %v2996
    %v3045 = vmul.f32 %v1882, %v2993
    %v3046 = vmul.f32 %v2060, %v2994
    %v3047 = vmul.f32 %v2238, %v2995
    %v3048 = vmul.f32 %v2416, %v2996
    %v3049 = vmul.f32 %v1884, %v2993
    %v3050 = vmul.f32 %v2062, %v2994
    %v3051 = vmul.f32 %v2240, %v2995
    %v3052 = vmul.f32 %v2418, %v2996
    %v3053 = vmul.f32 %v1887, %v2993
    %v3054 = vmul.f32 %v2065, %v2994
    %v3055 = vmul.f32 %v2243, %v2995
    %v3056 = vmul.f32 %v2421, %v2996
    %v3057 = vmul.f32 %v1889, %v2993
    %v3058 = vmul.f32 %v2067, %v2994
    %v3059 = vmul.f32 %v2245, %v2995
    %v3060 = vmul.f32 %v2423, %v2996
    %v3061 = vmul.f32 %v1892, %v2993
    %v3062 = vmul.f32 %v2070, %v2994
    %v3063 = vmul.f32 %v2248, %v2995
    %v3064 = vmul.f32 %v2426, %v2996
    %v3065 = vmul.f32 %v1894, %v2993
    %v3066 = vmul.f32 %v2072, %v2994
    %v3067 = vmul.f32 %v2250, %v2995
    %v3068 = vmul.f32 %v2428, %v2996
    %v3069 = vmul.f32 %v1897, %v2993
    %v3070 = vmul.f32 %v2075, %v2994
    %v3071 = vmul.f32 %v2253, %v2995
    %v3072 = vmul.f32 %v2431, %v2996
    %v3073 = vmul.f32 %v1899, %v2993
    %v3074 = vmul.f32 %v2077, %v2994
    %v3075 = vmul.f32 %v2255, %v2995
    %v3076 = vmul.f32 %v2433, %v2996
    %v3077 = vmul.f32 %v1902, %v2993
    %v3078 = vmul.f32 %v2080, %v2994
    %v3079 = vmul.f32 %v2258, %v2995
    %v3080 = vmul.f32 %v2436, %v2996
    %v3081 = vmul.f32 %v1904, %v2993
    %v3082 = vmul.f32 %v2082, %v2994
    %v3083 = vmul.f32 %v2260, %v2995
    %v3084 = vmul.f32 %v2438, %v2996
    %v3085 = vmul.f32 %v1907, %v2993
    %v3086 = vmul.f32 %v2085, %v2994
    %v3087 = vmul.f32 %v2263, %v2995
    %v3088 = vmul.f32 %v2441, %v2996
    %v3089 = vmul.f32 %v1909, %v2993
    %v3090 = vmul.f32 %v2087, %v2994
    %v3091 = vmul.f32 %v2265, %v2995
    %v3092 = vmul.f32 %v2443, %v2996
    %v3093 = vmul.f32 %v1912, %v2993
    %v3094 = vmul.f32 %v2090, %v2994
    %v3095 = vmul.f32 %v2268, %v2995
    %v3096 = vmul.f32 %v2446, %v2996
    %v3097 = vmul.f32 %v1914, %v2993
    %v3098 = vmul.f32 %v2092, %v2994
    %v3099 = vmul.f32 %v2270, %v2995
    %v3100 = vmul.f32 %v2448, %v2996
    %v3101 = vmul.f32 %v1917, %v2993
    %v3102 = vmul.f32 %v2095, %v2994
    %v3103 = vmul.f32 %v2273, %v2995
    %v3104 = vmul.f32 %v2451, %v2996
    %v3105 = vmul.f32 %v1919, %v2993
    %v3106 = vmul.f32 %v2097, %v2994
    %v3107 = vmul.f32 %v2275, %v2995
    %v3108 = vmul.f32 %v2453, %v2996
    %v3109 = vmul.f32 %v1922, %v2993
    %v3110 = vmul.f32 %v2100, %v2994
    %v3111 = vmul.f32 %v2278, %v2995
    %v3112 = vmul.f32 %v2456, %v2996
    %v3113 = vmul.f32 %v1924, %v2993
    %v3114 = vmul.f32 %v2102, %v2994
    %v3115 = vmul.f32 %v2280, %v2995
    %v3116 = vmul.f32 %v2458, %v2996
    %v3117 = vmul.f32 %v1927, %v2993
    %v3118 = vmul.f32 %v2105, %v2994
    %v3119 = vmul.f32 %v2283, %v2995
    %v3120 = vmul.f32 %v2461, %v2996
    %v3121 = vmul.f32 %v1929, %v2993
    %v3122 = vmul.f32 %v2107, %v2994
    %v3123 = vmul.f32 %v2285, %v2995
    %v3124 = vmul.f32 %v2463, %v2996
    %v3126 = vperm.slane %v2992, 1
    %v3127 = vperm.slane %v2992, 3
    %v3128 = vperm.slane %v2992, 5
    %v3129 = vperm.slane %v2992, 7
    %v3134 = vperm.slane %v3126, 1
    %v3135 = vperm.slane %v3127, 1
    %v3136 = vperm.slane %v3128, 1
    %v3137 = vperm.slane %v3129, 1
    %v3138 = vadd.f32 %v2997, %v3134
    %v3139 = vadd.f32 %v2998, %v3135
    %v3140 = vadd.f32 %v2999, %v3136
    %v3141 = vadd.f32 %v3000, %v3137
    %v3142 = vadd.f32 %v3001, %v3134
    %v3143 = vadd.f32 %v3002, %v3135
    %v3144 = vadd.f32 %v3003, %v3136
    %v3145 = vadd.f32 %v3004, %v3137
    %v3146 = vadd.f32 %v3005, %v3134
    %v3147 = vadd.f32 %v3006, %v3135
    %v3148 = vadd.f32 %v3007, %v3136
    %v3149 = vadd.f32 %v3008, %v3137
    %v3150 = vadd.f32 %v3009, %v3134
    %v3151 = vadd.f32 %v3010, %v3135
    %v3152 = vadd.f32 %v3011, %v3136
    %v3153 = vadd.f32 %v3012, %v3137
    %v3154 = vadd.f32 %v3013, %v3134
    %v3155 = vadd.f32 %v3014, %v3135
    %v3156 = vadd.f32 %v3015, %v3136
    %v3157 = vadd.f32 %v3016, %v3137
    %v3158 = vadd.f32 %v3017, %v3134
    %v3159 = vadd.f32 %v3018, %v3135
    %v3160 = vadd.f32 %v3019, %v3136
    %v3161 = vadd.f32 %v3020, %v3137
    %v3162 = vadd.f32 %v3021, %v3134
    %v3163 = vadd.f32 %v3022, %v3135
    %v3164 = vadd.f32 %v3023, %v3136
    %v3165 = vadd.f32 %v3024, %v3137
    %v3166 = vadd.f32 %v3025, %v3134
    %v3167 = vadd.f32 %v3026, %v3135
    %v3168 = vadd.f32 %v3027, %v3136
    %v3169 = vadd.f32 %v3028, %v3137
    %v3170 = vadd.f32 %v3029, %v3134
    %v3171 = vadd.f32 %v3030, %v3135
    %v3172 = vadd.f32 %v3031, %v3136
    %v3173 = vadd.f32 %v3032, %v3137
    %v3174 = vadd.f32 %v3033, %v3134
    %v3175 = vadd.f32 %v3034, %v3135
    %v3176 = vadd.f32 %v3035, %v3136
    %v3177 = vadd.f32 %v3036, %v3137
    %v3178 = vadd.f32 %v3037, %v3134
    %v3179 = vadd.f32 %v3038, %v3135
    %v3180 = vadd.f32 %v3039, %v3136
    %v3181 = vadd.f32 %v3040, %v3137
    %v3182 = vadd.f32 %v3041, %v3134
    %v3183 = vadd.f32 %v3042, %v3135
    %v3184 = vadd.f32 %v3043, %v3136
    %v3185 = vadd.f32 %v3044, %v3137
    %v3186 = vadd.f32 %v3045, %v3134
    %v3187 = vadd.f32 %v3046, %v3135
    %v3188 = vadd.f32 %v3047, %v3136
    %v3189 = vadd.f32 %v3048, %v3137
    %v3190 = vadd.f32 %v3049, %v3134
    %v3191 = vadd.f32 %v3050, %v3135
    %v3192 = vadd.f32 %v3051, %v3136
    %v3193 = vadd.f32 %v3052, %v3137
    %v3194 = vadd.f32 %v3053, %v3134
    %v3195 = vadd.f32 %v3054, %v3135
    %v3196 = vadd.f32 %v3055, %v3136
    %v3197 = vadd.f32 %v3056, %v3137
    %v3198 = vadd.f32 %v3057, %v3134
    %v3199 = vadd.f32 %v3058, %v3135
    %v3200 = vadd.f32 %v3059, %v3136
    %v3201 = vadd.f32 %v3060, %v3137
    %v3202 = vadd.f32 %v3061, %v3134
    %v3203 = vadd.f32 %v3062, %v3135
    %v3204 = vadd.f32 %v3063, %v3136
    %v3205 = vadd.f32 %v3064, %v3137
    %v3206 = vadd.f32 %v3065, %v3134
    %v3207 = vadd.f32 %v3066, %v3135
    %v3208 = vadd.f32 %v3067, %v3136
    %v3209 = vadd.f32 %v3068, %v3137
    %v3210 = vadd.f32 %v3069, %v3134
    %v3211 = vadd.f32 %v3070, %v3135
    %v3212 = vadd.f32 %v3071, %v3136
    %v3213 = vadd.f32 %v3072, %v3137
    %v3214 = vadd.f32 %v3073, %v3134
    %v3215 = vadd.f32 %v3074, %v3135
    %v3216 = vadd.f32 %v3075, %v3136
    %v3217 = vadd.f32 %v3076, %v3137
    %v3218 = vadd.f32 %v3077, %v3134
    %v3219 = vadd.f32 %v3078, %v3135
    %v3220 = vadd.f32 %v3079, %v3136
    %v3221 = vadd.f32 %v3080, %v3137
    %v3222 = vadd.f32 %v3081, %v3134
    %v3223 = vadd.f32 %v3082, %v3135
    %v3224 = vadd.f32 %v3083, %v3136
    %v3225 = vadd.f32 %v3084, %v3137
    %v3226 = vadd.f32 %v3085, %v3134
    %v3227 = vadd.f32 %v3086, %v3135
    %v3228 = vadd.f32 %v3087, %v3136
    %v3229 = vadd.f32 %v3088, %v3137
    %v3230 = vadd.f32 %v3089, %v3134
    %v3231 = vadd.f32 %v3090, %v3135
    %v3232 = vadd.f32 %v3091, %v3136
    %v3233 = vadd.f32 %v3092, %v3137
    %v3234 = vadd.f32 %v3093, %v3134
    %v3235 = vadd.f32 %v3094, %v3135
    %v3236 = vadd.f32 %v3095, %v3136
    %v3237 = vadd.f32 %v3096, %v3137
    %v3238 = vadd.f32 %v3097, %v3134
    %v3239 = vadd.f32 %v3098, %v3135
    %v3240 = vadd.f32 %v3099, %v3136
    %v3241 = vadd.f32 %v3100, %v3137
    %v3242 = vadd.f32 %v3101, %v3134
    %v3243 = vadd.f32 %v3102, %v3135
    %v3244 = vadd.f32 %v3103, %v3136
    %v3245 = vadd.f32 %v3104, %v3137
    %v3246 = vadd.f32 %v3105, %v3134
    %v3247 = vadd.f32 %v3106, %v3135
    %v3248 = vadd.f32 %v3107, %v3136
    %v3249 = vadd.f32 %v3108, %v3137
    %v3250 = vadd.f32 %v3109, %v3134
    %v3251 = vadd.f32 %v3110, %v3135
    %v3252 = vadd.f32 %v3111, %v3136
    %v3253 = vadd.f32 %v3112, %v3137
    %v3254 = vadd.f32 %v3113, %v3134
    %v3255 = vadd.f32 %v3114, %v3135
    %v3256 = vadd.f32 %v3115, %v3136
    %v3257 = vadd.f32 %v3116, %v3137
    %v3258 = vadd.f32 %v3117, %v3134
    %v3259 = vadd.f32 %v3118, %v3135
    %v3260 = vadd.f32 %v3119, %v3136
    %v3261 = vadd.f32 %v3120, %v3137
    %v3262 = vadd.f32 %v3121, %v3134
    %v3263 = vadd.f32 %v3122, %v3135
    %v3264 = vadd.f32 %v3123, %v3136
    %v3265 = vadd.f32 %v3124, %v3137
    %v3266 = vmax.f32 %v3138, 0.0
    %v3267 = vmax.f32 %v3139, 0.0
    %v3268 = vmax.f32 %v3140, 0.0
    %v3269 = vmax.f32 %v3141, 0.0
    %v3270 = vmax.f32 %v3142, 0.0
    %v3271 = vmax.f32 %v3143, 0.0
    %v3272 = vmax.f32 %v3144, 0.0
    %v3273 = vmax.f32 %v3145, 0.0
    %v3274 = vmax.f32 %v3146, 0.0
    %v3275 = vmax.f32 %v3147, 0.0
    %v3276 = vmax.f32 %v3148, 0.0
    %v3277 = vmax.f32 %v3149, 0.0
    %v3278 = vmax.f32 %v3150, 0.0
    %v3279 = vmax.f32 %v3151, 0.0
    %v3280 = vmax.f32 %v3152, 0.0
    %v3281 = vmax.f32 %v3153, 0.0
    %v3282 = vmax.f32 %v3154, 0.0
    %v3283 = vmax.f32 %v3155, 0.0
    %v3284 = vmax.f32 %v3156, 0.0
    %v3285 = vmax.f32 %v3157, 0.0
    %v3286 = vmax.f32 %v3158, 0.0
    %v3287 = vmax.f32 %v3159, 0.0
    %v3288 = vmax.f32 %v3160, 0.0
    %v3289 = vmax.f32 %v3161, 0.0
    %v3290 = vmax.f32 %v3162, 0.0
    %v3291 = vmax.f32 %v3163, 0.0
    %v3292 = vmax.f32 %v3164, 0.0
    %v3293 = vmax.f32 %v3165, 0.0
    %v3294 = vmax.f32 %v3166, 0.0
    %v3295 = vmax.f32 %v3167, 0.0
    %v3296 = vmax.f32 %v3168, 0.0
    %v3297 = vmax.f32 %v3169, 0.0
    %v3298 = vmax.f32 %v3170, 0.0
    %v3299 = vmax.f32 %v3171, 0.0
    %v3300 = vmax.f32 %v3172, 0.0
    %v3301 = vmax.f32 %v3173, 0.0
    %v3302 = vmax.f32 %v3174, 0.0
    %v3303 = vmax.f32 %v3175, 0.0
    %v3304 = vmax.f32 %v3176, 0.0
    %v3305 = vmax.f32 %v3177, 0.0
    %v3306 = vmax.f32 %v3178, 0.0
    %v3307 = vmax.f32 %v3179, 0.0
    %v3308 = vmax.f32 %v3180, 0.0
    %v3309 = vmax.f32 %v3181, 0.0
    %v3310 = vmax.f32 %v3182, 0.0
    %v3311 = vmax.f32 %v3183, 0.0
    %v3312 = vmax.f32 %v3184, 0.0
    %v3313 = vmax.f32 %v3185, 0.0
    %v3314 = vmax.f32 %v3186, 0.0
    %v3315 = vmax.f32 %v3187, 0.0
    %v3316 = vmax.f32 %v3188, 0.0
    %v3317 = vmax.f32 %v3189, 0.0
    %v3318 = vmax.f32 %v3190, 0.0
    %v3319 = vmax.f32 %v3191, 0.0
    %v3320 = vmax.f32 %v3192, 0.0
    %v3321 = vmax.f32 %v3193, 0.0
    %v3322 = vmax.f32 %v3194, 0.0
    %v3323 = vmax.f32 %v3195, 0.0
    %v3324 = vmax.f32 %v3196, 0.0
    %v3325 = vmax.f32 %v3197, 0.0
    %v3326 = vmax.f32 %v3198, 0.0
    %v3327 = vmax.f32 %v3199, 0.0
    %v3328 = vmax.f32 %v3200, 0.0
    %v3329 = vmax.f32 %v3201, 0.0
    %v3330 = vmax.f32 %v3202, 0.0
    %v3331 = vmax.f32 %v3203, 0.0
    %v3332 = vmax.f32 %v3204, 0.0
    %v3333 = vmax.f32 %v3205, 0.0
    %v3334 = vmax.f32 %v3206, 0.0
    %v3335 = vmax.f32 %v3207, 0.0
    %v3336 = vmax.f32 %v3208, 0.0
    %v3337 = vmax.f32 %v3209, 0.0
    %v3338 = vmax.f32 %v3210, 0.0
    %v3339 = vmax.f32 %v3211, 0.0
    %v3340 = vmax.f32 %v3212, 0.0
    %v3341 = vmax.f32 %v3213, 0.0
    %v3342 = vmax.f32 %v3214, 0.0
    %v3343 = vmax.f32 %v3215, 0.0
    %v3344 = vmax.f32 %v3216, 0.0
    %v3345 = vmax.f32 %v3217, 0.0
    %v3346 = vmax.f32 %v3218, 0.0
    %v3347 = vmax.f32 %v3219, 0.0
    %v3348 = vmax.f32 %v3220, 0.0
    %v3349 = vmax.f32 %v3221, 0.0
    %v3350 = vmax.f32 %v3222, 0.0
    %v3351 = vmax.f32 %v3223, 0.0
    %v3352 = vmax.f32 %v3224, 0.0
    %v3353 = vmax.f32 %v3225, 0.0
    %v3354 = vmax.f32 %v3226, 0.0
    %v3355 = vmax.f32 %v3227, 0.0
    %v3356 = vmax.f32 %v3228, 0.0
    %v3357 = vmax.f32 %v3229, 0.0
    %v3358 = vmax.f32 %v3230, 0.0
    %v3359 = vmax.f32 %v3231, 0.0
    %v3360 = vmax.f32 %v3232, 0.0
    %v3361 = vmax.f32 %v3233, 0.0
    %v3362 = vmax.f32 %v3234, 0.0
    %v3363 = vmax.f32 %v3235, 0.0
    %v3364 = vmax.f32 %v3236, 0.0
    %v3365 = vmax.f32 %v3237, 0.0
    %v3366 = vmax.f32 %v3238, 0.0
    %v3367 = vmax.f32 %v3239, 0.0
    %v3368 = vmax.f32 %v3240, 0.0
    %v3369 = vmax.f32 %v3241, 0.0
    %v3370 = vmax.f32 %v3242, 0.0
    %v3371 = vmax.f32 %v3243, 0.0
    %v3372 = vmax.f32 %v3244, 0.0
    %v3373 = vmax.f32 %v3245, 0.0
    %v3374 = vmax.f32 %v3246, 0.0
    %v3375 = vmax.f32 %v3247, 0.0
    %v3376 = vmax.f32 %v3248, 0.0
    %v3377 = vmax.f32 %v3249, 0.0
    %v3378 = vmax.f32 %v3250, 0.0
    %v3379 = vmax.f32 %v3251, 0.0
    %v3380 = vmax.f32 %v3252, 0.0
    %v3381 = vmax.f32 %v3253, 0.0
    %v3382 = vmax.f32 %v3254, 0.0
    %v3383 = vmax.f32 %v3255, 0.0
    %v3384 = vmax.f32 %v3256, 0.0
    %v3385 = vmax.f32 %v3257, 0.0
    %v3386 = vmax.f32 %v3258, 0.0
    %v3387 = vmax.f32 %v3259, 0.0
    %v3388 = vmax.f32 %v3260, 0.0
    %v3389 = vmax.f32 %v3261, 0.0
    %v3390 = vmax.f32 %v3262, 0.0
    %v3391 = vmax.f32 %v3263, 0.0
    %v3392 = vmax.f32 %v3264, 0.0
    %v3393 = vmax.f32 %v3265, 0.0
    %v3394 = vpack.c.bf16 %v3270, %v3266
    %v3395 = vpack.c.bf16 %v3271, %v3267
    %v3396 = vpack.c.bf16 %v3272, %v3268
    %v3397 = vpack.c.bf16 %v3273, %v3269
    %v3398 = vpack.c.bf16 %v3278, %v3274
    %v3399 = vpack.c.bf16 %v3279, %v3275
    %v3400 = vpack.c.bf16 %v3280, %v3276
    %v3401 = vpack.c.bf16 %v3281, %v3277
    %v3402 = vpack.c.bf16 %v3286, %v3282
    %v3403 = vpack.c.bf16 %v3287, %v3283
    %v3404 = vpack.c.bf16 %v3288, %v3284
    %v3405 = vpack.c.bf16 %v3289, %v3285
    %v3406 = vpack.c.bf16 %v3294, %v3290
    %v3407 = vpack.c.bf16 %v3295, %v3291
    %v3408 = vpack.c.bf16 %v3296, %v3292
    %v3409 = vpack.c.bf16 %v3297, %v3293
    %v3410 = vpack.c.bf16 %v3302, %v3298
    %v3411 = vpack.c.bf16 %v3303, %v3299
    %v3412 = vpack.c.bf16 %v3304, %v3300
    %v3413 = vpack.c.bf16 %v3305, %v3301
    %v3414 = vpack.c.bf16 %v3310, %v3306
    %v3415 = vpack.c.bf16 %v3311, %v3307
    %v3416 = vpack.c.bf16 %v3312, %v3308
    %v3417 = vpack.c.bf16 %v3313, %v3309
    %v3418 = vpack.c.bf16 %v3318, %v3314
    %v3419 = vpack.c.bf16 %v3319, %v3315
    %v3420 = vpack.c.bf16 %v3320, %v3316
    %v3421 = vpack.c.bf16 %v3321, %v3317
    %v3422 = vpack.c.bf16 %v3326, %v3322
    %v3423 = vpack.c.bf16 %v3327, %v3323
    %v3424 = vpack.c.bf16 %v3328, %v3324
    %v3425 = vpack.c.bf16 %v3329, %v3325
    %v3426 = vpack.c.bf16 %v3334, %v3330
    %v3427 = vpack.c.bf16 %v3335, %v3331
    %v3428 = vpack.c.bf16 %v3336, %v3332
    %v3429 = vpack.c.bf16 %v3337, %v3333
    %v3430 = vpack.c.bf16 %v3342, %v3338
    %v3431 = vpack.c.bf16 %v3343, %v3339
    %v3432 = vpack.c.bf16 %v3344, %v3340
    %v3433 = vpack.c.bf16 %v3345, %v3341
    %v3434 = vpack.c.bf16 %v3350, %v3346
    %v3435 = vpack.c.bf16 %v3351, %v3347
    %v3436 = vpack.c.bf16 %v3352, %v3348
    %v3437 = vpack.c.bf16 %v3353, %v3349
    %v3438 = vpack.c.bf16 %v3358, %v3354
    %v3439 = vpack.c.bf16 %v3359, %v3355
    %v3440 = vpack.c.bf16 %v3360, %v3356
    %v3441 = vpack.c.bf16 %v3361, %v3357
    %v3442 = vpack.c.bf16 %v3366, %v3362
    %v3443 = vpack.c.bf16 %v3367, %v3363
    %v3444 = vpack.c.bf16 %v3368, %v3364
    %v3445 = vpack.c.bf16 %v3369, %v3365
    %v3446 = vpack.c.bf16 %v3374, %v3370
    %v3447 = vpack.c.bf16 %v3375, %v3371
    %v3448 = vpack.c.bf16 %v3376, %v3372
    %v3449 = vpack.c.bf16 %v3377, %v3373
    %v3450 = vpack.c.bf16 %v3382, %v3378
    %v3451 = vpack.c.bf16 %v3383, %v3379
    %v3452 = vpack.c.bf16 %v3384, %v3380
    %v3453 = vpack.c.bf16 %v3385, %v3381
    %v3454 = vpack.c.bf16 %v3390, %v3386
    %v3455 = vpack.c.bf16 %v3391, %v3387
    %v3456 = vpack.c.bf16 %v3392, %v3388
    %v3457 = vpack.c.bf16 %v3393, %v3389
    %v3458 = vld [vmem:[#allocation10] sm:$0xf]
    %v3459 = vld [vmem:[#allocation10 + $0x4] sm:$0xf]
    %v3460 = vld [vmem:[#allocation10 + $0x8] sm:$0xf]
    %v3461 = vld [vmem:[#allocation10 + $0xc] sm:$0xf]
    %v3462 = vld [vmem:[#allocation10 + $0x10] sm:$0xf]
    %v3463 = vld [vmem:[#allocation10 + $0x14] sm:$0xf]
    %v3464 = vld [vmem:[#allocation10 + $0x18] sm:$0xf]
    %v3465 = vld [vmem:[#allocation10 + $0x1c] sm:$0xf]
    %v3466 = vld [vmem:[#allocation10 + $0x20] sm:$0xf]
    %v3467 = vld [vmem:[#allocation10 + $0x24] sm:$0xf]
    %v3468 = vld [vmem:[#allocation10 + $0x28] sm:$0xf]
    %v3469 = vld [vmem:[#allocation10 + $0x2c] sm:$0xf]
    %v3470 = vld [vmem:[#allocation10 + $0x30] sm:$0xf]
    %v3471 = vld [vmem:[#allocation10 + $0x34] sm:$0xf]
    %v3472 = vld [vmem:[#allocation10 + $0x38] sm:$0xf]
    %v3473 = vld [vmem:[#allocation10 + $0x3c] sm:$0xf]
    %v3474 = vld [vmem:[#allocation10 + $0x40] sm:$0xf]
    %v3475 = vld [vmem:[#allocation10 + $0x44] sm:$0xf]
    %v3476 = vld [vmem:[#allocation10 + $0x48] sm:$0xf]
    %v3477 = vld [vmem:[#allocation10 + $0x4c] sm:$0xf]
    %v3478 = vld [vmem:[#allocation10 + $0x50] sm:$0xf]
    %v3479 = vld [vmem:[#allocation10 + $0x54] sm:$0xf]
    %v3480 = vld [vmem:[#allocation10 + $0x58] sm:$0xf]
    %v3481 = vld [vmem:[#allocation10 + $0x5c] sm:$0xf]
    %v3482 = vld [vmem:[#allocation10 + $0x60] sm:$0xf]
    %v3483 = vld [vmem:[#allocation10 + $0x64] sm:$0xf]
    %v3484 = vld [vmem:[#allocation10 + $0x68] sm:$0xf]
    %v3485 = vld [vmem:[#allocation10 + $0x6c] sm:$0xf]
    %v3486 = vld [vmem:[#allocation10 + $0x70] sm:$0xf]
    %v3487 = vld [vmem:[#allocation10 + $0x74] sm:$0xf]
    %v3488 = vld [vmem:[#allocation10 + $0x78] sm:$0xf]
    %v3489 = vld [vmem:[#allocation10 + $0x7c] sm:$0xf]
    %v3490 = vld [vmem:[#allocation10 + $0x80] sm:$0xf]
    %v3491 = vld [vmem:[#allocation10 + $0x84] sm:$0xf]
    %v3492 = vld [vmem:[#allocation10 + $0x88] sm:$0xf]
    %v3493 = vld [vmem:[#allocation10 + $0x8c] sm:$0xf]
    %v3494 = vld [vmem:[#allocation10 + $0x90] sm:$0xf]
    %v3495 = vld [vmem:[#allocation10 + $0x94] sm:$0xf]
    %v3496 = vld [vmem:[#allocation10 + $0x98] sm:$0xf]
    %v3497 = vld [vmem:[#allocation10 + $0x9c] sm:$0xf]
    %v3498 = vld [vmem:[#allocation10 + $0xa0] sm:$0xf]
    %v3499 = vld [vmem:[#allocation10 + $0xa4] sm:$0xf]
    %v3500 = vld [vmem:[#allocation10 + $0xa8] sm:$0xf]
    %v3501 = vld [vmem:[#allocation10 + $0xac] sm:$0xf]
    %v3502 = vld [vmem:[#allocation10 + $0xb0] sm:$0xf]
    %v3503 = vld [vmem:[#allocation10 + $0xb4] sm:$0xf]
    %v3504 = vld [vmem:[#allocation10 + $0xb8] sm:$0xf]
    %v3505 = vld [vmem:[#allocation10 + $0xbc] sm:$0xf]
    %v3506 = vld [vmem:[#allocation10 + $0xc0] sm:$0xf]
    %v3507 = vld [vmem:[#allocation10 + $0xc4] sm:$0xf]
    %v3508 = vld [vmem:[#allocation10 + $0xc8] sm:$0xf]
    %v3509 = vld [vmem:[#allocation10 + $0xcc] sm:$0xf]
    %v3510 = vld [vmem:[#allocation10 + $0xd0] sm:$0xf]
    %v3511 = vld [vmem:[#allocation10 + $0xd4] sm:$0xf]
    %v3512 = vld [vmem:[#allocation10 + $0xd8] sm:$0xf]
    %v3513 = vld [vmem:[#allocation10 + $0xdc] sm:$0xf]
    %v3514 = vld [vmem:[#allocation10 + $0xe0] sm:$0xf]
    %v3515 = vld [vmem:[#allocation10 + $0xe4] sm:$0xf]
    %v3516 = vld [vmem:[#allocation10 + $0xe8] sm:$0xf]
    %v3517 = vld [vmem:[#allocation10 + $0xec] sm:$0xf]
    %v3518 = vld [vmem:[#allocation10 + $0xf0] sm:$0xf]
    %v3519 = vld [vmem:[#allocation10 + $0xf4] sm:$0xf]
    %v3520 = vld [vmem:[#allocation10 + $0xf8] sm:$0xf]
    %v3521 = vld [vmem:[#allocation10 + $0xfc] sm:$0xf]
    %v3586 = vunpack.c.l.b16 %v3458
    %v3587 = vunpack.c.l.b16 %v3459
    %v3588 = vunpack.c.l.b16 %v3460
    %v3589 = vunpack.c.l.b16 %v3461
    %v3590 = vunpack.c.l.b16 %v3462
    %v3591 = vunpack.c.l.b16 %v3463
    %v3592 = vunpack.c.l.b16 %v3464
    %v3593 = vunpack.c.l.b16 %v3465
    %v3594 = vunpack.c.l.b16 %v3466
    %v3595 = vunpack.c.l.b16 %v3467
    %v3596 = vunpack.c.l.b16 %v3468
    %v3597 = vunpack.c.l.b16 %v3469
    %v3598 = vunpack.c.l.b16 %v3470
    %v3599 = vunpack.c.l.b16 %v3471
    %v3600 = vunpack.c.l.b16 %v3472
    %v3601 = vunpack.c.l.b16 %v3473
    %v3602 = vunpack.c.l.b16 %v3474
    %v3603 = vunpack.c.l.b16 %v3475
    %v3604 = vunpack.c.l.b16 %v3476
    %v3605 = vunpack.c.l.b16 %v3477
    %v3606 = vunpack.c.l.b16 %v3478
    %v3607 = vunpack.c.l.b16 %v3479
    %v3608 = vunpack.c.l.b16 %v3480
    %v3609 = vunpack.c.l.b16 %v3481
    %v3610 = vunpack.c.l.b16 %v3482
    %v3611 = vunpack.c.l.b16 %v3483
    %v3612 = vunpack.c.l.b16 %v3484
    %v3613 = vunpack.c.l.b16 %v3485
    %v3614 = vunpack.c.l.b16 %v3486
    %v3615 = vunpack.c.l.b16 %v3487
    %v3616 = vunpack.c.l.b16 %v3488
    %v3617 = vunpack.c.l.b16 %v3489
    %v3618 = vunpack.c.l.b16 %v3490
    %v3619 = vunpack.c.l.b16 %v3491
    %v3620 = vunpack.c.l.b16 %v3492
    %v3621 = vunpack.c.l.b16 %v3493
    %v3622 = vunpack.c.l.b16 %v3494
    %v3623 = vunpack.c.l.b16 %v3495
    %v3624 = vunpack.c.l.b16 %v3496
    %v3625 = vunpack.c.l.b16 %v3497
    %v3626 = vunpack.c.l.b16 %v3498
    %v3627 = vunpack.c.l.b16 %v3499
    %v3628 = vunpack.c.l.b16 %v3500
    %v3629 = vunpack.c.l.b16 %v3501
    %v3630 = vunpack.c.l.b16 %v3502
    %v3631 = vunpack.c.l.b16 %v3503
    %v3632 = vunpack.c.l.b16 %v3504
    %v3633 = vunpack.c.l.b16 %v3505
    %v3634 = vunpack.c.l.b16 %v3506
    %v3635 = vunpack.c.l.b16 %v3507
    %v3636 = vunpack.c.l.b16 %v3508
    %v3637 = vunpack.c.l.b16 %v3509
    %v3638 = vunpack.c.l.b16 %v3510
    %v3639 = vunpack.c.l.b16 %v3511
    %v3640 = vunpack.c.l.b16 %v3512
    %v3641 = vunpack.c.l.b16 %v3513
    %v3642 = vunpack.c.l.b16 %v3514
    %v3643 = vunpack.c.l.b16 %v3515
    %v3644 = vunpack.c.l.b16 %v3516
    %v3645 = vunpack.c.l.b16 %v3517
    %v3646 = vunpack.c.l.b16 %v3518
    %v3647 = vunpack.c.l.b16 %v3519
    %v3648 = vunpack.c.l.b16 %v3520
    %v3649 = vunpack.c.l.b16 %v3521
    %v3650 = vpack.c.b16 %v3587, %v3586
    %v3651 = vpack.c.b16 %v3589, %v3588
    %v3652 = vpack.c.b16 %v3591, %v3590
    %v3653 = vpack.c.b16 %v3593, %v3592
    %v3654 = vpack.c.b16 %v3595, %v3594
    %v3655 = vpack.c.b16 %v3597, %v3596
    %v3656 = vpack.c.b16 %v3599, %v3598
    %v3657 = vpack.c.b16 %v3601, %v3600
    %v3658 = vpack.c.b16 %v3603, %v3602
    %v3659 = vpack.c.b16 %v3605, %v3604
    %v3660 = vpack.c.b16 %v3607, %v3606
    %v3661 = vpack.c.b16 %v3609, %v3608
    %v3662 = vpack.c.b16 %v3611, %v3610
    %v3663 = vpack.c.b16 %v3613, %v3612
    %v3664 = vpack.c.b16 %v3615, %v3614
    %v3665 = vpack.c.b16 %v3617, %v3616
    %v3666 = vpack.c.b16 %v3619, %v3618
    %v3667 = vpack.c.b16 %v3621, %v3620
    %v3668 = vpack.c.b16 %v3623, %v3622
    %v3669 = vpack.c.b16 %v3625, %v3624
    %v3670 = vpack.c.b16 %v3627, %v3626
    %v3671 = vpack.c.b16 %v3629, %v3628
    %v3672 = vpack.c.b16 %v3631, %v3630
    %v3673 = vpack.c.b16 %v3633, %v3632
    %v3674 = vpack.c.b16 %v3635, %v3634
    %v3675 = vpack.c.b16 %v3637, %v3636
    %v3676 = vpack.c.b16 %v3639, %v3638
    %v3677 = vpack.c.b16 %v3641, %v3640
    %v3678 = vpack.c.b16 %v3643, %v3642
    %v3679 = vpack.c.b16 %v3645, %v3644
    %v3680 = vpack.c.b16 %v3647, %v3646
    %v3681 = vpack.c.b16 %v3649, %v3648
    %3714 = vmatpush.bf16.msra.mxu0 %v3657
    %3715 = vmatpush.bf16.msra.mxu0 %v3656
    %3716 = vmatpush.bf16.msra.mxu0 %v3655
    %3717 = vmatpush.bf16.msra.mxu0 %v3654
    %3718 = vmatpush.bf16.msra.mxu0 %v3653
    %3719 = vmatpush.bf16.msra.mxu0 %v3652
    %3720 = vmatpush.bf16.msra.mxu0 %v3651
    %3721 = vmatpush.bf16.msra.mxu0 %v3650
    %3722 = vmatmul.bf16.gmra.mxu0 %v3394
    %v3723 = vpop.f32.mrf.mxu0
    %v3724 = vadd.f32 0.0, %v3723
    %v3725 = vpop.f32.mrf.mxu0
    %v3726 = vadd.f32 0.0, %v3725
    %3727 = vmatmul.bf16.gmra.mxu0 %v3398
    %v3728 = vpop.f32.mrf.mxu0
    %v3729 = vadd.f32 0.0, %v3728
    %v3730 = vpop.f32.mrf.mxu0
    %v3731 = vadd.f32 0.0, %v3730
    %3732 = vmatmul.bf16.gmra.mxu0 %v3402
    %v3733 = vpop.f32.mrf.mxu0
    %v3734 = vadd.f32 0.0, %v3733
    %v3735 = vpop.f32.mrf.mxu0
    %v3736 = vadd.f32 0.0, %v3735
    %3737 = vmatmul.bf16.gmra.mxu0 %v3406
    %v3738 = vpop.f32.mrf.mxu0
    %v3739 = vadd.f32 0.0, %v3738
    %v3740 = vpop.f32.mrf.mxu0
    %v3741 = vadd.f32 0.0, %v3740
    %3742 = vmatmul.bf16.gmra.mxu0 %v3410
    %v3743 = vpop.f32.mrf.mxu0
    %v3744 = vadd.f32 0.0, %v3743
    %v3745 = vpop.f32.mrf.mxu0
    %v3746 = vadd.f32 0.0, %v3745
    %3747 = vmatmul.bf16.gmra.mxu0 %v3414
    %v3748 = vpop.f32.mrf.mxu0
    %v3749 = vadd.f32 0.0, %v3748
    %v3750 = vpop.f32.mrf.mxu0
    %v3751 = vadd.f32 0.0, %v3750
    %3752 = vmatmul.bf16.gmra.mxu0 %v3418
    %v3753 = vpop.f32.mrf.mxu0
    %v3754 = vadd.f32 0.0, %v3753
    %v3755 = vpop.f32.mrf.mxu0
    %v3756 = vadd.f32 0.0, %v3755
    %3757 = vmatmul.bf16.gmra.mxu0 %v3422
    %v3758 = vpop.f32.mrf.mxu0
    %v3759 = vadd.f32 0.0, %v3758
    %v3760 = vpop.f32.mrf.mxu0
    %v3761 = vadd.f32 0.0, %v3760
    %3762 = vmatmul.bf16.gmra.mxu0 %v3426
    %v3763 = vpop.f32.mrf.mxu0
    %v3764 = vadd.f32 0.0, %v3763
    %v3765 = vpop.f32.mrf.mxu0
    %v3766 = vadd.f32 0.0, %v3765
    %3767 = vmatmul.bf16.gmra.mxu0 %v3430
    %v3768 = vpop.f32.mrf.mxu0
    %v3769 = vadd.f32 0.0, %v3768
    %v3770 = vpop.f32.mrf.mxu0
    %v3771 = vadd.f32 0.0, %v3770
    %3772 = vmatmul.bf16.gmra.mxu0 %v3434
    %v3773 = vpop.f32.mrf.mxu0
    %v3774 = vadd.f32 0.0, %v3773
    %v3775 = vpop.f32.mrf.mxu0
    %v3776 = vadd.f32 0.0, %v3775
    %3777 = vmatmul.bf16.gmra.mxu0 %v3438
    %v3778 = vpop.f32.mrf.mxu0
    %v3779 = vadd.f32 0.0, %v3778
    %v3780 = vpop.f32.mrf.mxu0
    %v3781 = vadd.f32 0.0, %v3780
    %3782 = vmatmul.bf16.gmra.mxu0 %v3442
    %v3783 = vpop.f32.mrf.mxu0
    %v3784 = vadd.f32 0.0, %v3783
    %v3785 = vpop.f32.mrf.mxu0
    %v3786 = vadd.f32 0.0, %v3785
    %3787 = vmatmul.bf16.gmra.mxu0 %v3446
    %v3788 = vpop.f32.mrf.mxu0
    %v3789 = vadd.f32 0.0, %v3788
    %v3790 = vpop.f32.mrf.mxu0
    %v3791 = vadd.f32 0.0, %v3790
    %3792 = vmatmul.bf16.gmra.mxu0 %v3450
    %v3793 = vpop.f32.mrf.mxu0
    %v3794 = vadd.f32 0.0, %v3793
    %v3795 = vpop.f32.mrf.mxu0
    %v3796 = vadd.f32 0.0, %v3795
    %3797 = vmatmul.bf16.gmra.mxu0 %v3454
    %v3798 = vpop.f32.mrf.mxu0
    %v3799 = vadd.f32 0.0, %v3798
    %v3800 = vpop.f32.mrf.mxu0
    %v3801 = vadd.f32 0.0, %v3800
    %3802 = vdwg.mxu0
    %3803 = vmatpush.bf16.msra.mxu0 %v3665
    %3804 = vmatpush.bf16.msra.mxu0 %v3664
    %3805 = vmatpush.bf16.msra.mxu0 %v3663
    %3806 = vmatpush.bf16.msra.mxu0 %v3662
    %3807 = vmatpush.bf16.msra.mxu0 %v3661
    %3808 = vmatpush.bf16.msra.mxu0 %v3660
    %3809 = vmatpush.bf16.msra.mxu0 %v3659
    %3810 = vmatpush.bf16.msra.mxu0 %v3658
    %3811 = vmatmul.bf16.gmra.mxu0 %v3395
    %v3812 = vpop.f32.mrf.mxu0
    %v3813 = vadd.f32 %v3724, %v3812
    %v3814 = vpop.f32.mrf.mxu0
    %v3815 = vadd.f32 %v3726, %v3814
    %3816 = vmatmul.bf16.gmra.mxu0 %v3399
    %v3817 = vpop.f32.mrf.mxu0
    %v3818 = vadd.f32 %v3729, %v3817
    %v3819 = vpop.f32.mrf.mxu0
    %v3820 = vadd.f32 %v3731, %v3819
    %3821 = vmatmul.bf16.gmra.mxu0 %v3403
    %v3822 = vpop.f32.mrf.mxu0
    %v3823 = vadd.f32 %v3734, %v3822
    %v3824 = vpop.f32.mrf.mxu0
    %v3825 = vadd.f32 %v3736, %v3824
    %3826 = vmatmul.bf16.gmra.mxu0 %v3407
    %v3827 = vpop.f32.mrf.mxu0
    %v3828 = vadd.f32 %v3739, %v3827
    %v3829 = vpop.f32.mrf.mxu0
    %v3830 = vadd.f32 %v3741, %v3829
    %3831 = vmatmul.bf16.gmra.mxu0 %v3411
    %v3832 = vpop.f32.mrf.mxu0
    %v3833 = vadd.f32 %v3744, %v3832
    %v3834 = vpop.f32.mrf.mxu0
    %v3835 = vadd.f32 %v3746, %v3834
    %3836 = vmatmul.bf16.gmra.mxu0 %v3415
    %v3837 = vpop.f32.mrf.mxu0
    %v3838 = vadd.f32 %v3749, %v3837
    %v3839 = vpop.f32.mrf.mxu0
    %v3840 = vadd.f32 %v3751, %v3839
    %3841 = vmatmul.bf16.gmra.mxu0 %v3419
    %v3842 = vpop.f32.mrf.mxu0
    %v3843 = vadd.f32 %v3754, %v3842
    %v3844 = vpop.f32.mrf.mxu0
    %v3845 = vadd.f32 %v3756, %v3844
    %3846 = vmatmul.bf16.gmra.mxu0 %v3423
    %v3847 = vpop.f32.mrf.mxu0
    %v3848 = vadd.f32 %v3759, %v3847
    %v3849 = vpop.f32.mrf.mxu0
    %v3850 = vadd.f32 %v3761, %v3849
    %3851 = vmatmul.bf16.gmra.mxu0 %v3427
    %v3852 = vpop.f32.mrf.mxu0
    %v3853 = vadd.f32 %v3764, %v3852
    %v3854 = vpop.f32.mrf.mxu0
    %v3855 = vadd.f32 %v3766, %v3854
    %3856 = vmatmul.bf16.gmra.mxu0 %v3431
    %v3857 = vpop.f32.mrf.mxu0
    %v3858 = vadd.f32 %v3769, %v3857
    %v3859 = vpop.f32.mrf.mxu0
    %v3860 = vadd.f32 %v3771, %v3859
    %3861 = vmatmul.bf16.gmra.mxu0 %v3435
    %v3862 = vpop.f32.mrf.mxu0
    %v3863 = vadd.f32 %v3774, %v3862
    %v3864 = vpop.f32.mrf.mxu0
    %v3865 = vadd.f32 %v3776, %v3864
    %3866 = vmatmul.bf16.gmra.mxu0 %v3439
    %v3867 = vpop.f32.mrf.mxu0
    %v3868 = vadd.f32 %v3779, %v3867
    %v3869 = vpop.f32.mrf.mxu0
    %v3870 = vadd.f32 %v3781, %v3869
    %3871 = vmatmul.bf16.gmra.mxu0 %v3443
    %v3872 = vpop.f32.mrf.mxu0
    %v3873 = vadd.f32 %v3784, %v3872
    %v3874 = vpop.f32.mrf.mxu0
    %v3875 = vadd.f32 %v3786, %v3874
    %3876 = vmatmul.bf16.gmra.mxu0 %v3447
    %v3877 = vpop.f32.mrf.mxu0
    %v3878 = vadd.f32 %v3789, %v3877
    %v3879 = vpop.f32.mrf.mxu0
    %v3880 = vadd.f32 %v3791, %v3879
    %3881 = vmatmul.bf16.gmra.mxu0 %v3451
    %v3882 = vpop.f32.mrf.mxu0
    %v3883 = vadd.f32 %v3794, %v3882
    %v3884 = vpop.f32.mrf.mxu0
    %v3885 = vadd.f32 %v3796, %v3884
    %3886 = vmatmul.bf16.gmra.mxu0 %v3455
    %v3887 = vpop.f32.mrf.mxu0
    %v3888 = vadd.f32 %v3799, %v3887
    %v3889 = vpop.f32.mrf.mxu0
    %v3890 = vadd.f32 %v3801, %v3889
    %3891 = vdwg.mxu0
    %3892 = vmatpush.bf16.msra.mxu0 %v3673
    %3893 = vmatpush.bf16.msra.mxu0 %v3672
    %3894 = vmatpush.bf16.msra.mxu0 %v3671
    %3895 = vmatpush.bf16.msra.mxu0 %v3670
    %3896 = vmatpush.bf16.msra.mxu0 %v3669
    %3897 = vmatpush.bf16.msra.mxu0 %v3668
    %3898 = vmatpush.bf16.msra.mxu0 %v3667
    %3899 = vmatpush.bf16.msra.mxu0 %v3666
    %3900 = vmatmul.bf16.gmra.mxu0 %v3396
    %v3901 = vpop.f32.mrf.mxu0
    %v3902 = vadd.f32 %v3813, %v3901
    %v3903 = vpop.f32.mrf.mxu0
    %v3904 = vadd.f32 %v3815, %v3903
    %3905 = vmatmul.bf16.gmra.mxu0 %v3400
    %v3906 = vpop.f32.mrf.mxu0
    %v3907 = vadd.f32 %v3818, %v3906
    %v3908 = vpop.f32.mrf.mxu0
    %v3909 = vadd.f32 %v3820, %v3908
    %3910 = vmatmul.bf16.gmra.mxu0 %v3404
    %v3911 = vpop.f32.mrf.mxu0
    %v3912 = vadd.f32 %v3823, %v3911
    %v3913 = vpop.f32.mrf.mxu0
    %v3914 = vadd.f32 %v3825, %v3913
    %3915 = vmatmul.bf16.gmra.mxu0 %v3408
    %v3916 = vpop.f32.mrf.mxu0
    %v3917 = vadd.f32 %v3828, %v3916
    %v3918 = vpop.f32.mrf.mxu0
    %v3919 = vadd.f32 %v3830, %v3918
    %3920 = vmatmul.bf16.gmra.mxu0 %v3412
    %v3921 = vpop.f32.mrf.mxu0
    %v3922 = vadd.f32 %v3833, %v3921
    %v3923 = vpop.f32.mrf.mxu0
    %v3924 = vadd.f32 %v3835, %v3923
    %3925 = vmatmul.bf16.gmra.mxu0 %v3416
    %v3926 = vpop.f32.mrf.mxu0
    %v3927 = vadd.f32 %v3838, %v3926
    %v3928 = vpop.f32.mrf.mxu0
    %v3929 = vadd.f32 %v3840, %v3928
    %3930 = vmatmul.bf16.gmra.mxu0 %v3420
    %v3931 = vpop.f32.mrf.mxu0
    %v3932 = vadd.f32 %v3843, %v3931
    %v3933 = vpop.f32.mrf.mxu0
    %v3934 = vadd.f32 %v3845, %v3933
    %3935 = vmatmul.bf16.gmra.mxu0 %v3424
    %v3936 = vpop.f32.mrf.mxu0
    %v3937 = vadd.f32 %v3848, %v3936
    %v3938 = vpop.f32.mrf.mxu0
    %v3939 = vadd.f32 %v3850, %v3938
    %3940 = vmatmul.bf16.gmra.mxu0 %v3428
    %v3941 = vpop.f32.mrf.mxu0
    %v3942 = vadd.f32 %v3853, %v3941
    %v3943 = vpop.f32.mrf.mxu0
    %v3944 = vadd.f32 %v3855, %v3943
    %3945 = vmatmul.bf16.gmra.mxu0 %v3432
    %v3946 = vpop.f32.mrf.mxu0
    %v3947 = vadd.f32 %v3858, %v3946
    %v3948 = vpop.f32.mrf.mxu0
    %v3949 = vadd.f32 %v3860, %v3948
    %3950 = vmatmul.bf16.gmra.mxu0 %v3436
    %v3951 = vpop.f32.mrf.mxu0
    %v3952 = vadd.f32 %v3863, %v3951
    %v3953 = vpop.f32.mrf.mxu0
    %v3954 = vadd.f32 %v3865, %v3953
    %3955 = vmatmul.bf16.gmra.mxu0 %v3440
    %v3956 = vpop.f32.mrf.mxu0
    %v3957 = vadd.f32 %v3868, %v3956
    %v3958 = vpop.f32.mrf.mxu0
    %v3959 = vadd.f32 %v3870, %v3958
    %3960 = vmatmul.bf16.gmra.mxu0 %v3444
    %v3961 = vpop.f32.mrf.mxu0
    %v3962 = vadd.f32 %v3873, %v3961
    %v3963 = vpop.f32.mrf.mxu0
    %v3964 = vadd.f32 %v3875, %v3963
    %3965 = vmatmul.bf16.gmra.mxu0 %v3448
    %v3966 = vpop.f32.mrf.mxu0
    %v3967 = vadd.f32 %v3878, %v3966
    %v3968 = vpop.f32.mrf.mxu0
    %v3969 = vadd.f32 %v3880, %v3968
    %3970 = vmatmul.bf16.gmra.mxu0 %v3452
    %v3971 = vpop.f32.mrf.mxu0
    %v3972 = vadd.f32 %v3883, %v3971
    %v3973 = vpop.f32.mrf.mxu0
    %v3974 = vadd.f32 %v3885, %v3973
    %3975 = vmatmul.bf16.gmra.mxu0 %v3456
    %v3976 = vpop.f32.mrf.mxu0
    %v3977 = vadd.f32 %v3888, %v3976
    %v3978 = vpop.f32.mrf.mxu0
    %v3979 = vadd.f32 %v3890, %v3978
    %3980 = vdwg.mxu0
    %3981 = vmatpush.bf16.msra.mxu0 %v3681
    %3982 = vmatpush.bf16.msra.mxu0 %v3680
    %3983 = vmatpush.bf16.msra.mxu0 %v3679
    %3984 = vmatpush.bf16.msra.mxu0 %v3678
    %3985 = vmatpush.bf16.msra.mxu0 %v3677
    %3986 = vmatpush.bf16.msra.mxu0 %v3676
    %3987 = vmatpush.bf16.msra.mxu0 %v3675
    %3988 = vmatpush.bf16.msra.mxu0 %v3674
    %3989 = vmatmul.bf16.gmra.mxu0 %v3397
    %v3990 = vpop.f32.mrf.mxu0
    %v3991 = vadd.f32 %v3902, %v3990
    %v3992 = vpop.f32.mrf.mxu0
    %v3993 = vadd.f32 %v3904, %v3992
    %3994 = vmatmul.bf16.gmra.mxu0 %v3401
    %v3995 = vpop.f32.mrf.mxu0
    %v3996 = vadd.f32 %v3907, %v3995
    %v3997 = vpop.f32.mrf.mxu0
    %v3998 = vadd.f32 %v3909, %v3997
    %3999 = vmatmul.bf16.gmra.mxu0 %v3405
    %v4000 = vpop.f32.mrf.mxu0
    %v4001 = vadd.f32 %v3912, %v4000
    %v4002 = vpop.f32.mrf.mxu0
    %v4003 = vadd.f32 %v3914, %v4002
    %4004 = vmatmul.bf16.gmra.mxu0 %v3409
    %v4005 = vpop.f32.mrf.mxu0
    %v4006 = vadd.f32 %v3917, %v4005
    %v4007 = vpop.f32.mrf.mxu0
    %v4008 = vadd.f32 %v3919, %v4007
    %4009 = vmatmul.bf16.gmra.mxu0 %v3413
    %v4010 = vpop.f32.mrf.mxu0
    %v4011 = vadd.f32 %v3922, %v4010
    %v4012 = vpop.f32.mrf.mxu0
    %v4013 = vadd.f32 %v3924, %v4012
    %4014 = vmatmul.bf16.gmra.mxu0 %v3417
    %v4015 = vpop.f32.mrf.mxu0
    %v4016 = vadd.f32 %v3927, %v4015
    %v4017 = vpop.f32.mrf.mxu0
    %v4018 = vadd.f32 %v3929, %v4017
    %4019 = vmatmul.bf16.gmra.mxu0 %v3421
    %v4020 = vpop.f32.mrf.mxu0
    %v4021 = vadd.f32 %v3932, %v4020
    %v4022 = vpop.f32.mrf.mxu0
    %v4023 = vadd.f32 %v3934, %v4022
    %4024 = vmatmul.bf16.gmra.mxu0 %v3425
    %v4025 = vpop.f32.mrf.mxu0
    %v4026 = vadd.f32 %v3937, %v4025
    %v4027 = vpop.f32.mrf.mxu0
    %v4028 = vadd.f32 %v3939, %v4027
    %4029 = vmatmul.bf16.gmra.mxu0 %v3429
    %v4030 = vpop.f32.mrf.mxu0
    %v4031 = vadd.f32 %v3942, %v4030
    %v4032 = vpop.f32.mrf.mxu0
    %v4033 = vadd.f32 %v3944, %v4032
    %4034 = vmatmul.bf16.gmra.mxu0 %v3433
    %v4035 = vpop.f32.mrf.mxu0
    %v4036 = vadd.f32 %v3947, %v4035
    %v4037 = vpop.f32.mrf.mxu0
    %v4038 = vadd.f32 %v3949, %v4037
    %4039 = vmatmul.bf16.gmra.mxu0 %v3437
    %v4040 = vpop.f32.mrf.mxu0
    %v4041 = vadd.f32 %v3952, %v4040
    %v4042 = vpop.f32.mrf.mxu0
    %v4043 = vadd.f32 %v3954, %v4042
    %4044 = vmatmul.bf16.gmra.mxu0 %v3441
    %v4045 = vpop.f32.mrf.mxu0
    %v4046 = vadd.f32 %v3957, %v4045
    %v4047 = vpop.f32.mrf.mxu0
    %v4048 = vadd.f32 %v3959, %v4047
    %4049 = vmatmul.bf16.gmra.mxu0 %v3445
    %v4050 = vpop.f32.mrf.mxu0
    %v4051 = vadd.f32 %v3962, %v4050
    %v4052 = vpop.f32.mrf.mxu0
    %v4053 = vadd.f32 %v3964, %v4052
    %4054 = vmatmul.bf16.gmra.mxu0 %v3449
    %v4055 = vpop.f32.mrf.mxu0
    %v4056 = vadd.f32 %v3967, %v4055
    %v4057 = vpop.f32.mrf.mxu0
    %v4058 = vadd.f32 %v3969, %v4057
    %4059 = vmatmul.bf16.gmra.mxu0 %v3453
    %v4060 = vpop.f32.mrf.mxu0
    %v4061 = vadd.f32 %v3972, %v4060
    %v4062 = vpop.f32.mrf.mxu0
    %v4063 = vadd.f32 %v3974, %v4062
    %4064 = vmatmul.bf16.gmra.mxu0 %v3457
    %v4065 = vpop.f32.mrf.mxu0
    %v4066 = vadd.f32 %v3977, %v4065
    %v4067 = vpop.f32.mrf.mxu0
    %v4068 = vadd.f32 %v3979, %v4067
    %4069 = vdwg.mxu0
    %v4070 = vld [vmem:[%s8] sm:$0x3]
    %v4071 = vadd.f32 %v3991, %v3993
    %v4072 = vadd.f32 %v4071, %v3996
    %v4073 = vadd.f32 %v4072, %v3998
    %v4074 = vadd.f32 %v4073, %v4001
    %v4075 = vadd.f32 %v4074, %v4003
    %v4076 = vadd.f32 %v4075, %v4006
    %v4077 = vadd.f32 %v4076, %v4008
    %v4078 = vadd.f32 %v4077, %v4011
    %v4079 = vadd.f32 %v4078, %v4013
    %v4080 = vadd.f32 %v4079, %v4016
    %v4081 = vadd.f32 %v4080, %v4018
    %v4082 = vadd.f32 %v4081, %v4021
    %v4083 = vadd.f32 %v4082, %v4023
    %v4084 = vadd.f32 %v4083, %v4026
    %v4085 = vadd.f32 %v4084, %v4028
    %v4086 = vadd.f32 %v4085, %v4031
    %v4087 = vadd.f32 %v4086, %v4033
    %v4088 = vadd.f32 %v4087, %v4036
    %v4089 = vadd.f32 %v4088, %v4038
    %v4090 = vadd.f32 %v4089, %v4041
    %v4091 = vadd.f32 %v4090, %v4043
    %v4092 = vadd.f32 %v4091, %v4046
    %v4093 = vadd.f32 %v4092, %v4048
    %v4094 = vadd.f32 %v4093, %v4051
    %v4095 = vadd.f32 %v4094, %v4053
    %v4096 = vadd.f32 %v4095, %v4056
    %v4097 = vadd.f32 %v4096, %v4058
    %v4098 = vadd.f32 %v4097, %v4061
    %v4099 = vadd.f32 %v4098, %v4063
    %v4100 = vadd.f32 %v4099, %v4066
    %v4101 = vadd.f32 %v4100, %v4068
    %v4102 = vrot.slane %v4101, 4
    %v4103 = vadd.f32 %v4101, %v4102
    %v4104 = vrot.slane %v4103, 2
    %v4105 = vadd.f32 %v4103, %v4104
    %v4106 = vrot.slane %v4105, 1
    %v4107 = vadd.f32 %v4105, %v4106
    %v4108 = vmul.f32 %v3991, %v3991
    %v4109 = vmul.f32 %v3993, %v3993
    %v4110 = vmul.f32 %v3996, %v3996
    %v4111 = vmul.f32 %v3998, %v3998
    %v4112 = vmul.f32 %v4001, %v4001
    %v4113 = vmul.f32 %v4003, %v4003
    %v4114 = vmul.f32 %v4006, %v4006
    %v4115 = vmul.f32 %v4008, %v4008
    %v4116 = vmul.f32 %v4011, %v4011
    %v4117 = vmul.f32 %v4013, %v4013
    %v4118 = vmul.f32 %v4016, %v4016
    %v4119 = vmul.f32 %v4018, %v4018
    %v4120 = vmul.f32 %v4021, %v4021
    %v4121 = vmul.f32 %v4023, %v4023
    %v4122 = vmul.f32 %v4026, %v4026
    %v4123 = vmul.f32 %v4028, %v4028
    %v4124 = vmul.f32 %v4031, %v4031
    %v4125 = vmul.f32 %v4033, %v4033
    %v4126 = vmul.f32 %v4036, %v4036
    %v4127 = vmul.f32 %v4038, %v4038
    %v4128 = vmul.f32 %v4041, %v4041
    %v4129 = vmul.f32 %v4043, %v4043
    %v4130 = vmul.f32 %v4046, %v4046
    %v4131 = vmul.f32 %v4048, %v4048
    %v4132 = vmul.f32 %v4051, %v4051
    %v4133 = vmul.f32 %v4053, %v4053
    %v4134 = vmul.f32 %v4056, %v4056
    %v4135 = vmul.f32 %v4058, %v4058
    %v4136 = vmul.f32 %v4061, %v4061
    %v4137 = vmul.f32 %v4063, %v4063
    %v4138 = vmul.f32 %v4066, %v4066
    %v4139 = vmul.f32 %v4068, %v4068
    %v4140 = vadd.f32 %v4108, %v4109
    %v4141 = vadd.f32 %v4140, %v4110
    %v4142 = vadd.f32 %v4141, %v4111
    %v4143 = vadd.f32 %v4142, %v4112
    %v4144 = vadd.f32 %v4143, %v4113
    %v4145 = vadd.f32 %v4144, %v4114
    %v4146 = vadd.f32 %v4145, %v4115
    %v4147 = vadd.f32 %v4146, %v4116
    %v4148 = vadd.f32 %v4147, %v4117
    %v4149 = vadd.f32 %v4148, %v4118
    %v4150 = vadd.f32 %v4149, %v4119
    %v4151 = vadd.f32 %v4150, %v4120
    %v4152 = vadd.f32 %v4151, %v4121
    %v4153 = vadd.f32 %v4152, %v4122
    %v4154 = vadd.f32 %v4153, %v4123
    %v4155 = vadd.f32 %v4154, %v4124
    %v4156 = vadd.f32 %v4155, %v4125
    %v4157 = vadd.f32 %v4156, %v4126
    %v4158 = vadd.f32 %v4157, %v4127
    %v4159 = vadd.f32 %v4158, %v4128
    %v4160 = vadd.f32 %v4159, %v4129
    %v4161 = vadd.f32 %v4160, %v4130
    %v4162 = vadd.f32 %v4161, %v4131
    %v4163 = vadd.f32 %v4162, %v4132
    %v4164 = vadd.f32 %v4163, %v4133
    %v4165 = vadd.f32 %v4164, %v4134
    %v4166 = vadd.f32 %v4165, %v4135
    %v4167 = vadd.f32 %v4166, %v4136
    %v4168 = vadd.f32 %v4167, %v4137
    %v4169 = vadd.f32 %v4168, %v4138
    %v4170 = vadd.f32 %v4169, %v4139
    %v4171 = vrot.slane %v4170, 4
    %v4172 = vadd.f32 %v4170, %v4171
    %v4173 = vrot.slane %v4172, 2
    %v4174 = vadd.f32 %v4172, %v4173
    %v4175 = vrot.slane %v4174, 1
    %v4176 = vadd.f32 %v4174, %v4175
    %v4177 = vmul.f32 %v4107, 0.00390625
    %v4178 = vmul.f32 %v4176, 0.00390625
    %v4179 = vmul.f32 %v4177, %v4177
    %v4180 = vsub.f32 %v4178, %v4179
    %v4181 = vmax.f32 %v4180, 0.0
    %v4182 = vadd.f32 %v4181, 1e-05
    %v4183 = vrsqrt.pop %v4182
    %v4184 = vmul.f32 %v4183, %v4182
    %v4185 = vmul.f32 %v4184, %v4183
    %v4186 = vmul.f32 0.5, %v4185
    %v4187 = vsub.f32 1.5, %v4186
    %v4188 = vmul.f32 %v4183, %v4187
    %vm4189 = vweird.f32 %v4182
    %vm4190 = vweird.f32 %v4183
    %vm4191 = vmor %vm4189, %vm4190
    %v4192 = vsel %vm4191, %v4183, %v4188
    %v4193 = vmul.f32 %v4070, %v4192
    %v4194 = vmul.f32 %v4177, %v4193
    %v4196 = vrot.slane %v4194, 7
    %v4198 = vsub.f32 %v4070, %v4196
    %v4199 = vmax.f32 %v3991, %v4001
    %v4200 = vmax.f32 %v3993, %v4003
    %v4201 = vmax.f32 %v3996, %v4006
    %v4202 = vmax.f32 %v3998, %v4008
    %v4203 = vmax.f32 %v4199, %v4200
    %v4204 = vmax.f32 %v4201, %v4202
    %v4205 = vmax.f32 %v4203, %v4204
    %v4206 = vrot.slane %v4205, 4
    %v4207 = vmax.f32 %v4205, %v4206
    %v4208 = vrot.slane %v4207, 2
    %v4209 = vmax.f32 %v4207, %v4208
    %v4210 = vrot.slane %v4209, 1
    %v4211 = vmax.f32 %v4209, %v4210
    %v4212 = vmax.f32 %v4011, %v4021
    %v4213 = vmax.f32 %v4013, %v4023
    %v4214 = vmax.f32 %v4016, %v4026
    %v4215 = vmax.f32 %v4018, %v4028
    %v4216 = vmax.f32 %v4212, %v4213
    %v4217 = vmax.f32 %v4214, %v4215
    %v4218 = vmax.f32 %v4216, %v4217
    %v4219 = vrot.slane %v4218, 4
    %v4220 = vmax.f32 %v4218, %v4219
    %v4221 = vrot.slane %v4220, 2
    %v4222 = vmax.f32 %v4220, %v4221
    %v4223 = vrot.slane %v4222, 1
    %v4224 = vmax.f32 %v4222, %v4223
    %v4225 = vmax.f32 %v4031, %v4041
    %v4226 = vmax.f32 %v4033, %v4043
    %v4227 = vmax.f32 %v4036, %v4046
    %v4228 = vmax.f32 %v4038, %v4048
    %v4229 = vmax.f32 %v4225, %v4226
    %v4230 = vmax.f32 %v4227, %v4228
    %v4231 = vmax.f32 %v4229, %v4230
    %v4232 = vrot.slane %v4231, 4
    %v4233 = vmax.f32 %v4231, %v4232
    %v4234 = vrot.slane %v4233, 2
    %v4235 = vmax.f32 %v4233, %v4234
    %v4236 = vrot.slane %v4235, 1
    %v4237 = vmax.f32 %v4235, %v4236
    %v4238 = vmax.f32 %v4051, %v4061
    %v4239 = vmax.f32 %v4053, %v4063
    %v4240 = vmax.f32 %v4056, %v4066
    %v4241 = vmax.f32 %v4058, %v4068
    %v4242 = vmax.f32 %v4238, %v4239
    %v4243 = vmax.f32 %v4240, %v4241
    %v4244 = vmax.f32 %v4242, %v4243
    %v4245 = vrot.slane %v4244, 4
    %v4246 = vmax.f32 %v4244, %v4245
    %v4247 = vrot.slane %v4246, 2
    %v4248 = vmax.f32 %v4246, %v4247
    %v4249 = vrot.slane %v4248, 1
    %v4250 = vmax.f32 %v4248, %v4249
    %vm4251 = vcmask 1040384
    %v4252 = vsel %vm4251, %v4211, %v4224
    %v4253 = vsel %vm1118, %v4252, %v4237
    %vm4254 = vcmask 1042432
    %v4255 = vsel %vm4254, %v4253, %v4250
    %v4256 = vperm.slane %v4193, 0
    %v4257 = vmul.f32 %v4255, %v4256
    %v4258 = vperm.slane %v4198, 1
    %v4259 = vadd.f32 %v4257, %v4258
    %v4260 = vld [vmem:[#allocation11] sm:$0xff]
    %v4261 = vld [vmem:[#allocation11 + $0x8] sm:$0xff]
    %v4262 = vld [vmem:[#allocation11 + $0x10] sm:$0xff]
    %v4263 = vld [vmem:[#allocation11 + $0x18] sm:$0xff]
    %v4264 = vld [vmem:[#allocation11 + $0x20] sm:$0xff]
    %v4265 = vld [vmem:[#allocation11 + $0x28] sm:$0xff]
    %v4266 = vld [vmem:[#allocation11 + $0x30] sm:$0xff]
    %v4267 = vld [vmem:[#allocation11 + $0x38] sm:$0xff]
    %v4268 = vld [vmem:[#allocation11 + $0x40] sm:$0xff]
    %v4269 = vld [vmem:[#allocation11 + $0x48] sm:$0xff]
    %v4270 = vld [vmem:[#allocation11 + $0x50] sm:$0xff]
    %v4271 = vld [vmem:[#allocation11 + $0x58] sm:$0xff]
    %v4272 = vld [vmem:[#allocation11 + $0x60] sm:$0xff]
    %v4273 = vld [vmem:[#allocation11 + $0x68] sm:$0xff]
    %v4274 = vld [vmem:[#allocation11 + $0x70] sm:$0xff]
    %v4275 = vld [vmem:[#allocation11 + $0x78] sm:$0xff]
    %v4276 = vld [vmem:[#allocation11 + $0x80] sm:$0xff]
    %v4277 = vld [vmem:[#allocation11 + $0x88] sm:$0xff]
    %v4278 = vld [vmem:[#allocation11 + $0x90] sm:$0xff]
    %v4279 = vld [vmem:[#allocation11 + $0x98] sm:$0xff]
    %v4280 = vld [vmem:[#allocation11 + $0xa0] sm:$0xff]
    %v4281 = vld [vmem:[#allocation11 + $0xa8] sm:$0xff]
    %v4282 = vld [vmem:[#allocation11 + $0xb0] sm:$0xff]
    %v4283 = vld [vmem:[#allocation11 + $0xb8] sm:$0xff]
    %v4284 = vld [vmem:[#allocation11 + $0xc0] sm:$0xff]
    %v4285 = vld [vmem:[#allocation11 + $0xc8] sm:$0xff]
    %v4286 = vld [vmem:[#allocation11 + $0xd0] sm:$0xff]
    %v4287 = vld [vmem:[#allocation11 + $0xd8] sm:$0xff]
    %v4288 = vld [vmem:[#allocation11 + $0xe0] sm:$0xff]
    %v4289 = vld [vmem:[#allocation11 + $0xe8] sm:$0xff]
    %v4290 = vld [vmem:[#allocation11 + $0xf0] sm:$0xff]
    %v4291 = vld [vmem:[#allocation11 + $0xf8] sm:$0xff]
    %v4292 = vld [vmem:[#allocation11 + $0x100] sm:$0xff]
    %v4293 = vld [vmem:[#allocation11 + $0x108] sm:$0xff]
    %v4294 = vld [vmem:[#allocation11 + $0x110] sm:$0xff]
    %v4295 = vld [vmem:[#allocation11 + $0x118] sm:$0xff]
    %v4296 = vld [vmem:[#allocation11 + $0x120] sm:$0xff]
    %v4297 = vld [vmem:[#allocation11 + $0x128] sm:$0xff]
    %v4298 = vld [vmem:[#allocation11 + $0x130] sm:$0xff]
    %v4299 = vld [vmem:[#allocation11 + $0x138] sm:$0xff]
    %v4300 = vld [vmem:[#allocation11 + $0x140] sm:$0xff]
    %v4301 = vld [vmem:[#allocation11 + $0x148] sm:$0xff]
    %v4302 = vld [vmem:[#allocation11 + $0x150] sm:$0xff]
    %v4303 = vld [vmem:[#allocation11 + $0x158] sm:$0xff]
    %v4304 = vld [vmem:[#allocation11 + $0x160] sm:$0xff]
    %v4305 = vld [vmem:[#allocation11 + $0x168] sm:$0xff]
    %v4306 = vld [vmem:[#allocation11 + $0x170] sm:$0xff]
    %v4307 = vld [vmem:[#allocation11 + $0x178] sm:$0xff]
    %v4308 = vld [vmem:[#allocation11 + $0x180] sm:$0xff]
    %v4309 = vld [vmem:[#allocation11 + $0x188] sm:$0xff]
    %v4310 = vld [vmem:[#allocation11 + $0x190] sm:$0xff]
    %v4311 = vld [vmem:[#allocation11 + $0x198] sm:$0xff]
    %v4312 = vld [vmem:[#allocation11 + $0x1a0] sm:$0xff]
    %v4313 = vld [vmem:[#allocation11 + $0x1a8] sm:$0xff]
    %v4314 = vld [vmem:[#allocation11 + $0x1b0] sm:$0xff]
    %v4315 = vld [vmem:[#allocation11 + $0x1b8] sm:$0xff]
    %v4316 = vld [vmem:[#allocation11 + $0x1c0] sm:$0xff]
    %v4317 = vld [vmem:[#allocation11 + $0x1c8] sm:$0xff]
    %v4318 = vld [vmem:[#allocation11 + $0x1d0] sm:$0xff]
    %v4319 = vld [vmem:[#allocation11 + $0x1d8] sm:$0xff]
    %v4320 = vld [vmem:[#allocation11 + $0x1e0] sm:$0xff]
    %v4321 = vld [vmem:[#allocation11 + $0x1e8] sm:$0xff]
    %v4322 = vld [vmem:[#allocation11 + $0x1f0] sm:$0xff]
    %v4323 = vld [vmem:[#allocation11 + $0x1f8] sm:$0xff]
    %4324 = vmatpush.msra.mxu0 %v4320
    %4325 = vmatpush.msra.mxu0 %v4316
    %4326 = vmatpush.msra.mxu0 %v4312
    %4327 = vmatpush.msra.mxu0 %v4308
    %4328 = vmatpush.msra.mxu0 %v4304
    %4329 = vmatpush.msra.mxu0 %v4300
    %4330 = vmatpush.msra.mxu0 %v4296
    %4331 = vmatpush.msra.mxu0 %v4292
    %4332 = vmatpush.msra.mxu0 %v4288
    %4333 = vmatpush.msra.mxu0 %v4284
    %4334 = vmatpush.msra.mxu0 %v4280
    %4335 = vmatpush.msra.mxu0 %v4276
    %4336 = vmatpush.msra.mxu0 %v4272
    %4337 = vmatpush.msra.mxu0 %v4268
    %4338 = vmatpush.msra.mxu0 %v4264
    %4339 = vmatpush.msra.mxu0 %v4260
    %4340 = vmatmul.f32.gmra.mxu0 %v4259
    %v4341 = vpop.f32.mrf.mxu0
    %v4342 = vadd.f32 0.0, %v4341
    %4343 = vdwg.mxu0
    %4344 = vmatpush.msra.mxu0 %v4321
    %4345 = vmatpush.msra.mxu0 %v4317
    %4346 = vmatpush.msra.mxu0 %v4313
    %4347 = vmatpush.msra.mxu0 %v4309
    %4348 = vmatpush.msra.mxu0 %v4305
    %4349 = vmatpush.msra.mxu0 %v4301
    %4350 = vmatpush.msra.mxu0 %v4297
    %4351 = vmatpush.msra.mxu0 %v4293
    %4352 = vmatpush.msra.mxu0 %v4289
    %4353 = vmatpush.msra.mxu0 %v4285
    %4354 = vmatpush.msra.mxu0 %v4281
    %4355 = vmatpush.msra.mxu0 %v4277
    %4356 = vmatpush.msra.mxu0 %v4273
    %4357 = vmatpush.msra.mxu0 %v4269
    %4358 = vmatpush.msra.mxu0 %v4265
    %4359 = vmatpush.msra.mxu0 %v4261
    %4360 = vmatmul.f32.gmra.mxu0 %v4259
    %v4361 = vpop.f32.mrf.mxu0
    %v4362 = vadd.f32 0.0, %v4361
    %4363 = vdwg.mxu0
    %4364 = vmatpush.msra.mxu0 %v4322
    %4365 = vmatpush.msra.mxu0 %v4318
    %4366 = vmatpush.msra.mxu0 %v4314
    %4367 = vmatpush.msra.mxu0 %v4310
    %4368 = vmatpush.msra.mxu0 %v4306
    %4369 = vmatpush.msra.mxu0 %v4302
    %4370 = vmatpush.msra.mxu0 %v4298
    %4371 = vmatpush.msra.mxu0 %v4294
    %4372 = vmatpush.msra.mxu0 %v4290
    %4373 = vmatpush.msra.mxu0 %v4286
    %4374 = vmatpush.msra.mxu0 %v4282
    %4375 = vmatpush.msra.mxu0 %v4278
    %4376 = vmatpush.msra.mxu0 %v4274
    %4377 = vmatpush.msra.mxu0 %v4270
    %4378 = vmatpush.msra.mxu0 %v4266
    %4379 = vmatpush.msra.mxu0 %v4262
    %4380 = vmatmul.f32.gmra.mxu0 %v4259
    %v4381 = vpop.f32.mrf.mxu0
    %v4382 = vadd.f32 0.0, %v4381
    %4383 = vdwg.mxu0
    %4384 = vmatpush.msra.mxu0 %v4323
    %4385 = vmatpush.msra.mxu0 %v4319
    %4386 = vmatpush.msra.mxu0 %v4315
    %4387 = vmatpush.msra.mxu0 %v4311
    %4388 = vmatpush.msra.mxu0 %v4307
    %4389 = vmatpush.msra.mxu0 %v4303
    %4390 = vmatpush.msra.mxu0 %v4299
    %4391 = vmatpush.msra.mxu0 %v4295
    %4392 = vmatpush.msra.mxu0 %v4291
    %4393 = vmatpush.msra.mxu0 %v4287
    %4394 = vmatpush.msra.mxu0 %v4283
    %4395 = vmatpush.msra.mxu0 %v4279
    %4396 = vmatpush.msra.mxu0 %v4275
    %4397 = vmatpush.msra.mxu0 %v4271
    %4398 = vmatpush.msra.mxu0 %v4267
    %4399 = vmatpush.msra.mxu0 %v4263
    %4400 = vmatmul.f32.gmra.mxu0 %v4259
    %v4401 = vpop.f32.mrf.mxu0
    %v4402 = vadd.f32 0.0, %v4401
    %4403 = vdwg.mxu0
    %v4404 = vld [vmem:[%s10] sm:$0xff]
    %v4405 = vsel %vm260, %v4342, 0.0
    %v4406 = vrot.slane %v4405, 4
    %v4407 = vadd.f32 %v4405, %v4406
    %v4408 = vrot.slane %v4407, 2
    %v4409 = vadd.f32 %v4407, %v4408
    %v4410 = vrot.slane %v4409, 1
    %v4411 = vadd.f32 %v4409, %v4410
    %v4412 = vsel %vm260, %v4362, 0.0
    %v4413 = vrot.slane %v4412, 4
    %v4414 = vadd.f32 %v4412, %v4413
    %v4415 = vrot.slane %v4414, 2
    %v4416 = vadd.f32 %v4414, %v4415
    %v4417 = vrot.slane %v4416, 1
    %v4418 = vadd.f32 %v4416, %v4417
    %v4419 = vsel %vm260, %v4382, 0.0
    %v4420 = vrot.slane %v4419, 4
    %v4421 = vadd.f32 %v4419, %v4420
    %v4422 = vrot.slane %v4421, 2
    %v4423 = vadd.f32 %v4421, %v4422
    %v4424 = vrot.slane %v4423, 1
    %v4425 = vadd.f32 %v4423, %v4424
    %v4426 = vsel %vm260, %v4402, 0.0
    %v4427 = vrot.slane %v4426, 4
    %v4428 = vadd.f32 %v4426, %v4427
    %v4429 = vrot.slane %v4428, 2
    %v4430 = vadd.f32 %v4428, %v4429
    %v4431 = vrot.slane %v4430, 1
    %v4432 = vadd.f32 %v4430, %v4431
    %v4433 = vmul.f32 %v4342, %v4342
    %v4434 = vmul.f32 %v4362, %v4362
    %v4435 = vmul.f32 %v4382, %v4382
    %v4436 = vmul.f32 %v4402, %v4402
    %v4437 = vsel %vm260, %v4433, 0.0
    %v4438 = vrot.slane %v4437, 4
    %v4439 = vadd.f32 %v4437, %v4438
    %v4440 = vrot.slane %v4439, 2
    %v4441 = vadd.f32 %v4439, %v4440
    %v4442 = vrot.slane %v4441, 1
    %v4443 = vadd.f32 %v4441, %v4442
    %v4444 = vsel %vm260, %v4434, 0.0
    %v4445 = vrot.slane %v4444, 4
    %v4446 = vadd.f32 %v4444, %v4445
    %v4447 = vrot.slane %v4446, 2
    %v4448 = vadd.f32 %v4446, %v4447
    %v4449 = vrot.slane %v4448, 1
    %v4450 = vadd.f32 %v4448, %v4449
    %v4451 = vsel %vm260, %v4435, 0.0
    %v4452 = vrot.slane %v4451, 4
    %v4453 = vadd.f32 %v4451, %v4452
    %v4454 = vrot.slane %v4453, 2
    %v4455 = vadd.f32 %v4453, %v4454
    %v4456 = vrot.slane %v4455, 1
    %v4457 = vadd.f32 %v4455, %v4456
    %v4458 = vsel %vm260, %v4436, 0.0
    %v4459 = vrot.slane %v4458, 4
    %v4460 = vadd.f32 %v4458, %v4459
    %v4461 = vrot.slane %v4460, 2
    %v4462 = vadd.f32 %v4460, %v4461
    %v4463 = vrot.slane %v4462, 1
    %v4464 = vadd.f32 %v4462, %v4463
    %v4465 = vmul.f32 %v4411, 0.25
    %v4466 = vmul.f32 %v4418, 0.25
    %v4467 = vmul.f32 %v4425, 0.25
    %v4468 = vmul.f32 %v4432, 0.25
    %v4469 = vmul.f32 %v4443, 0.25
    %v4470 = vmul.f32 %v4450, 0.25
    %v4471 = vmul.f32 %v4457, 0.25
    %v4472 = vmul.f32 %v4464, 0.25
    %v4473 = vmul.f32 %v4465, %v4465
    %v4474 = vmul.f32 %v4466, %v4466
    %v4475 = vmul.f32 %v4467, %v4467
    %v4476 = vmul.f32 %v4468, %v4468
    %v4477 = vsub.f32 %v4469, %v4473
    %v4478 = vsub.f32 %v4470, %v4474
    %v4479 = vsub.f32 %v4471, %v4475
    %v4480 = vsub.f32 %v4472, %v4476
    %v4481 = vmax.f32 %v4477, 0.0
    %v4482 = vmax.f32 %v4478, 0.0
    %v4483 = vmax.f32 %v4479, 0.0
    %v4484 = vmax.f32 %v4480, 0.0
    %v4485 = vadd.f32 %v4481, 1e-05
    %v4486 = vadd.f32 %v4482, 1e-05
    %v4487 = vadd.f32 %v4483, 1e-05
    %v4488 = vadd.f32 %v4484, 1e-05
    %v4489 = vrsqrt.pop %v4485
    %v4490 = vmul.f32 %v4489, %v4485
    %v4491 = vmul.f32 %v4490, %v4489
    %v4492 = vmul.f32 0.5, %v4491
    %v4493 = vsub.f32 1.5, %v4492
    %v4494 = vmul.f32 %v4489, %v4493
    %vm4495 = vweird.f32 %v4485
    %vm4496 = vweird.f32 %v4489
    %vm4497 = vmor %vm4495, %vm4496
    %v4498 = vsel %vm4497, %v4489, %v4494
    %v4499 = vrsqrt.pop %v4486
    %v4500 = vmul.f32 %v4499, %v4486
    %v4501 = vmul.f32 %v4500, %v4499
    %v4502 = vmul.f32 0.5, %v4501
    %v4503 = vsub.f32 1.5, %v4502
    %v4504 = vmul.f32 %v4499, %v4503
    %vm4505 = vweird.f32 %v4486
    %vm4506 = vweird.f32 %v4499
    %vm4507 = vmor %vm4505, %vm4506
    %v4508 = vsel %vm4507, %v4499, %v4504
    %v4509 = vrsqrt.pop %v4487
    %v4510 = vmul.f32 %v4509, %v4487
    %v4511 = vmul.f32 %v4510, %v4509
    %v4512 = vmul.f32 0.5, %v4511
    %v4513 = vsub.f32 1.5, %v4512
    %v4514 = vmul.f32 %v4509, %v4513
    %vm4515 = vweird.f32 %v4487
    %vm4516 = vweird.f32 %v4509
    %vm4517 = vmor %vm4515, %vm4516
    %v4518 = vsel %vm4517, %v4509, %v4514
    %v4519 = vrsqrt.pop %v4488
    %v4520 = vmul.f32 %v4519, %v4488
    %v4521 = vmul.f32 %v4520, %v4519
    %v4522 = vmul.f32 0.5, %v4521
    %v4523 = vsub.f32 1.5, %v4522
    %v4524 = vmul.f32 %v4519, %v4523
    %vm4525 = vweird.f32 %v4488
    %vm4526 = vweird.f32 %v4519
    %vm4527 = vmor %vm4525, %vm4526
    %v4528 = vsel %vm4527, %v4519, %v4524
    %v4533 = vrot.slane %v4508, 6
    %v4534 = vrot.slane %v4518, 4
    %v4535 = vrot.slane %v4528, 2
    %v4536 = vsel %vm1118, %v4498, %v4533
    %v4537 = vsel %vm2962, %v4534, %v4535
    %v4538 = vsel %vm260, %v4536, %v4537
    %v4540 = vmul.f32 %v4404, %v4538
    %v4542 = vperm.slane %v4540, 0
    %v4543 = vperm.slane %v4540, 2
    %v4544 = vperm.slane %v4540, 4
    %v4545 = vperm.slane %v4540, 6
    %v4550 = vmul.f32 %v4465, %v4542
    %v4551 = vmul.f32 %v4466, %v4543
    %v4552 = vmul.f32 %v4467, %v4544
    %v4553 = vmul.f32 %v4468, %v4545
    %v4558 = vrot.slane %v4551, 6
    %v4559 = vrot.slane %v4552, 4
    %v4560 = vrot.slane %v4553, 2
    %v4561 = vsel %vm1118, %v4550, %v4558
    %v4562 = vsel %vm2962, %v4559, %v4560
    %v4563 = vsel %vm260, %v4561, %v4562
    %v4564 = vrot.slane %v4563, 7
    %v4566 = vsub.f32 %v4404, %v4564
    %v4567 = vperm.slane %v4542, 0
    %v4568 = vperm.slane %v4543, 0
    %v4569 = vperm.slane %v4544, 0
    %v4570 = vperm.slane %v4545, 0
    %v4571 = vmul.f32 %v4342, %v4567
    %v4572 = vmul.f32 %v4362, %v4568
    %v4573 = vmul.f32 %v4382, %v4569
    %v4574 = vmul.f32 %v4402, %v4570
    %v4576 = vperm.slane %v4566, 1
    %v4577 = vperm.slane %v4566, 3
    %v4578 = vperm.slane %v4566, 5
    %v4579 = vperm.slane %v4566, 7
    %v4584 = vperm.slane %v4576, 1
    %v4585 = vperm.slane %v4577, 1
    %v4586 = vperm.slane %v4578, 1
    %v4587 = vperm.slane %v4579, 1
    %v4588 = vadd.f32 %v4571, %v4584
    %v4589 = vadd.f32 %v4572, %v4585
    %v4590 = vadd.f32 %v4573, %v4586
    %v4591 = vadd.f32 %v4574, %v4587
    %v4592 = vmax.f32 %v4588, 0.0
    %v4593 = vmax.f32 %v4589, 0.0
    %v4594 = vmax.f32 %v4590, 0.0
    %v4595 = vmax.f32 %v4591, 0.0
    %v4596 = vld [vmem:[#allocation13] sm:$0xff]
    %v4597 = vld [vmem:[#allocation13 + $0x8] sm:$0xff]
    %v4598 = vld [vmem:[#allocation13 + $0x10] sm:$0xff]
    %v4599 = vld [vmem:[#allocation13 + $0x18] sm:$0xff]
    %v4600 = vld [vmem:[#allocation13 + $0x20] sm:$0xff]
    %v4601 = vld [vmem:[#allocation13 + $0x28] sm:$0xff]
    %v4602 = vld [vmem:[#allocation13 + $0x30] sm:$0xff]
    %v4603 = vld [vmem:[#allocation13 + $0x38] sm:$0xff]
    %v4604 = vld [vmem:[#allocation13 + $0x40] sm:$0xff]
    %v4605 = vld [vmem:[#allocation13 + $0x48] sm:$0xff]
    %v4606 = vld [vmem:[#allocation13 + $0x50] sm:$0xff]
    %v4607 = vld [vmem:[#allocation13 + $0x58] sm:$0xff]
    %v4608 = vld [vmem:[#allocation13 + $0x60] sm:$0xff]
    %v4609 = vld [vmem:[#allocation13 + $0x68] sm:$0xff]
    %v4610 = vld [vmem:[#allocation13 + $0x70] sm:$0xff]
    %v4611 = vld [vmem:[#allocation13 + $0x78] sm:$0xff]
    %v4612 = vld [vmem:[#allocation13 + $0x80] sm:$0xff]
    %v4613 = vld [vmem:[#allocation13 + $0x88] sm:$0xff]
    %v4614 = vld [vmem:[#allocation13 + $0x90] sm:$0xff]
    %v4615 = vld [vmem:[#allocation13 + $0x98] sm:$0xff]
    %v4616 = vld [vmem:[#allocation13 + $0xa0] sm:$0xff]
    %v4617 = vld [vmem:[#allocation13 + $0xa8] sm:$0xff]
    %v4618 = vld [vmem:[#allocation13 + $0xb0] sm:$0xff]
    %v4619 = vld [vmem:[#allocation13 + $0xb8] sm:$0xff]
    %v4620 = vld [vmem:[#allocation13 + $0xc0] sm:$0xff]
    %v4621 = vld [vmem:[#allocation13 + $0xc8] sm:$0xff]
    %v4622 = vld [vmem:[#allocation13 + $0xd0] sm:$0xff]
    %v4623 = vld [vmem:[#allocation13 + $0xd8] sm:$0xff]
    %v4624 = vld [vmem:[#allocation13 + $0xe0] sm:$0xff]
    %v4625 = vld [vmem:[#allocation13 + $0xe8] sm:$0xff]
    %v4626 = vld [vmem:[#allocation13 + $0xf0] sm:$0xff]
    %v4627 = vld [vmem:[#allocation13 + $0xf8] sm:$0xff]
    %v4628 = vld [vmem:[#allocation13 + $0x100] sm:$0xff]
    %v4629 = vld [vmem:[#allocation13 + $0x108] sm:$0xff]
    %v4630 = vld [vmem:[#allocation13 + $0x110] sm:$0xff]
    %v4631 = vld [vmem:[#allocation13 + $0x118] sm:$0xff]
    %v4632 = vld [vmem:[#allocation13 + $0x120] sm:$0xff]
    %v4633 = vld [vmem:[#allocation13 + $0x128] sm:$0xff]
    %v4634 = vld [vmem:[#allocation13 + $0x130] sm:$0xff]
    %v4635 = vld [vmem:[#allocation13 + $0x138] sm:$0xff]
    %v4636 = vld [vmem:[#allocation13 + $0x140] sm:$0xff]
    %v4637 = vld [vmem:[#allocation13 + $0x148] sm:$0xff]
    %v4638 = vld [vmem:[#allocation13 + $0x150] sm:$0xff]
    %v4639 = vld [vmem:[#allocation13 + $0x158] sm:$0xff]
    %v4640 = vld [vmem:[#allocation13 + $0x160] sm:$0xff]
    %v4641 = vld [vmem:[#allocation13 + $0x168] sm:$0xff]
    %v4642 = vld [vmem:[#allocation13 + $0x170] sm:$0xff]
    %v4643 = vld [vmem:[#allocation13 + $0x178] sm:$0xff]
    %v4644 = vld [vmem:[#allocation13 + $0x180] sm:$0xff]
    %v4645 = vld [vmem:[#allocation13 + $0x188] sm:$0xff]
    %v4646 = vld [vmem:[#allocation13 + $0x190] sm:$0xff]
    %v4647 = vld [vmem:[#allocation13 + $0x198] sm:$0xff]
    %v4648 = vld [vmem:[#allocation13 + $0x1a0] sm:$0xff]
    %v4649 = vld [vmem:[#allocation13 + $0x1a8] sm:$0xff]
    %v4650 = vld [vmem:[#allocation13 + $0x1b0] sm:$0xff]
    %v4651 = vld [vmem:[#allocation13 + $0x1b8] sm:$0xff]
    %v4652 = vld [vmem:[#allocation13 + $0x1c0] sm:$0xff]
    %v4653 = vld [vmem:[#allocation13 + $0x1c8] sm:$0xff]
    %v4654 = vld [vmem:[#allocation13 + $0x1d0] sm:$0xff]
    %v4655 = vld [vmem:[#allocation13 + $0x1d8] sm:$0xff]
    %v4656 = vld [vmem:[#allocation13 + $0x1e0] sm:$0xff]
    %v4657 = vld [vmem:[#allocation13 + $0x1e8] sm:$0xff]
    %v4658 = vld [vmem:[#allocation13 + $0x1f0] sm:$0xff]
    %v4659 = vld [vmem:[#allocation13 + $0x1f8] sm:$0xff]
    %v4660 = vld [vmem:[#allocation13 + $0x200] sm:$0xff]
    %v4661 = vld [vmem:[#allocation13 + $0x208] sm:$0xff]
    %v4662 = vld [vmem:[#allocation13 + $0x210] sm:$0xff]
    %v4663 = vld [vmem:[#allocation13 + $0x218] sm:$0xff]
    %v4664 = vld [vmem:[#allocation13 + $0x220] sm:$0xff]
    %v4665 = vld [vmem:[#allocation13 + $0x228] sm:$0xff]
    %v4666 = vld [vmem:[#allocation13 + $0x230] sm:$0xff]
    %v4667 = vld [vmem:[#allocation13 + $0x238] sm:$0xff]
    %v4668 = vld [vmem:[#allocation13 + $0x240] sm:$0xff]
    %v4669 = vld [vmem:[#allocation13 + $0x248] sm:$0xff]
    %v4670 = vld [vmem:[#allocation13 + $0x250] sm:$0xff]
    %v4671 = vld [vmem:[#allocation13 + $0x258] sm:$0xff]
    %v4672 = vld [vmem:[#allocation13 + $0x260] sm:$0xff]
    %v4673 = vld [vmem:[#allocation13 + $0x268] sm:$0xff]
    %v4674 = vld [vmem:[#allocation13 + $0x270] sm:$0xff]
    %v4675 = vld [vmem:[#allocation13 + $0x278] sm:$0xff]
    %v4676 = vld [vmem:[#allocation13 + $0x280] sm:$0xff]
    %v4677 = vld [vmem:[#allocation13 + $0x288] sm:$0xff]
    %v4678 = vld [vmem:[#allocation13 + $0x290] sm:$0xff]
    %v4679 = vld [vmem:[#allocation13 + $0x298] sm:$0xff]
    %v4680 = vld [vmem:[#allocation13 + $0x2a0] sm:$0xff]
    %v4681 = vld [vmem:[#allocation13 + $0x2a8] sm:$0xff]
    %v4682 = vld [vmem:[#allocation13 + $0x2b0] sm:$0xff]
    %v4683 = vld [vmem:[#allocation13 + $0x2b8] sm:$0xff]
    %v4684 = vld [vmem:[#allocation13 + $0x2c0] sm:$0xff]
    %v4685 = vld [vmem:[#allocation13 + $0x2c8] sm:$0xff]
    %v4686 = vld [vmem:[#allocation13 + $0x2d0] sm:$0xff]
    %v4687 = vld [vmem:[#allocation13 + $0x2d8] sm:$0xff]
    %v4688 = vld [vmem:[#allocation13 + $0x2e0] sm:$0xff]
    %v4689 = vld [vmem:[#allocation13 + $0x2e8] sm:$0xff]
    %v4690 = vld [vmem:[#allocation13 + $0x2f0] sm:$0xff]
    %v4691 = vld [vmem:[#allocation13 + $0x2f8] sm:$0xff]
    %v4692 = vld [vmem:[#allocation13 + $0x300] sm:$0xff]
    %v4693 = vld [vmem:[#allocation13 + $0x308] sm:$0xff]
    %v4694 = vld [vmem:[#allocation13 + $0x310] sm:$0xff]
    %v4695 = vld [vmem:[#allocation13 + $0x318] sm:$0xff]
    %v4696 = vld [vmem:[#allocation13 + $0x320] sm:$0xff]
    %v4697 = vld [vmem:[#allocation13 + $0x328] sm:$0xff]
    %v4698 = vld [vmem:[#allocation13 + $0x330] sm:$0xff]
    %v4699 = vld [vmem:[#allocation13 + $0x338] sm:$0xff]
    %v4700 = vld [vmem:[#allocation13 + $0x340] sm:$0xff]
    %v4701 = vld [vmem:[#allocation13 + $0x348] sm:$0xff]
    %v4702 = vld [vmem:[#allocation13 + $0x350] sm:$0xff]
    %v4703 = vld [vmem:[#allocation13 + $0x358] sm:$0xff]
    %v4704 = vld [vmem:[#allocation13 + $0x360] sm:$0xff]
    %v4705 = vld [vmem:[#allocation13 + $0x368] sm:$0xff]
    %v4706 = vld [vmem:[#allocation13 + $0x370] sm:$0xff]
    %v4707 = vld [vmem:[#allocation13 + $0x378] sm:$0xff]
    %v4708 = vld [vmem:[#allocation13 + $0x380] sm:$0xff]
    %v4709 = vld [vmem:[#allocation13 + $0x388] sm:$0xff]
    %v4710 = vld [vmem:[#allocation13 + $0x390] sm:$0xff]
    %v4711 = vld [vmem:[#allocation13 + $0x398] sm:$0xff]
    %v4712 = vld [vmem:[#allocation13 + $0x3a0] sm:$0xff]
    %v4713 = vld [vmem:[#allocation13 + $0x3a8] sm:$0xff]
    %v4714 = vld [vmem:[#allocation13 + $0x3b0] sm:$0xff]
    %v4715 = vld [vmem:[#allocation13 + $0x3b8] sm:$0xff]
    %v4716 = vld [vmem:[#allocation13 + $0x3c0] sm:$0xff]
    %v4717 = vld [vmem:[#allocation13 + $0x3c8] sm:$0xff]
    %v4718 = vld [vmem:[#allocation13 + $0x3d0] sm:$0xff]
    %v4719 = vld [vmem:[#allocation13 + $0x3d8] sm:$0xff]
    %v4720 = vld [vmem:[#allocation13 + $0x3e0] sm:$0xff]
    %v4721 = vld [vmem:[#allocation13 + $0x3e8] sm:$0xff]
    %v4722 = vld [vmem:[#allocation13 + $0x3f0] sm:$0xff]
    %v4723 = vld [vmem:[#allocation13 + $0x3f8] sm:$0xff]
    %4724 = vmatpush.msra.mxu0 %v4626
    %4725 = vmatpush.msra.mxu0 %v4624
    %4726 = vmatpush.msra.mxu0 %v4622
    %4727 = vmatpush.msra.mxu0 %v4620
    %4728 = vmatpush.msra.mxu0 %v4618
    %4729 = vmatpush.msra.mxu0 %v4616
    %4730 = vmatpush.msra.mxu0 %v4614
    %4731 = vmatpush.msra.mxu0 %v4612
    %4732 = vmatpush.msra.mxu0 %v4610
    %4733 = vmatpush.msra.mxu0 %v4608
    %4734 = vmatpush.msra.mxu0 %v4606
    %4735 = vmatpush.msra.mxu0 %v4604
    %4736 = vmatpush.msra.mxu0 %v4602
    %4737 = vmatpush.msra.mxu0 %v4600
    %4738 = vmatpush.msra.mxu0 %v4598
    %4739 = vmatpush.msra.mxu0 %v4596
    %4740 = vmatmul.f32.gmra.mxu0 %v4592
    %v4741 = vpop.f32.mrf.mxu0
    %v4742 = vadd.f32 0.0, %v4741
    %4743 = vdwg.mxu0
    %4744 = vmatpush.msra.mxu0 %v4658
    %4745 = vmatpush.msra.mxu0 %v4656
    %4746 = vmatpush.msra.mxu0 %v4654
    %4747 = vmatpush.msra.mxu0 %v4652
    %4748 = vmatpush.msra.mxu0 %v4650
    %4749 = vmatpush.msra.mxu0 %v4648
    %4750 = vmatpush.msra.mxu0 %v4646
    %4751 = vmatpush.msra.mxu0 %v4644
    %4752 = vmatpush.msra.mxu0 %v4642
    %4753 = vmatpush.msra.mxu0 %v4640
    %4754 = vmatpush.msra.mxu0 %v4638
    %4755 = vmatpush.msra.mxu0 %v4636
    %4756 = vmatpush.msra.mxu0 %v4634
    %4757 = vmatpush.msra.mxu0 %v4632
    %4758 = vmatpush.msra.mxu0 %v4630
    %4759 = vmatpush.msra.mxu0 %v4628
    %4760 = vmatmul.f32.gmra.mxu0 %v4593
    %v4761 = vpop.f32.mrf.mxu0
    %v4762 = vadd.f32 %v4742, %v4761
    %4763 = vdwg.mxu0
    %4764 = vmatpush.msra.mxu0 %v4690
    %4765 = vmatpush.msra.mxu0 %v4688
    %4766 = vmatpush.msra.mxu0 %v4686
    %4767 = vmatpush.msra.mxu0 %v4684
    %4768 = vmatpush.msra.mxu0 %v4682
    %4769 = vmatpush.msra.mxu0 %v4680
    %4770 = vmatpush.msra.mxu0 %v4678
    %4771 = vmatpush.msra.mxu0 %v4676
    %4772 = vmatpush.msra.mxu0 %v4674
    %4773 = vmatpush.msra.mxu0 %v4672
    %4774 = vmatpush.msra.mxu0 %v4670
    %4775 = vmatpush.msra.mxu0 %v4668
    %4776 = vmatpush.msra.mxu0 %v4666
    %4777 = vmatpush.msra.mxu0 %v4664
    %4778 = vmatpush.msra.mxu0 %v4662
    %4779 = vmatpush.msra.mxu0 %v4660
    %4780 = vmatmul.f32.gmra.mxu0 %v4594
    %v4781 = vpop.f32.mrf.mxu0
    %v4782 = vadd.f32 %v4762, %v4781
    %4783 = vdwg.mxu0
    %4784 = vmatpush.msra.mxu0 %v4722
    %4785 = vmatpush.msra.mxu0 %v4720
    %4786 = vmatpush.msra.mxu0 %v4718
    %4787 = vmatpush.msra.mxu0 %v4716
    %4788 = vmatpush.msra.mxu0 %v4714
    %4789 = vmatpush.msra.mxu0 %v4712
    %4790 = vmatpush.msra.mxu0 %v4710
    %4791 = vmatpush.msra.mxu0 %v4708
    %4792 = vmatpush.msra.mxu0 %v4706
    %4793 = vmatpush.msra.mxu0 %v4704
    %4794 = vmatpush.msra.mxu0 %v4702
    %4795 = vmatpush.msra.mxu0 %v4700
    %4796 = vmatpush.msra.mxu0 %v4698
    %4797 = vmatpush.msra.mxu0 %v4696
    %4798 = vmatpush.msra.mxu0 %v4694
    %4799 = vmatpush.msra.mxu0 %v4692
    %4800 = vmatmul.f32.gmra.mxu0 %v4595
    %v4801 = vpop.f32.mrf.mxu0
    %v4802 = vadd.f32 %v4782, %v4801
    %4803 = vdwg.mxu0
    %4804 = vmatpush.msra.mxu0 %v4627
    %4805 = vmatpush.msra.mxu0 %v4625
    %4806 = vmatpush.msra.mxu0 %v4623
    %4807 = vmatpush.msra.mxu0 %v4621
    %4808 = vmatpush.msra.mxu0 %v4619
    %4809 = vmatpush.msra.mxu0 %v4617
    %4810 = vmatpush.msra.mxu0 %v4615
    %4811 = vmatpush.msra.mxu0 %v4613
    %4812 = vmatpush.msra.mxu0 %v4611
    %4813 = vmatpush.msra.mxu0 %v4609
    %4814 = vmatpush.msra.mxu0 %v4607
    %4815 = vmatpush.msra.mxu0 %v4605
    %4816 = vmatpush.msra.mxu0 %v4603
    %4817 = vmatpush.msra.mxu0 %v4601
    %4818 = vmatpush.msra.mxu0 %v4599
    %4819 = vmatpush.msra.mxu0 %v4597
    %4820 = vmatmul.f32.gmra.mxu0 %v4592
    %v4821 = vpop.f32.mrf.mxu0
    %v4822 = vadd.f32 0.0, %v4821
    %4823 = vdwg.mxu0
    %4824 = vmatpush.msra.mxu0 %v4659
    %4825 = vmatpush.msra.mxu0 %v4657
    %4826 = vmatpush.msra.mxu0 %v4655
    %4827 = vmatpush.msra.mxu0 %v4653
    %4828 = vmatpush.msra.mxu0 %v4651
    %4829 = vmatpush.msra.mxu0 %v4649
    %4830 = vmatpush.msra.mxu0 %v4647
    %4831 = vmatpush.msra.mxu0 %v4645
    %4832 = vmatpush.msra.mxu0 %v4643
    %4833 = vmatpush.msra.mxu0 %v4641
    %4834 = vmatpush.msra.mxu0 %v4639
    %4835 = vmatpush.msra.mxu0 %v4637
    %4836 = vmatpush.msra.mxu0 %v4635
    %4837 = vmatpush.msra.mxu0 %v4633
    %4838 = vmatpush.msra.mxu0 %v4631
    %4839 = vmatpush.msra.mxu0 %v4629
    %4840 = vmatmul.f32.gmra.mxu0 %v4593
    %v4841 = vpop.f32.mrf.mxu0
    %v4842 = vadd.f32 %v4822, %v4841
    %4843 = vdwg.mxu0
    %4844 = vmatpush.msra.mxu0 %v4691
    %4845 = vmatpush.msra.mxu0 %v4689
    %4846 = vmatpush.msra.mxu0 %v4687
    %4847 = vmatpush.msra.mxu0 %v4685
    %4848 = vmatpush.msra.mxu0 %v4683
    %4849 = vmatpush.msra.mxu0 %v4681
    %4850 = vmatpush.msra.mxu0 %v4679
    %4851 = vmatpush.msra.mxu0 %v4677
    %4852 = vmatpush.msra.mxu0 %v4675
    %4853 = vmatpush.msra.mxu0 %v4673
    %4854 = vmatpush.msra.mxu0 %v4671
    %4855 = vmatpush.msra.mxu0 %v4669
    %4856 = vmatpush.msra.mxu0 %v4667
    %4857 = vmatpush.msra.mxu0 %v4665
    %4858 = vmatpush.msra.mxu0 %v4663
    %4859 = vmatpush.msra.mxu0 %v4661
    %4860 = vmatmul.f32.gmra.mxu0 %v4594
    %v4861 = vpop.f32.mrf.mxu0
    %v4862 = vadd.f32 %v4842, %v4861
    %4863 = vdwg.mxu0
    %4864 = vmatpush.msra.mxu0 %v4723
    %4865 = vmatpush.msra.mxu0 %v4721
    %4866 = vmatpush.msra.mxu0 %v4719
    %4867 = vmatpush.msra.mxu0 %v4717
    %4868 = vmatpush.msra.mxu0 %v4715
    %4869 = vmatpush.msra.mxu0 %v4713
    %4870 = vmatpush.msra.mxu0 %v4711
    %4871 = vmatpush.msra.mxu0 %v4709
    %4872 = vmatpush.msra.mxu0 %v4707
    %4873 = vmatpush.msra.mxu0 %v4705
    %4874 = vmatpush.msra.mxu0 %v4703
    %4875 = vmatpush.msra.mxu0 %v4701
    %4876 = vmatpush.msra.mxu0 %v4699
    %4877 = vmatpush.msra.mxu0 %v4697
    %4878 = vmatpush.msra.mxu0 %v4695
    %4879 = vmatpush.msra.mxu0 %v4693
    %4880 = vmatmul.f32.gmra.mxu0 %v4595
    %v4881 = vpop.f32.mrf.mxu0
    %v4882 = vadd.f32 %v4862, %v4881
    %4883 = vdwg.mxu0
    %v4884 = vld [vmem:[%s12] sm:$0xf]
    %v4885 = vsel %vm260, %v4802, 0.0
    %v4886 = vrot.slane %v4885, 4
    %v4887 = vadd.f32 %v4885, %v4886
    %v4888 = vrot.slane %v4887, 2
    %v4889 = vadd.f32 %v4887, %v4888
    %v4890 = vrot.slane %v4889, 1
    %v4891 = vadd.f32 %v4889, %v4890
    %v4892 = vsel %vm260, %v4882, 0.0
    %v4893 = vrot.slane %v4892, 4
    %v4894 = vadd.f32 %v4892, %v4893
    %v4895 = vrot.slane %v4894, 2
    %v4896 = vadd.f32 %v4894, %v4895
    %v4897 = vrot.slane %v4896, 1
    %v4898 = vadd.f32 %v4896, %v4897
    %v4899 = vmul.f32 %v4802, %v4802
    %v4900 = vmul.f32 %v4882, %v4882
    %v4901 = vsel %vm260, %v4899, 0.0
    %v4902 = vrot.slane %v4901, 4
    %v4903 = vadd.f32 %v4901, %v4902
    %v4904 = vrot.slane %v4903, 2
    %v4905 = vadd.f32 %v4903, %v4904
    %v4906 = vrot.slane %v4905, 1
    %v4907 = vadd.f32 %v4905, %v4906
    %v4908 = vsel %vm260, %v4900, 0.0
    %v4909 = vrot.slane %v4908, 4
    %v4910 = vadd.f32 %v4908, %v4909
    %v4911 = vrot.slane %v4910, 2
    %v4912 = vadd.f32 %v4910, %v4911
    %v4913 = vrot.slane %v4912, 1
    %v4914 = vadd.f32 %v4912, %v4913
    %v4915 = vmul.f32 %v4891, 0.25
    %v4916 = vmul.f32 %v4898, 0.25
    %v4917 = vmul.f32 %v4907, 0.25
    %v4918 = vmul.f32 %v4914, 0.25
    %v4919 = vmul.f32 %v4915, %v4915
    %v4920 = vmul.f32 %v4916, %v4916
    %v4921 = vsub.f32 %v4917, %v4919
    %v4922 = vsub.f32 %v4918, %v4920
    %v4923 = vmax.f32 %v4921, 0.0
    %v4924 = vmax.f32 %v4922, 0.0
    %v4925 = vadd.f32 %v4923, 1e-05
    %v4926 = vadd.f32 %v4924, 1e-05
    %v4927 = vrsqrt.pop %v4925
    %v4928 = vmul.f32 %v4927, %v4925
    %v4929 = vmul.f32 %v4928, %v4927
    %v4930 = vmul.f32 0.5, %v4929
    %v4931 = vsub.f32 1.5, %v4930
    %v4932 = vmul.f32 %v4927, %v4931
    %vm4933 = vweird.f32 %v4925
    %vm4934 = vweird.f32 %v4927
    %vm4935 = vmor %vm4933, %vm4934
    %v4936 = vsel %vm4935, %v4927, %v4932
    %v4937 = vrsqrt.pop %v4926
    %v4938 = vmul.f32 %v4937, %v4926
    %v4939 = vmul.f32 %v4938, %v4937
    %v4940 = vmul.f32 0.5, %v4939
    %v4941 = vsub.f32 1.5, %v4940
    %v4942 = vmul.f32 %v4937, %v4941
    %vm4943 = vweird.f32 %v4926
    %vm4944 = vweird.f32 %v4937
    %vm4945 = vmor %vm4943, %vm4944
    %v4946 = vsel %vm4945, %v4937, %v4942
    %v4949 = vrot.slane %v4946, 6
    %v4950 = vsel %vm1118, %v4936, %v4949
    %v4952 = vmul.f32 %v4884, %v4950
    %v4954 = vperm.slane %v4952, 0
    %v4955 = vperm.slane %v4952, 2
    %v4958 = vmul.f32 %v4915, %v4954
    %v4959 = vmul.f32 %v4916, %v4955
    %v4962 = vrot.slane %v4959, 6
    %v4963 = vsel %vm1118, %v4958, %v4962
    %v4964 = vrot.slane %v4963, 7
    %v4966 = vsub.f32 %v4884, %v4964
    %v4967 = vperm.slane %v4954, 0
    %v4968 = vperm.slane %v4955, 0
    %v4969 = vmul.f32 %v4802, %v4967
    %v4970 = vmul.f32 %v4882, %v4968
    %v4972 = vperm.slane %v4966, 1
    %v4973 = vperm.slane %v4966, 3
    %v4976 = vperm.slane %v4972, 1
    %v4977 = vperm.slane %v4973, 1
    %v4978 = vadd.f32 %v4969, %v4976
    %v4979 = vadd.f32 %v4970, %v4977
    %v4980 = vmax.f32 %v4978, 0.0
    %v4981 = vmax.f32 %v4979, 0.0
    %v4982 = vld [vmem:[%s13] sm:$0xff]
    %v4983 = vld [vmem:[%s13 + $0x8] sm:$0xff]
    %v4984 = vld [vmem:[%s13 + $0x10] sm:$0xff]
    %v4985 = vld [vmem:[%s13 + $0x18] sm:$0xff]
    %v4986 = vld [vmem:[%s13 + $0x20] sm:$0xff]
    %v4987 = vld [vmem:[%s13 + $0x28] sm:$0xff]
    %v4988 = vld [vmem:[%s13 + $0x30] sm:$0xff]
    %v4989 = vld [vmem:[%s13 + $0x38] sm:$0xff]
    %v4990 = vld [vmem:[%s13 + $0x40] sm:$0xff]
    %v4991 = vld [vmem:[%s13 + $0x48] sm:$0xff]
    %v4992 = vld [vmem:[%s13 + $0x50] sm:$0xff]
    %v4993 = vld [vmem:[%s13 + $0x58] sm:$0xff]
    %v4994 = vld [vmem:[%s13 + $0x60] sm:$0xff]
    %v4995 = vld [vmem:[%s13 + $0x68] sm:$0xff]
    %v4996 = vld [vmem:[%s13 + $0x70] sm:$0xff]
    %v4997 = vld [vmem:[%s13 + $0x78] sm:$0xff]
    %v4998 = vld [vmem:[%s13 + $0x80] sm:$0xff]
    %v4999 = vld [vmem:[%s13 + $0x88] sm:$0xff]
    %v5000 = vld [vmem:[%s13 + $0x90] sm:$0xff]
    %v5001 = vld [vmem:[%s13 + $0x98] sm:$0xff]
    %v5002 = vld [vmem:[%s13 + $0xa0] sm:$0xff]
    %v5003 = vld [vmem:[%s13 + $0xa8] sm:$0xff]
    %v5004 = vld [vmem:[%s13 + $0xb0] sm:$0xff]
    %v5005 = vld [vmem:[%s13 + $0xb8] sm:$0xff]
    %v5006 = vld [vmem:[%s13 + $0xc0] sm:$0xff]
    %v5007 = vld [vmem:[%s13 + $0xc8] sm:$0xff]
    %v5008 = vld [vmem:[%s13 + $0xd0] sm:$0xff]
    %v5009 = vld [vmem:[%s13 + $0xd8] sm:$0xff]
    %v5010 = vld [vmem:[%s13 + $0xe0] sm:$0xff]
    %v5011 = vld [vmem:[%s13 + $0xe8] sm:$0xff]
    %v5012 = vld [vmem:[%s13 + $0xf0] sm:$0xff]
    %v5013 = vld [vmem:[%s13 + $0xf8] sm:$0xff]
    %v5014 = vld [vmem:[%s14] sm:$0x1]
    %v5016 = vperm.slane %v5014, 0
    %5018 = vmatpush.msra.mxu0 %v4997
    %5019 = vmatpush.msra.mxu0 %v4996
    %5020 = vmatpush.msra.mxu0 %v4995
    %5021 = vmatpush.msra.mxu0 %v4994
    %5022 = vmatpush.msra.mxu0 %v4993
    %5023 = vmatpush.msra.mxu0 %v4992
    %5024 = vmatpush.msra.mxu0 %v4991
    %5025 = vmatpush.msra.mxu0 %v4990
    %5026 = vmatpush.msra.mxu0 %v4989
    %5027 = vmatpush.msra.mxu0 %v4988
    %5028 = vmatpush.msra.mxu0 %v4987
    %5029 = vmatpush.msra.mxu0 %v4986
    %5030 = vmatpush.msra.mxu0 %v4985
    %5031 = vmatpush.msra.mxu0 %v4984
    %5032 = vmatpush.msra.mxu0 %v4983
    %5033 = vmatpush.msra.mxu0 %v4982
    %5034 = vmatmul.f32.gmra.mxu0 %v4980
    %v5035 = vpop.f32.mrf.mxu0
    %v5036 = vadd.f32 %v5016, %v5035
    %5037 = vdwg.mxu0
    %5038 = vmatpush.msra.mxu0 %v5013
    %5039 = vmatpush.msra.mxu0 %v5012
    %5040 = vmatpush.msra.mxu0 %v5011
    %5041 = vmatpush.msra.mxu0 %v5010
    %5042 = vmatpush.msra.mxu0 %v5009
    %5043 = vmatpush.msra.mxu0 %v5008
    %5044 = vmatpush.msra.mxu0 %v5007
    %5045 = vmatpush.msra.mxu0 %v5006
    %5046 = vmatpush.msra.mxu0 %v5005
    %5047 = vmatpush.msra.mxu0 %v5004
    %5048 = vmatpush.msra.mxu0 %v5003
    %5049 = vmatpush.msra.mxu0 %v5002
    %5050 = vmatpush.msra.mxu0 %v5001
    %5051 = vmatpush.msra.mxu0 %v5000
    %5052 = vmatpush.msra.mxu0 %v4999
    %5053 = vmatpush.msra.mxu0 %v4998
    %5054 = vmatmul.f32.gmra.mxu0 %v4981
    %v5055 = vpop.f32.mrf.mxu0
    %v5056 = vadd.f32 %v5036, %v5055
    %5057 = vdwg.mxu0
    %v5058 = vmul.f32 %v5056, 0.5
    %v5059 = vmul.f32 %v5058, 1.442695
    %v5060 = vpow.pop %v5059
    %v5061 = vld [vmem:[%s15] sm:$0xf]
    %5063 = vrot.lane.b32.xlu0 %v5061, 32
    %v5064 = vpop.permute.xlu0 %5063
    %v5066 = vmul.f32 %v5060, %v5064
    %5068 = vrot.lane.b32.xlu0 %v5066, 96
    %v5069 = vpop.permute.xlu0 %5068
    %v5071 = vadd.f32 %v5056, %v5069
    %vm5072 = vcmask 257024
    %5073 = vst.msk [vmem:[#allocation14] sm:$0xf] %vm5072, %v5056
    %5075 = vrot.lane.b32.xlu0 %v5056, 96
    %v5076 = vpop.permute.xlu0 %5075
    %5078 = vst.msk [vmem:[#allocation15] sm:$0xf] %vm5072, %v5076
    %5079 = vst.msk [vmem:[#allocation17] sm:$0xf] %vm5072, %v5071
    // Predicated region
    $region94: #{tpu_custom_call.1} parent=1 // pred_check
      _
    $region95: #{tpu_custom_call.1} parent=1 // pred_check_branch
      %5081 = sbr.rel (0) target = $region97
    $region96: #{tpu_custom_call.1} parent=1 // pred_region
      %5083 = vsyncadd [#allocation4], 0
      %s5085 = sshll.u32 [#allocation14], 4
      %s5086 = int_to_ptr.vmem [resolvable:$true] %s5085
      %s5087 = sshll.u32 %s16, 4
      %s5088 = int_to_ptr.hbm [resolvable:$true] %s5087
      %5090 = dma.vmem_to_hbm [thread:$0]  %s5086, 64, %s5088, [#allocation4]
    $region97: #{tpu_custom_call.1} parent=1 // pred_fallthru
      _
    // Predicated region
    $region98: #{tpu_custom_call.1} parent=1 // pred_check
      _
    $region99: #{tpu_custom_call.1} parent=1 // pred_check_branch
      %5092 = sbr.rel (0) target = $region101
    $region100: #{tpu_custom_call.1} parent=1 // pred_region
      %5094 = vsyncadd [#allocation16], 0
      %s5096 = sshll.u32 [#allocation15], 4
      %s5097 = int_to_ptr.vmem [resolvable:$true] %s5096
      %s5098 = sshll.u32 %s17, 4
      %s5099 = int_to_ptr.hbm [resolvable:$true] %s5098
      %5101 = dma.vmem_to_hbm [thread:$0]  %s5097, 64, %s5099, [#allocation16]
    $region101: #{tpu_custom_call.1} parent=1 // pred_fallthru
      _
    // Predicated region
    $region102: #{tpu_custom_call.1} parent=1 // pred_check
      _
    $region103: #{tpu_custom_call.1} parent=1 // pred_check_branch
      %5103 = sbr.rel (0) target = $region105
    $region104: #{tpu_custom_call.1} parent=1 // pred_region
      %5105 = vsyncadd [#allocation16], 0
      %s5107 = sshll.u32 [#allocation17], 4
      %s5108 = int_to_ptr.vmem [resolvable:$true] %s5107
      %s5109 = sshll.u32 %s18, 4
      %s5110 = int_to_ptr.hbm [resolvable:$true] %s5109
      %5112 = dma.vmem_to_hbm [thread:$0]  %s5108, 64, %s5110, [#allocation16]
    $region105: #{tpu_custom_call.1} parent=1 // pred_fallthru
      _
    // Predicated region
    $region106: #{tpu_custom_call.1} parent=1 // pred_check
      _
    $region107: #{tpu_custom_call.1} parent=1 // pred_check_branch
      %5114 = sbr.rel (0) target = $region109
    $region108: #{tpu_custom_call.1} parent=1 // pred_region
      %5116 = dma.done [#allocation4], 64
    $region109: #{tpu_custom_call.1} parent=1 // pred_fallthru
      _
    // Predicated region
    $region110: #{tpu_custom_call.1} parent=1 // pred_check
      _
    $region111: #{tpu_custom_call.1} parent=1 // pred_check_branch
      %5118 = sbr.rel (0) target = $region113
    $region112: #{tpu_custom_call.1} parent=1 // pred_region
      %5120 = dma.done [#allocation16], 64
    $region113: #{tpu_custom_call.1} parent=1 // pred_fallthru
      _
    // Predicated region
    $region114: #{tpu_custom_call.1} parent=1 // pred_check
      _
    $region115: #{tpu_custom_call.1} parent=1 // pred_check_branch
      %5122 = sbr.rel (0) target = $region117
    $region116: #{tpu_custom_call.1} parent=1 // pred_region
      %5124 = dma.done [#allocation16], 64
    $region117: #{tpu_custom_call.1} parent=1 // pred_fallthru
      _
    %5125 = vsyncpa [#allocation3], 1
    %5126 = vsyncpa [#allocation6], 1
    %5127 = vsyncpa [#allocation9], 1
    %5128 = vsyncpa [#allocation12], 1
    %5129 = vsyncpa [#allocation4], 1
    %5130 = vsyncpa [#allocation16], 1

</llo_original>
